<compile_context>
chip_gen: v6e
topology: v6e:2x2x1
jax: 0.10.0
libtpu: 0.0.40
codegen_flags: <defaults>
</compile_context>

<pallas_src>
import functools
import math

import numpy as np

import jax
import jax.numpy as jnp
from jax.experimental import pallas as pl
from jax.experimental.pallas import tpu as pltpu

BN_EPS = 1e-5
_LANE = 128
_VMEM_CAP = 48 << 20     # scoped-VMEM cap, valid on v5e/v6e (128 MiB) and v7x (64 MiB)
_TC_BUDGET = 40 << 20    # budget used when deciding to widen the cout tile to 256


def _round_up(n, m):
    return ((n + m - 1) // m) * m


# ----------------------------------------------------------------------------
# Fused [optional MaxPool2d(2)] + Conv2d(3x3, pad=1) + eval-BN + ReLU kernel
# ----------------------------------------------------------------------------
def _conv3x3_bn_relu_kernel(x_ref, w_ref, b_ref, o_ref, pad_ref, patch_ref,
                            *, pool, fused_k):
    # x_ref    : (1, 2*HP, WP, 2*Cin) bf16 if pool (W-pairs packed on lanes)
    #            (1, HP,   WP, Cin)   bf16 otherwise
    # w_ref    : (9*Cin, TC) bf16 if fused_k else (9, Cin, TC) bf16 (BN folded)
    # b_ref    : (1, TC) f32 BN-folded bias
    # o_ref    : (1, HP, WP, TC)
    # pad_ref  : VMEM scratch (HP+2, WP+2, Cin) bf16 -- input + zero halo
    # patch_ref: VMEM scratch (HP*WP, 9*Cin) bf16 if fused_k else (9, HP*WP, Cin)
    HP = pad_ref.shape[0] - 2
    WP = pad_ref.shape[1] - 2
    Cin = pad_ref.shape[2]
    TC = o_ref.shape[-1]

    # ---- hoisted: pool + halo pad + im2col, built once per batch index -----
    @pl.when(pl.program_id(1) == 0)
    def _build_patch():
        x = x_ref[0]
        if pool:
            # 2x2 max pool on the VPU: W-pairs live on the lane axis, H-pairs
            # on a (split) major axis -- no strided loads needed.
            xw = jnp.maximum(x[:, :, :Cin], x[:, :, Cin:])   # pool along W
            xw = xw.reshape(HP, 2, WP, Cin)                  # split major dim (free)
            x = jnp.maximum(xw[:, 0], xw[:, 1])              # pool along H

        # Zero only the four halo strips (interior is fully overwritten below).
        zrow = jnp.zeros((1, WP + 2, Cin), pad_ref.dtype)
        pad_ref[pl.ds(0, 1), :, :] = zrow
        pad_ref[pl.ds(HP + 1, 1), :, :] = zrow
        zcol = jnp.zeros((HP, 1, Cin), pad_ref.dtype)
        pad_ref[pl.ds(1, HP), pl.ds(0, 1), :] = zcol
        pad_ref[pl.ds(1, HP), pl.ds(WP + 1, 1), :] = zcol
        pad_ref[pl.ds(1, HP), pl.ds(1, WP), :] = x.astype(pad_ref.dtype)

        # im2col: 9 direct writes into the persistent patch scratch
        # (no jnp.concatenate, no per-cout-tile rebuild).
        pp = pad_ref[...]
        for dy in range(3):
            for dx in range(3):
                tap = 3 * dy + dx
                slab = pp[dy:dy + HP, dx:dx + WP, :].reshape(HP * WP, Cin)
                if fused_k:
                    patch_ref[:, tap * Cin:(tap + 1) * Cin] = slab
                else:
                    patch_ref[tap] = slab

    # ---- per cout tile: MXU matmul(s) + folded-BN bias + ReLU ---------------
    if fused_k:
        acc = jnp.dot(patch_ref[...], w_ref[...],
                      preferred_element_type=jnp.float32)
    else:
        acc = jnp.dot(patch_ref[0], w_ref[0], preferred_element_type=jnp.float32)
        for tap in range(1, 9):
            acc = acc + jnp.dot(patch_ref[tap], w_ref[tap],
                                preferred_element_type=jnp.float32)
    y = jnp.maximum(acc + b_ref[...], 0.0)
    o_ref[...] = y.reshape(1, HP, WP, TC).astype(o_ref.dtype)


def conv3x3_bn_relu(x, w, b, *, pool, out_dtype, tc=None):
    """Fused [MaxPool2d(2) if pool] + Conv2d(3x3,pad=1) + eval-BN + ReLU.

    x: (N, H, W, Cin) NHWC (H, W even when pool=True); cast to bf16 internally.
    w: (3, 3, Cin, Coutp) BN-folded weights, Coutp % 128 == 0 (cast to bf16).
    b: (Coutp,) float32 BN-folded bias.
    Returns (N, H//2 if pool else H, W//2 if pool else W, Coutp) in out_dtype.
    """
    N, H, W, Cin = x.shape
    Coutp = w.shape[-1]
    assert w.shape[:3] == (3, 3, Cin) and Coutp % _LANE == 0

    x = x.astype(jnp.bfloat16)
    w = w.astype(jnp.bfloat16)
    b = b.astype(jnp.float32)

    if pool:
        assert H % 2 == 0 and W % 2 == 0
        HP, WP = H // 2, W // 2
        x_in = x.reshape(N, H, WP, 2 * Cin)   # pack W-pairs onto lanes (free reshape)
        in_block = (1, H, WP, 2 * Cin)
    else:
        HP, WP = H, W
        x_in = x
        in_block = (1, H, W, Cin)

    # Single fused-K matmul only when per-tap patch writes stay 128-lane
    # aligned; otherwise use per-tap slabs + 9 accumulated dots.
    fused_k = (Cin % _LANE == 0)
    b2 = b.reshape(1, Coutp)
    out_isz = np.dtype(out_dtype).itemsize

    def vmem_need(t):
        blocks = 2 * (math.prod(in_block) * 2        # bf16 input (double-buffered)
                      + 9 * Cin * t * 2              # bf16 weight block
                      + t * 4                        # f32 bias block
                      + HP * WP * t * out_isz)       # output block
        scratch = ((HP + 2) * (WP + 2) * Cin * 2     # pad scratch (bf16)
                   + 9 * HP * WP * Cin * 2)          # im2col patch scratch (bf16)
        acc = HP * WP * t * 4                        # f32 accumulator
        return blocks + scratch + acc

    if tc is None:
        # Wider cout tiles feed the full 256-wide MXU on v6e/v7x and halve the
        # grid-step count; gate on a VMEM budget that is valid on v7x.
        # TODO(synk): per-generation dispatch (keep TC=128 on v5e).
        tc = 256 if (Coutp % 256 == 0 and vmem_need(256) <= _TC_BUDGET) else _LANE
    assert Coutp % tc == 0

    if fused_k:
        w_in = w.reshape(9 * Cin, Coutp)
        w_spec = pl.BlockSpec((9 * Cin, tc), lambda n, j: (0, j))
        patch_scratch = pltpu.VMEM((HP * WP, 9 * Cin), jnp.bfloat16)
    else:
        w_in = w.reshape(9, Cin, Coutp)
        w_spec = pl.BlockSpec((9, Cin, tc), lambda n, j: (0, 0, j))
        patch_scratch = pltpu.VMEM((9, HP * WP, Cin), jnp.bfloat16)

    limit = min(vmem_need(tc) + (12 << 20), _VMEM_CAP)

    return pl.pallas_call(
        functools.partial(_conv3x3_bn_relu_kernel, pool=pool, fused_k=fused_k),
        out_shape=jax.ShapeDtypeStruct((N, HP, WP, Coutp), out_dtype),
        grid=(N, Coutp // tc),
        in_specs=[
            pl.BlockSpec(in_block, lambda n, j: (n, 0, 0, 0)),
            w_spec,
            pl.BlockSpec((1, tc), lambda n, j: (0, j)),
        ],
        out_specs=pl.BlockSpec((1, HP, WP, tc), lambda n, j: (n, 0, 0, j)),
        scratch_shapes=[
            pltpu.VMEM((HP + 2, WP + 2, Cin), jnp.bfloat16),   # padded input
            patch_scratch,                                     # im2col patch
        ],
        compiler_params=pltpu.CompilerParams(
            # cout axis must be "arbitrary": the hoisted patch is reused across
            # its revisits; batch stays "parallel" for megacore.
            dimension_semantics=("parallel", "arbitrary"),
            vmem_limit_bytes=limit,
        ),
    )(x_in, w_in, b2)


# ----------------------------------------------------------------------------
# Down forward: MaxPool2d(2) + DoubleConv
# ----------------------------------------------------------------------------
def down_forward(params, x_nchw, *, out_channels):
    w1, b1 = params["conv1"]
    w2, b2 = params["conv2"]
    # NCHW -> NHWC and bf16 cast in one XLA pass (halves conv1's input DMA).
    x = jnp.transpose(x_nchw, (0, 2, 3, 1)).astype(jnp.bfloat16)
    N, H, W, _ = x.shape
    x = x[:, : 2 * (H // 2), : 2 * (W // 2), :]        # MaxPool2d(2) floors odd sizes
    h = conv3x3_bn_relu(x, w1, b1, pool=True, out_dtype=jnp.bfloat16)   # pool+conv1
    y = conv3x3_bn_relu(h, w2, b2, pool=False, out_dtype=jnp.float32)   # conv2
    # TODO(synk): when the consumer is the next NHWC block, emit bf16 NHWC here
    #             and defer the channel slice / NCHW transpose to the net's end.
    y = y[..., :out_channels]                          # drop lane padding
    return jnp.transpose(y, (0, 3, 1, 2))              # back to NCHW


# ----------------------------------------------------------------------------
# Parameters (eval-mode BatchNorm folded into conv weights/bias)
# ----------------------------------------------------------------------------
def init_down_params(key, in_channels, out_channels):
    k1, k2 = jax.random.split(key)
    bn_scale = 1.0 / math.sqrt(1.0 + BN_EPS)

    def conv_init(k, cin, cout):
        kw, kb = jax.random.split(k)
        w = jax.random.normal(kw, (3, 3, cin, cout), jnp.float32) / math.sqrt(9 * cin)
        b = 0.01 * jax.random.normal(kb, (cout,), jnp.float32)
        return w, b

    w1, b1 = conv_init(k1, in_channels, out_channels)
    w2, b2 = conv_init(k2, out_channels, out_channels)

    cp = _round_up(out_channels, _LANE)                # lane-dense channel padding
    w1p = jnp.zeros((3, 3, in_channels, cp), jnp.float32).at[..., :out_channels].set(w1)
    b1p = jnp.zeros((cp,), jnp.float32).at[:out_channels].set(b1)
    w2p = jnp.zeros((3, 3, cp, cp), jnp.float32).at[:, :, :out_channels, :out_channels].set(w2)
    b2p = jnp.zeros((cp,), jnp.float32).at[:out_channels].set(b2)

    kernel_params = {
        "conv1": ((w1p * bn_scale).astype(jnp.bfloat16), b1p * bn_scale),
        "conv2": ((w2p * bn_scale).astype(jnp.bfloat16), b2p * bn_scale),
    }
    ref_params = {"conv1": (w1, b1), "conv2": (w2, b2)}
    return kernel_params, ref_params


# ----------------------------------------------------------------------------
# Pure-JAX references (f32) for numerical sanity checks
# ----------------------------------------------------------------------------
def _conv_relu_ref(x, w, b, scale=1.0):
    y = jax.lax.conv_general_dilated(
        x, w, window_strides=(1, 1), padding=((1, 1), (1, 1)),
        dimension_numbers=("NHWC", "HWIO", "NHWC"))
    return jnp.maximum((y + b) * scale, 0.0)


def reference_down(ref_params, x_nchw):
    x = jnp.transpose(x_nchw, (0, 2, 3, 1)).astype(jnp.float32)
    N, H, W, C = x.shape
    x = x[:, : 2 * (H // 2), : 2 * (W // 2), :]
    Hc, Wc = x.shape[1], x.shape[2]
    x = x.reshape(N, Hc // 2, 2, Wc // 2, 2, C).max(axis=(2, 4))   # MaxPool2d(2)
    scale = 1.0 / math.sqrt(1.0 + BN_EPS)                          # eval-mode BN
    y = _conv_relu_ref(x, *ref_params["conv1"], scale)
    y = _conv_relu_ref(y, *ref_params["conv2"], scale)
    return jnp.transpose(y, (0, 3, 1, 2))


# ----------------------------------------------------------------------------
if __name__ == "__main__":
    def _rel_err(a, b):
        return float(jnp.linalg.norm(a.astype(jnp.float32) - b)
                     / (jnp.linalg.norm(b) + 1e-6))

    key = jax.random.PRNGKey(0)
    ks = jax.random.split(key, 8)

    # (A) pooled conv, Cin=32 (per-tap-dot path), Coutp=256 with tc=128
    #     -> exercises the hoisted patch reused across 2 cout tiles.
    xa = jax.random.normal(ks[0], (1, 24, 16, 32), jnp.float32)
    wa = jax.random.normal(ks[1], (3, 3, 32, 256), jnp.float32) / math.sqrt(9 * 32)
    ba = 0.01 * jax.random.normal(ks[2], (256,), jnp.float32)
    outa = jax.block_until_ready(jax.jit(functools.partial(
        conv3x3_bn_relu, pool=True, out_dtype=jnp.float32, tc=128))(xa, wa, ba))
    xa_p = xa.reshape(1, 12, 2, 8, 2, 32).max(axis=(2, 4))
    assert _rel_err(outa, _conv_relu_ref(xa_p, wa, ba)) < 3e-2

    # (B) unpooled conv, Cin=128 (single fused-K matmul path), 2 cout tiles.
    xb = jax.random.normal(ks[3], (1, 12, 16, 128), jnp.float32)
    wb = jax.random.normal(ks[4], (3, 3, 128, 256), jnp.float32) / math.sqrt(9 * 128)
    bb = 0.01 * jax.random.normal(ks[5], (256,), jnp.float32)
    outb = jax.block_until_ready(jax.jit(functools.partial(
        conv3x3_bn_relu, pool=False, out_dtype=jnp.float32, tc=128))(xb, wb, bb))
    assert _rel_err(outb, _conv_relu_ref(xb, wb, bb)) < 3e-2

    # ---- full Down block -----------------------------------------------------
    in_channels, out_channels = 32, 64
    x = jax.random.normal(ks[6], (2, in_channels, 32, 32), jnp.float32)
    kernel_params, ref_params = init_down_params(ks[7], in_channels, out_channels)

    fwd = jax.jit(functools.partial(down_forward, out_channels=out_channels))
    out = jax.block_until_ready(fwd(kernel_params, x))

    assert out.shape == (2, out_channels, 16, 16), out.shape
    assert bool(jnp.all(jnp.isfinite(out)))

    ref = reference_down(ref_params, x)
    rel_err = _rel_err(out, ref)
    assert rel_err < 3e-2, rel_err

    print("KERNEL_OK")
</pallas_src>

<mosaic_0001>
module attributes {stable_mosaic.version = 11 : i64} {
  func.func @_conv3x3_bn_relu_kernel(%arg0: i32, %arg1: i32, %arg2: memref<1x24x8x64xbf16, #tpu.memory_space<vmem>>, %arg3: memref<9x32x128xbf16, #tpu.memory_space<vmem>>, %arg4: memref<1x128xf32, #tpu.memory_space<vmem>>, %arg5: memref<1x12x8x128xf32, #tpu.memory_space<vmem>>, %arg6: memref<14x10x32xbf16, #tpu.memory_space<vmem>>, %arg7: memref<9x96x32xbf16, #tpu.memory_space<vmem>>) attributes {dimension_semantics = [#tpu.dimension_semantics<parallel>, #tpu.dimension_semantics<arbitrary>], iteration_bounds = array<i64: 1, 2>, scalar_prefetch = 0 : i64, scratch_operands = 2 : i64, tpu.core_type = #tpu.core_type<tc>, window_params = [{transform_indices = @transform_0, window_bounds = array<i64: 1, 24, 8, 64>}, {transform_indices = @transform_1, window_bounds = array<i64: 9, 32, 128>}, {transform_indices = @transform_2, window_bounds = array<i64: 1, 128>}, {transform_indices = @transform_3, window_bounds = array<i64: 1, 12, 8, 128>}]} {
    %c0_i32 = arith.constant 0 : i32
    %0 = arith.cmpi eq, %arg1, %c0_i32 : i32
    %1 = arith.extui %0 : i1 to i32
    %c0_i32_0 = arith.constant 0 : i32
    %2 = arith.cmpi ne, %1, %c0_i32_0 : i32
    scf.if %2 {
      %c0_61 = arith.constant 0 : index
      %c0_62 = arith.constant 0 : index
      %c0_63 = arith.constant 0 : index
      %c0_64 = arith.constant 0 : index
      %63 = vector.load %arg2[%c0_61, %c0_62, %c0_63, %c0_64] : memref<1x24x8x64xbf16, #tpu.memory_space<vmem>>, vector<1x24x8x64xbf16>
      %64 = vector.shape_cast %63 : vector<1x24x8x64xbf16> to vector<24x8x64xbf16>
      %65 = vector.extract_strided_slice %64 {offsets = [0, 0, 0], sizes = [24, 8, 32], strides = [1, 1, 1]} : vector<24x8x64xbf16> to vector<24x8x32xbf16>
      %66 = vector.extract_strided_slice %64 {offsets = [0, 0, 32], sizes = [24, 8, 32], strides = [1, 1, 1]} : vector<24x8x64xbf16> to vector<24x8x32xbf16>
      %67 = arith.maximumf %65, %66 : vector<24x8x32xbf16>
      %68 = vector.shape_cast %67 : vector<24x8x32xbf16> to vector<12x2x8x32xbf16>
      %69 = vector.extract_strided_slice %68 {offsets = [0, 0, 0, 0], sizes = [12, 1, 8, 32], strides = [1, 1, 1, 1]} : vector<12x2x8x32xbf16> to vector<12x1x8x32xbf16>
      %70 = vector.shape_cast %69 : vector<12x1x8x32xbf16> to vector<12x8x32xbf16>
      %71 = vector.extract_strided_slice %68 {offsets = [0, 1, 0, 0], sizes = [12, 1, 8, 32], strides = [1, 1, 1, 1]} : vector<12x2x8x32xbf16> to vector<12x1x8x32xbf16>
      %72 = vector.shape_cast %71 : vector<12x1x8x32xbf16> to vector<12x8x32xbf16>
      %73 = arith.maximumf %70, %72 : vector<12x8x32xbf16>
      %cst_65 = arith.constant 0.000000e+00 : bf16
      %74 = vector.broadcast %cst_65 : bf16 to vector<1x10x32xbf16>
      %c0_66 = arith.constant 0 : index
      %c0_67 = arith.constant 0 : index
      %c0_68 = arith.constant 0 : index
      %75 = vector.load %arg6[%c0_66, %c0_67, %c0_68] : memref<14x10x32xbf16, #tpu.memory_space<vmem>>, vector<1x10x32xbf16>
      tpu.vector_store %arg6[%c0_66, %c0_67, %c0_68], %74 {strides = array<i32>} : memref<14x10x32xbf16, #tpu.memory_space<vmem>>, vector<1x10x32xbf16>,
      %c13 = arith.constant 13 : index
      %c0_69 = arith.constant 0 : index
      %c0_70 = arith.constant 0 : index
      %76 = vector.load %arg6[%c13, %c0_69, %c0_70] : memref<14x10x32xbf16, #tpu.memory_space<vmem>>, vector<1x10x32xbf16>
      tpu.vector_store %arg6[%c13, %c0_69, %c0_70], %74 {strides = array<i32>} : memref<14x10x32xbf16, #tpu.memory_space<vmem>>, vector<1x10x32xbf16>,
      %cst_71 = arith.constant 0.000000e+00 : bf16
      %77 = vector.broadcast %cst_71 : bf16 to vector<12x1x32xbf16>
      %c1_72 = arith.constant 1 : index
      %c0_73 = arith.constant 0 : index
      %c0_74 = arith.constant 0 : index
      %78 = vector.load %arg6[%c1_72, %c0_73, %c0_74] : memref<14x10x32xbf16, #tpu.memory_space<vmem>>, vector<12x1x32xbf16>
      tpu.vector_store %arg6[%c1_72, %c0_73, %c0_74], %77 {strides = array<i32>} : memref<14x10x32xbf16, #tpu.memory_space<vmem>>, vector<12x1x32xbf16>,
      %c1_75 = arith.constant 1 : index
      %c9 = arith.constant 9 : index
      %c0_76 = arith.constant 0 : index
      %79 = vector.load %arg6[%c1_75, %c9, %c0_76] : memref<14x10x32xbf16, #tpu.memory_space<vmem>>, vector<12x1x32xbf16>
      tpu.vector_store %arg6[%c1_75, %c9, %c0_76], %77 {strides = array<i32>} : memref<14x10x32xbf16, #tpu.memory_space<vmem>>, vector<12x1x32xbf16>,
      %c1_77 = arith.constant 1 : index
      %c1_78 = arith.constant 1 : index
      %c0_79 = arith.constant 0 : index
      %80 = vector.load %arg6[%c1_77, %c1_78, %c0_79] : memref<14x10x32xbf16, #tpu.memory_space<vmem>>, vector<12x8x32xbf16>
      tpu.vector_store %arg6[%c1_77, %c1_78, %c0_79], %73 {strides = array<i32>} : memref<14x10x32xbf16, #tpu.memory_space<vmem>>, vector<12x8x32xbf16>,
      %c0_80 = arith.constant 0 : index
      %c0_81 = arith.constant 0 : index
      %c0_82 = arith.constant 0 : index
      %81 = vector.load %arg6[%c0_80, %c0_81, %c0_82] : memref<14x10x32xbf16, #tpu.memory_space<vmem>>, vector<14x10x32xbf16>
      %82 = vector.extract_strided_slice %81 {offsets = [0, 0, 0], sizes = [12, 8, 32], strides = [1, 1, 1]} : vector<14x10x32xbf16> to vector<12x8x32xbf16>
      %83 = vector.shape_cast %82 : vector<12x8x32xbf16> to vector<96x32xbf16>
      %c0_83 = arith.constant 0 : index
      %c0_84 = arith.constant 0 : index
      %c0_85 = arith.constant 0 : index
      %84 = vector.load %arg7[%c0_83, %c0_84, %c0_85] : memref<9x96x32xbf16, #tpu.memory_space<vmem>>, vector<1x96x32xbf16>
      %85 = vector.shape_cast %84 : vector<1x96x32xbf16> to vector<96x32xbf16>
      %86 = vector.shape_cast %83 : vector<96x32xbf16> to vector<1x96x32xbf16>
      tpu.vector_store %arg7[%c0_83, %c0_84, %c0_85], %86 {strides = array<i32>} : memref<9x96x32xbf16, #tpu.memory_space<vmem>>, vector<1x96x32xbf16>,
      %87 = vector.extract_strided_slice %81 {offsets = [0, 1, 0], sizes = [12, 8, 32], strides = [1, 1, 1]} : vector<14x10x32xbf16> to vector<12x8x32xbf16>
      %88 = vector.shape_cast %87 : vector<12x8x32xbf16> to vector<96x32xbf16>
      %c1_86 = arith.constant 1 : index
      %c0_87 = arith.constant 0 : index
      %c0_88 = arith.constant 0 : index
      %89 = vector.load %arg7[%c1_86, %c0_87, %c0_88] : memref<9x96x32xbf16, #tpu.memory_space<vmem>>, vector<1x96x32xbf16>
      %90 = vector.shape_cast %89 : vector<1x96x32xbf16> to vector<96x32xbf16>
      %91 = vector.shape_cast %88 : vector<96x32xbf16> to vector<1x96x32xbf16>
      tpu.vector_store %arg7[%c1_86, %c0_87, %c0_88], %91 {strides = array<i32>} : memref<9x96x32xbf16, #tpu.memory_space<vmem>>, vector<1x96x32xbf16>,
      %92 = vector.extract_strided_slice %81 {offsets = [0, 2, 0], sizes = [12, 8, 32], strides = [1, 1, 1]} : vector<14x10x32xbf16> to vector<12x8x32xbf16>
      %93 = vector.shape_cast %92 : vector<12x8x32xbf16> to vector<96x32xbf16>
      %c2_89 = arith.constant 2 : index
      %c0_90 = arith.constant 0 : index
      %c0_91 = arith.constant 0 : index
      %94 = vector.load %arg7[%c2_89, %c0_90, %c0_91] : memref<9x96x32xbf16, #tpu.memory_space<vmem>>, vector<1x96x32xbf16>
      %95 = vector.shape_cast %94 : vector<1x96x32xbf16> to vector<96x32xbf16>
      %96 = vector.shape_cast %93 : vector<96x32xbf16> to vector<1x96x32xbf16>
      tpu.vector_store %arg7[%c2_89, %c0_90, %c0_91], %96 {strides = array<i32>} : memref<9x96x32xbf16, #tpu.memory_space<vmem>>, vector<1x96x32xbf16>,
      %97 = vector.extract_strided_slice %81 {offsets = [1, 0, 0], sizes = [12, 8, 32], strides = [1, 1, 1]} : vector<14x10x32xbf16> to vector<12x8x32xbf16>
      %98 = vector.shape_cast %97 : vector<12x8x32xbf16> to vector<96x32xbf16>
      %c3_92 = arith.constant 3 : index
      %c0_93 = arith.constant 0 : index
      %c0_94 = arith.constant 0 : index
      %99 = vector.load %arg7[%c3_92, %c0_93, %c0_94] : memref<9x96x32xbf16, #tpu.memory_space<vmem>>, vector<1x96x32xbf16>
      %100 = vector.shape_cast %99 : vector<1x96x32xbf16> to vector<96x32xbf16>
      %101 = vector.shape_cast %98 : vector<96x32xbf16> to vector<1x96x32xbf16>
      tpu.vector_store %arg7[%c3_92, %c0_93, %c0_94], %101 {strides = array<i32>} : memref<9x96x32xbf16, #tpu.memory_space<vmem>>, vector<1x96x32xbf16>,
      %102 = vector.extract_strided_slice %81 {offsets = [1, 1, 0], sizes = [12, 8, 32], strides = [1, 1, 1]} : vector<14x10x32xbf16> to vector<12x8x32xbf16>
      %103 = vector.shape_cast %102 : vector<12x8x32xbf16> to vector<96x32xbf16>
      %c4_95 = arith.constant 4 : index
      %c0_96 = arith.constant 0 : index
      %c0_97 = arith.constant 0 : index
      %104 = vector.load %arg7[%c4_95, %c0_96, %c0_97] : memref<9x96x32xbf16, #tpu.memory_space<vmem>>, vector<1x96x32xbf16>
      %105 = vector.shape_cast %104 : vector<1x96x32xbf16> to vector<96x32xbf16>
      %106 = vector.shape_cast %103 : vector<96x32xbf16> to vector<1x96x32xbf16>
      tpu.vector_store %arg7[%c4_95, %c0_96, %c0_97], %106 {strides = array<i32>} : memref<9x96x32xbf16, #tpu.memory_space<vmem>>, vector<1x96x32xbf16>,
      %107 = vector.extract_strided_slice %81 {offsets = [1, 2, 0], sizes = [12, 8, 32], strides = [1, 1, 1]} : vector<14x10x32xbf16> to vector<12x8x32xbf16>
      %108 = vector.shape_cast %107 : vector<12x8x32xbf16> to vector<96x32xbf16>
      %c5_98 = arith.constant 5 : index
      %c0_99 = arith.constant 0 : index
      %c0_100 = arith.constant 0 : index
      %109 = vector.load %arg7[%c5_98, %c0_99, %c0_100] : memref<9x96x32xbf16, #tpu.memory_space<vmem>>, vector<1x96x32xbf16>
      %110 = vector.shape_cast %109 : vector<1x96x32xbf16> to vector<96x32xbf16>
      %111 = vector.shape_cast %108 : vector<96x32xbf16> to vector<1x96x32xbf16>
      tpu.vector_store %arg7[%c5_98, %c0_99, %c0_100], %111 {strides = array<i32>} : memref<9x96x32xbf16, #tpu.memory_space<vmem>>, vector<1x96x32xbf16>,
      %112 = vector.extract_strided_slice %81 {offsets = [2, 0, 0], sizes = [12, 8, 32], strides = [1, 1, 1]} : vector<14x10x32xbf16> to vector<12x8x32xbf16>
      %113 = vector.shape_cast %112 : vector<12x8x32xbf16> to vector<96x32xbf16>
      %c6_101 = arith.constant 6 : index
      %c0_102 = arith.constant 0 : index
      %c0_103 = arith.constant 0 : index
      %114 = vector.load %arg7[%c6_101, %c0_102, %c0_103] : memref<9x96x32xbf16, #tpu.memory_space<vmem>>, vector<1x96x32xbf16>
      %115 = vector.shape_cast %114 : vector<1x96x32xbf16> to vector<96x32xbf16>
      %116 = vector.shape_cast %113 : vector<96x32xbf16> to vector<1x96x32xbf16>
      tpu.vector_store %arg7[%c6_101, %c0_102, %c0_103], %116 {strides = array<i32>} : memref<9x96x32xbf16, #tpu.memory_space<vmem>>, vector<1x96x32xbf16>,
      %117 = vector.extract_strided_slice %81 {offsets = [2, 1, 0], sizes = [12, 8, 32], strides = [1, 1, 1]} : vector<14x10x32xbf16> to vector<12x8x32xbf16>
      %118 = vector.shape_cast %117 : vector<12x8x32xbf16> to vector<96x32xbf16>
      %c7_104 = arith.constant 7 : index
      %c0_105 = arith.constant 0 : index
      %c0_106 = arith.constant 0 : index
      %119 = vector.load %arg7[%c7_104, %c0_105, %c0_106] : memref<9x96x32xbf16, #tpu.memory_space<vmem>>, vector<1x96x32xbf16>
      %120 = vector.shape_cast %119 : vector<1x96x32xbf16> to vector<96x32xbf16>
      %121 = vector.shape_cast %118 : vector<96x32xbf16> to vector<1x96x32xbf16>
      tpu.vector_store %arg7[%c7_104, %c0_105, %c0_106], %121 {strides = array<i32>} : memref<9x96x32xbf16, #tpu.memory_space<vmem>>, vector<1x96x32xbf16>,
      %122 = vector.extract_strided_slice %81 {offsets = [2, 2, 0], sizes = [12, 8, 32], strides = [1, 1, 1]} : vector<14x10x32xbf16> to vector<12x8x32xbf16>
      %123 = vector.shape_cast %122 : vector<12x8x32xbf16> to vector<96x32xbf16>
      %c8_107 = arith.constant 8 : index
      %c0_108 = arith.constant 0 : index
      %c0_109 = arith.constant 0 : index
      %124 = vector.load %arg7[%c8_107, %c0_108, %c0_109] : memref<9x96x32xbf16, #tpu.memory_space<vmem>>, vector<1x96x32xbf16>
      %125 = vector.shape_cast %124 : vector<1x96x32xbf16> to vector<96x32xbf16>
      %126 = vector.shape_cast %123 : vector<96x32xbf16> to vector<1x96x32xbf16>
      tpu.vector_store %arg7[%c8_107, %c0_108, %c0_109], %126 {strides = array<i32>} : memref<9x96x32xbf16, #tpu.memory_space<vmem>>, vector<1x96x32xbf16>,
    } else {
    }
    %c0 = arith.constant 0 : index
    %c0_1 = arith.constant 0 : index
    %c0_2 = arith.constant 0 : index
    %3 = vector.load %arg7[%c0, %c0_1, %c0_2] : memref<9x96x32xbf16, #tpu.memory_space<vmem>>, vector<1x96x32xbf16>
    %4 = vector.shape_cast %3 : vector<1x96x32xbf16> to vector<96x32xbf16>
    %c0_3 = arith.constant 0 : index
    %c0_4 = arith.constant 0 : index
    %c0_5 = arith.constant 0 : index
    %5 = vector.load %arg3[%c0_3, %c0_4, %c0_5] : memref<9x32x128xbf16, #tpu.memory_space<vmem>>, vector<1x32x128xbf16>
    %6 = vector.shape_cast %5 : vector<1x32x128xbf16> to vector<32x128xbf16>
    %cst = arith.constant dense<0.000000e+00> : vector<96x128xf32>
    %7 = tpu.matmul %4, %6, %cst {dimension_numbers = #tpu.dot_dimension_numbers<[1], [0], [0], [1], [0, 0, 1, 1], [], []>} : vector<96x32xbf16>, vector<32x128xbf16>, vector<96x128xf32> -> vector<96x128xf32>
    %c1 = arith.constant 1 : index
    %c0_6 = arith.constant 0 : index
    %c0_7 = arith.constant 0 : index
    %8 = vector.load %arg7[%c1, %c0_6, %c0_7] : memref<9x96x32xbf16, #tpu.memory_space<vmem>>, vector<1x96x32xbf16>
    %9 = vector.shape_cast %8 : vector<1x96x32xbf16> to vector<96x32xbf16>
    %c1_8 = arith.constant 1 : index
    %c0_9 = arith.constant 0 : index
    %c0_10 = arith.constant 0 : index
    %10 = vector.load %arg3[%c1_8, %c0_9, %c0_10] : memref<9x32x128xbf16, #tpu.memory_space<vmem>>, vector<1x32x128xbf16>
    %11 = vector.shape_cast %10 : vector<1x32x128xbf16> to vector<32x128xbf16>
    %cst_11 = arith.constant dense<0.000000e+00> : vector<96x128xf32>
    %12 = tpu.matmul %9, %11, %cst_11 {dimension_numbers = #tpu.dot_dimension_numbers<[1], [0], [0], [1], [0, 0, 1, 1], [], []>} : vector<96x32xbf16>, vector<32x128xbf16>, vector<96x128xf32> -> vector<96x128xf32>
    %13 = arith.addf %7, %12 : vector<96x128xf32>
    %c2 = arith.constant 2 : index
    %c0_12 = arith.constant 0 : index
    %c0_13 = arith.constant 0 : index
    %14 = vector.load %arg7[%c2, %c0_12, %c0_13] : memref<9x96x32xbf16, #tpu.memory_space<vmem>>, vector<1x96x32xbf16>
    %15 = vector.shape_cast %14 : vector<1x96x32xbf16> to vector<96x32xbf16>
    %c2_14 = arith.constant 2 : index
    %c0_15 = arith.constant 0 : index
    %c0_16 = arith.constant 0 : index
    %16 = vector.load %arg3[%c2_14, %c0_15, %c0_16] : memref<9x32x128xbf16, #tpu.memory_space<vmem>>, vector<1x32x128xbf16>
    %17 = vector.shape_cast %16 : vector<1x32x128xbf16> to vector<32x128xbf16>
    %cst_17 = arith.constant dense<0.000000e+00> : vector<96x128xf32>
    %18 = tpu.matmul %15, %17, %cst_17 {dimension_numbers = #tpu.dot_dimension_numbers<[1], [0], [0], [1], [0, 0, 1, 1], [], []>} : vector<96x32xbf16>, vector<32x128xbf16>, vector<96x128xf32> -> vector<96x128xf32>
    %19 = arith.addf %13, %18 : vector<96x128xf32>
    %c3 = arith.constant 3 : index
    %c0_18 = arith.constant 0 : index
    %c0_19 = arith.constant 0 : index
    %20 = vector.load %arg7[%c3, %c0_18, %c0_19] : memref<9x96x32xbf16, #tpu.memory_space<vmem>>, vector<1x96x32xbf16>
    %21 = vector.shape_cast %20 : vector<1x96x32xbf16> to vector<96x32xbf16>
    %c3_20 = arith.constant 3 : index
    %c0_21 = arith.constant 0 : index
    %c0_22 = arith.constant 0 : index
    %22 = vector.load %arg3[%c3_20, %c0_21, %c0_22] : memref<9x32x128xbf16, #tpu.memory_space<vmem>>, vector<1x32x128xbf16>
    %23 = vector.shape_cast %22 : vector<1x32x128xbf16> to vector<32x128xbf16>
    %cst_23 = arith.constant dense<0.000000e+00> : vector<96x128xf32>
    %24 = tpu.matmul %21, %23, %cst_23 {dimension_numbers = #tpu.dot_dimension_numbers<[1], [0], [0], [1], [0, 0, 1, 1], [], []>} : vector<96x32xbf16>, vector<32x128xbf16>, vector<96x128xf32> -> vector<96x128xf32>
    %25 = arith.addf %19, %24 : vector<96x128xf32>
    %c4 = arith.constant 4 : index
    %c0_24 = arith.constant 0 : index
    %c0_25 = arith.constant 0 : index
    %26 = vector.load %arg7[%c4, %c0_24, %c0_25] : memref<9x96x32xbf16, #tpu.memory_space<vmem>>, vector<1x96x32xbf16>
    %27 = vector.shape_cast %26 : vector<1x96x32xbf16> to vector<96x32xbf16>
    %c4_26 = arith.constant 4 : index
    %c0_27 = arith.constant 0 : index
    %c0_28 = arith.constant 0 : index
    %28 = vector.load %arg3[%c4_26, %c0_27, %c0_28] : memref<9x32x128xbf16, #tpu.memory_space<vmem>>, vector<1x32x128xbf16>
    %29 = vector.shape_cast %28 : vector<1x32x128xbf16> to vector<32x128xbf16>
    %cst_29 = arith.constant dense<0.000000e+00> : vector<96x128xf32>
    %30 = tpu.matmul %27, %29, %cst_29 {dimension_numbers = #tpu.dot_dimension_numbers<[1], [0], [0], [1], [0, 0, 1, 1], [], []>} : vector<96x32xbf16>, vector<32x128xbf16>, vector<96x128xf32> -> vector<96x128xf32>
    %31 = arith.addf %25, %30 : vector<96x128xf32>
    %c5 = arith.constant 5 : index
    %c0_30 = arith.constant 0 : index
    %c0_31 = arith.constant 0 : index
    %32 = vector.load %arg7[%c5, %c0_30, %c0_31] : memref<9x96x32xbf16, #tpu.memory_space<vmem>>, vector<1x96x32xbf16>
    %33 = vector.shape_cast %32 : vector<1x96x32xbf16> to vector<96x32xbf16>
    %c5_32 = arith.constant 5 : index
    %c0_33 = arith.constant 0 : index
    %c0_34 = arith.constant 0 : index
    %34 = vector.load %arg3[%c5_32, %c0_33, %c0_34] : memref<9x32x128xbf16, #tpu.memory_space<vmem>>, vector<1x32x128xbf16>
    %35 = vector.shape_cast %34 : vector<1x32x128xbf16> to vector<32x128xbf16>
    %cst_35 = arith.constant dense<0.000000e+00> : vector<96x128xf32>
    %36 = tpu.matmul %33, %35, %cst_35 {dimension_numbers = #tpu.dot_dimension_numbers<[1], [0], [0], [1], [0, 0, 1, 1], [], []>} : vector<96x32xbf16>, vector<32x128xbf16>, vector<96x128xf32> -> vector<96x128xf32>
    %37 = arith.addf %31, %36 : vector<96x128xf32>
    %c6 = arith.constant 6 : index
    %c0_36 = arith.constant 0 : index
    %c0_37 = arith.constant 0 : index
    %38 = vector.load %arg7[%c6, %c0_36, %c0_37] : memref<9x96x32xbf16, #tpu.memory_space<vmem>>, vector<1x96x32xbf16>
    %39 = vector.shape_cast %38 : vector<1x96x32xbf16> to vector<96x32xbf16>
    %c6_38 = arith.constant 6 : index
    %c0_39 = arith.constant 0 : index
    %c0_40 = arith.constant 0 : index
    %40 = vector.load %arg3[%c6_38, %c0_39, %c0_40] : memref<9x32x128xbf16, #tpu.memory_space<vmem>>, vector<1x32x128xbf16>
    %41 = vector.shape_cast %40 : vector<1x32x128xbf16> to vector<32x128xbf16>
    %cst_41 = arith.constant dense<0.000000e+00> : vector<96x128xf32>
    %42 = tpu.matmul %39, %41, %cst_41 {dimension_numbers = #tpu.dot_dimension_numbers<[1], [0], [0], [1], [0, 0, 1, 1], [], []>} : vector<96x32xbf16>, vector<32x128xbf16>, vector<96x128xf32> -> vector<96x128xf32>
    %43 = arith.addf %37, %42 : vector<96x128xf32>
    %c7 = arith.constant 7 : index
    %c0_42 = arith.constant 0 : index
    %c0_43 = arith.constant 0 : index
    %44 = vector.load %arg7[%c7, %c0_42, %c0_43] : memref<9x96x32xbf16, #tpu.memory_space<vmem>>, vector<1x96x32xbf16>
    %45 = vector.shape_cast %44 : vector<1x96x32xbf16> to vector<96x32xbf16>
    %c7_44 = arith.constant 7 : index
    %c0_45 = arith.constant 0 : index
    %c0_46 = arith.constant 0 : index
    %46 = vector.load %arg3[%c7_44, %c0_45, %c0_46] : memref<9x32x128xbf16, #tpu.memory_space<vmem>>, vector<1x32x128xbf16>
    %47 = vector.shape_cast %46 : vector<1x32x128xbf16> to vector<32x128xbf16>
    %cst_47 = arith.constant dense<0.000000e+00> : vector<96x128xf32>
    %48 = tpu.matmul %45, %47, %cst_47 {dimension_numbers = #tpu.dot_dimension_numbers<[1], [0], [0], [1], [0, 0, 1, 1], [], []>} : vector<96x32xbf16>, vector<32x128xbf16>, vector<96x128xf32> -> vector<96x128xf32>
    %49 = arith.addf %43, %48 : vector<96x128xf32>
    %c8 = arith.constant 8 : index
    %c0_48 = arith.constant 0 : index
    %c0_49 = arith.constant 0 : index
    %50 = vector.load %arg7[%c8, %c0_48, %c0_49] : memref<9x96x32xbf16, #tpu.memory_space<vmem>>, vector<1x96x32xbf16>
    %51 = vector.shape_cast %50 : vector<1x96x32xbf16> to vector<96x32xbf16>
    %c8_50 = arith.constant 8 : index
    %c0_51 = arith.constant 0 : index
    %c0_52 = arith.constant 0 : index
    %52 = vector.load %arg3[%c8_50, %c0_51, %c0_52] : memref<9x32x128xbf16, #tpu.memory_space<vmem>>, vector<1x32x128xbf16>
    %53 = vector.shape_cast %52 : vector<1x32x128xbf16> to vector<32x128xbf16>
    %cst_53 = arith.constant dense<0.000000e+00> : vector<96x128xf32>
    %54 = tpu.matmul %51, %53, %cst_53 {dimension_numbers = #tpu.dot_dimension_numbers<[1], [0], [0], [1], [0, 0, 1, 1], [], []>} : vector<96x32xbf16>, vector<32x128xbf16>, vector<96x128xf32> -> vector<96x128xf32>
    %55 = arith.addf %49, %54 : vector<96x128xf32>
    %c0_54 = arith.constant 0 : index
    %c0_55 = arith.constant 0 : index
    %56 = vector.load %arg4[%c0_54, %c0_55] : memref<1x128xf32, #tpu.memory_space<vmem>>, vector<1x128xf32>
    %57 = vector.broadcast %56 : vector<1x128xf32> to vector<96x128xf32>
    %58 = arith.addf %55, %57 : vector<96x128xf32>
    %cst_56 = arith.constant 0.000000e+00 : f32
    %59 = vector.broadcast %cst_56 : f32 to vector<96x128xf32>
    %60 = arith.maximumf %58, %59 : vector<96x128xf32>
    %61 = vector.shape_cast %60 : vector<96x128xf32> to vector<1x12x8x128xf32>
    %c0_57 = arith.constant 0 : index
    %c0_58 = arith.constant 0 : index
    %c0_59 = arith.constant 0 : index
    %c0_60 = arith.constant 0 : index
    %62 = vector.load %arg5[%c0_57, %c0_58, %c0_59, %c0_60] : memref<1x12x8x128xf32, #tpu.memory_space<vmem>>, vector<1x12x8x128xf32>
    tpu.vector_store %arg5[%c0_57, %c0_58, %c0_59, %c0_60], %61 {strides = array<i32>} : memref<1x12x8x128xf32, #tpu.memory_space<vmem>>, vector<1x12x8x128xf32>,
    return
  }
  func.func @transform_0(%arg0: i32, %arg1: i32) -> (i32, i32, i32, i32) {
    %c0_i32 = arith.constant 0 : i32
    %c0_i32_0 = arith.constant 0 : i32
    %c0_i32_1 = arith.constant 0 : i32
    %c0_i32_2 = arith.constant 0 : i32
    return %arg0, %c0_i32, %c0_i32_0, %c0_i32_1 : i32, i32, i32, i32
  }
  func.func @transform_1(%arg0: i32, %arg1: i32) -> (i32, i32, i32) {
    %c0_i32 = arith.constant 0 : i32
    %c0_i32_0 = arith.constant 0 : i32
    %c0_i32_1 = arith.constant 0 : i32
    return %c0_i32, %c0_i32_0, %arg1 : i32, i32, i32
  }
  func.func @transform_2(%arg0: i32, %arg1: i32) -> (i32, i32) {
    %c0_i32 = arith.constant 0 : i32
    %c0_i32_0 = arith.constant 0 : i32
    return %c0_i32, %arg1 : i32, i32
  }
  func.func @transform_3(%arg0: i32, %arg1: i32) -> (i32, i32, i32, i32) {
    %c0_i32 = arith.constant 0 : i32
    %c0_i32_0 = arith.constant 0 : i32
    %c0_i32_1 = arith.constant 0 : i32
    return %arg0, %c0_i32, %c0_i32_0, %arg1 : i32, i32, i32, i32
  }
}

</mosaic_0001>

<llo_original>
// kernel: conv3x3_bn_relu.1
$region0: #{conv3x3_bn_relu.1}
  #allocation0 [shape = 'u32[]', space=smem, size = 0x4, offset = 0x4, fixed_abs, tag = 'smem constant byte address 0x4 - core index']
  #allocation1 [shape = 'u32[144,128]{1,0:T(1,128)}', space=vmem, size = 0x12000, scoped, tag = 'internal scratch']
  #allocation2 [shape = 'bf16[14,10,32]{2,1,0:T(8,128)(2,1)}', space=vmem, size = 0xe000, scoped, tag = 'scratch operand']
  #allocation3 [shape = 'bf16[9,96,32]{2,1,0:T(8,128)(2,1)}', space=vmem, size = 0x36000, scoped, tag = 'scratch operand']
  %s0 = inlined_call_operand.vmem [shape: bf16[1,24,8,64], index: 0, kind: input, shape index: {}]
  %s1 = inlined_call_operand.vmem [shape: bf16[9,32,256], index: 1, kind: input, shape index: {}]
  %s2 = inlined_call_operand.vmem [shape: f32[1,256], index: 2, kind: input, shape index: {}]
  %s3 = inlined_call_operand.hbm [shape: f32[1,12,8,256], index: 3, kind: output, shape index: {}]
  %s4 = sld [smem:[#allocation0]]
  $region90: #{conv3x3_bn_relu.1} parent=0
    _
  %s6 = ssub.s32 1, %s4
  %s7 = scalar_select 0, %s6, %s4
  $region1: #{conv3x3_bn_relu.1} parent=0
    #allocation4 [shape = 'u8[147456]{0}', space=vmem, size = 0x24000, scoped, tag = 'input window, operand 1']
    #allocation5 [shape = 'u8[98304]{0}', space=vmem, size = 0x18000, scoped, tag = 'output window, operand 0']
    #allocation6 [shape = 's32[2]{0}', space=sflag, size = 0x8, scoped, tag = 'scoped memory for conv3x3_bn_relu.1']
    %8 = vsyncpa [#allocation6], 0
    %s9 = scalar_lea.sflag [#allocation6], 1
    %10 = vsyncpa %s9, 0
    loop: start=0, step=1, limit=4
    $region2: #{conv3x3_bn_relu.1} parent=1 // loop_pre_header
      _
    $region3: #{conv3x3_bn_relu.1} parent=1 // loop_header
      %s12 = sphi 0, %s16
      %p13 = scmp.ge.s32.totalorder %s12, 4
      %s19 = sphi 0, %s31
      %s20 = sphi 0, %s27
      %s21 = sphi 0, %s19
      %s22 = sphi 0, %s20
      %s23 = sphi 0, %s21
      %s24 = sphi 0, %s22
      %s34 = sphi 0, %s36
      %s37 = sphi 0, %s34
      %s38 = sphi 0, %s37
      %s54 = sphi 0, %s38
      %s60 = sphi 0, %s62
      %s63 = sphi 0, %s60
      %s64 = sphi 0, %s63
      %s80 = sphi 0, %s64
      %s86 = sphi 0, %s88
      %s89 = sphi 0, %s86
      %s90 = sphi 0, %s89
      %s106 = sphi 0, %s90
      %s114 = sphi 0, %s116
      %s117 = sphi 0, %s114
      %s118 = sphi 0, %s117
      %s134 = sphi 0, %s118
    $region4: #{conv3x3_bn_relu.1} parent=1 // loop_header_branch
      %15 = sbr.rel (%p13) target = $region8
    $region5: #{conv3x3_bn_relu.1} parent=1 // loop_body
      %s17 = ssub.s32 %s12, 1
      %s18 = ssub.s32 %s12, 2
      %s25 = sadd.s32 1, %s20
      %p26 = scmp.ge.s32.totalorder %s25, 2
      %s27 = scalar_select %p26, 0, %s25
      %s28 = sadd.s32 1, %s19
      %s29 = scalar_select %p26, %s28, %s19
      %p30 = scmp.ge.s32.totalorder %s29, 1
      %s31 = scalar_select %p30, 0, %s29
      %s32 = ssub.s32 %s19, %s31
      %p33 = scmp.eq.s32.totalorder %s32, 0
      %s35 = sadd.s32 %s34, 1
      %s36 = scalar_select %p33, %s34, %s35
      %p39 = pneg %p33
      %p40 = scmp.eq.s32.totalorder %s12, 1
      %p41 = por %p39, %p40
      %p42 = scmp.ne.s32.totalorder %s34, %s37
      %p43 = scmp.eq.s32.totalorder %s12, 0
      %p44 = por %p42, %p43
      %p45 = scmp.ne.s32.totalorder %s34, %s37
      %p46 = scmp.eq.s32.totalorder %s17, 1
      %p47 = por %p45, %p46
      %p48 = scmp.ne.s32.totalorder %s37, %s38
      %p49 = scmp.eq.s32.totalorder %s17, 0
      %p50 = por %p48, %p49
      %p51 = scmp.ne.s32.totalorder %s37, %s38
      %p52 = scmp.eq.s32.totalorder %s18, 1
      %p53 = por %p51, %p52
      %p55 = scmp.ne.s32.totalorder %s38, %s54
      %p56 = scmp.eq.s32.totalorder %s18, 0
      %p57 = por %p55, %p56
      %s58 = ssub.s32 %s20, %s27
      %p59 = scmp.eq.s32.totalorder %s58, 0
      %s61 = sadd.s32 %s60, 1
      %s62 = scalar_select %p59, %s60, %s61
      %p65 = pneg %p59
      %p66 = scmp.eq.s32.totalorder %s12, 1
      %p67 = por %p65, %p66
      %p68 = scmp.ne.s32.totalorder %s60, %s63
      %p69 = scmp.eq.s32.totalorder %s12, 0
      %p70 = por %p68, %p69
      %p71 = scmp.ne.s32.totalorder %s60, %s63
      %p72 = scmp.eq.s32.totalorder %s17, 1
      %p73 = por %p71, %p72
      %p74 = scmp.ne.s32.totalorder %s63, %s64
      %p75 = scmp.eq.s32.totalorder %s17, 0
      %p76 = por %p74, %p75
      %p77 = scmp.ne.s32.totalorder %s63, %s64
      %p78 = scmp.eq.s32.totalorder %s18, 1
      %p79 = por %p77, %p78
      %p81 = scmp.ne.s32.totalorder %s64, %s80
      %p82 = scmp.eq.s32.totalorder %s18, 0
      %p83 = por %p81, %p82
      %s84 = ssub.s32 %s20, %s27
      %p85 = scmp.eq.s32.totalorder %s84, 0
      %s87 = sadd.s32 %s86, 1
      %s88 = scalar_select %p85, %s86, %s87
      %p91 = pneg %p85
      %p92 = scmp.eq.s32.totalorder %s12, 1
      %p93 = por %p91, %p92
      %p94 = scmp.ne.s32.totalorder %s86, %s89
      %p95 = scmp.eq.s32.totalorder %s12, 0
      %p96 = por %p94, %p95
      %p97 = scmp.ne.s32.totalorder %s86, %s89
      %p98 = scmp.eq.s32.totalorder %s17, 1
      %p99 = por %p97, %p98
      %p100 = scmp.ne.s32.totalorder %s89, %s90
      %p101 = scmp.eq.s32.totalorder %s17, 0
      %p102 = por %p100, %p101
      %p103 = scmp.ne.s32.totalorder %s89, %s90
      %p104 = scmp.eq.s32.totalorder %s18, 1
      %p105 = por %p103, %p104
      %p107 = scmp.ne.s32.totalorder %s90, %s106
      %p108 = scmp.eq.s32.totalorder %s18, 0
      %p109 = por %p107, %p108
      %s110 = ssub.s32 %s19, %s31
      %s111 = ssub.s32 %s20, %s27
      %s112 = sor.u32 %s110, %s111
      %p113 = scmp.eq.s32.totalorder %s112, 0
      %s115 = sadd.s32 %s114, 1
      %s116 = scalar_select %p113, %s114, %s115
      %p119 = pneg %p113
      %p120 = scmp.eq.s32.totalorder %s12, 1
      %p121 = por %p119, %p120
      %p122 = scmp.ne.s32.totalorder %s114, %s117
      %p123 = scmp.eq.s32.totalorder %s12, 0
      %p124 = por %p122, %p123
      %p125 = scmp.ne.s32.totalorder %s114, %s117
      %p126 = scmp.eq.s32.totalorder %s17, 1
      %p127 = por %p125, %p126
      %p128 = scmp.ne.s32.totalorder %s117, %s118
      %p129 = scmp.eq.s32.totalorder %s17, 0
      %p130 = por %p128, %p129
      %p131 = scmp.ne.s32.totalorder %s117, %s118
      %p132 = scmp.eq.s32.totalorder %s18, 1
      %p133 = por %p131, %p132
      %p135 = scmp.ne.s32.totalorder %s118, %s134
      %p136 = scmp.eq.s32.totalorder %s18, 0
      %p137 = por %p135, %p136
      %p138 = scmp.le.s32.totalorder 1, %s12
      %p139 = scmp.lt.s32.totalorder %s12, 3
      %p140 = pnand %p138, %p139
      %p141 = pneg %p140
      // Predicated region
      $region9: #{conv3x3_bn_relu.1} parent=5 // pred_check
        _
      $region10: #{conv3x3_bn_relu.1} parent=5 // pred_check_branch
        %143 = sbr.rel (%p140) target = $region12
      $region11: #{conv3x3_bn_relu.1} parent=5 // pred_region
        %s144 = ssub.s32 %s12, 1
        // Predicated region
        $region13: #{conv3x3_bn_relu.1} parent=11 // pred_check
          %p145 = pneg %p50
        $region14: #{conv3x3_bn_relu.1} parent=11 // pred_check_branch
          %147 = sbr.rel (%p145) target = $region16
        $region15: #{conv3x3_bn_relu.1} parent=11 // pred_region
          %p148 = scmp.lt.s32.totalorder %s21, 0
          %s149 = scalar_select %p148, %s21, 0
          %s150 = smul.addr %s149, 24
          %s151 = smul.addr %s150, 4
          %s152 = scalar_lea.vmem %s0, %s151
        $region16: #{conv3x3_bn_relu.1} parent=11 // pred_fallthru
          _
      $region12: #{conv3x3_bn_relu.1} parent=5 // pred_fallthru
        _
      %p153 = scmp.lt.s32.totalorder %s12, 2
      // Predicated region
      $region17: #{conv3x3_bn_relu.1} parent=5 // pred_check
        %p154 = pneg %p153
      $region18: #{conv3x3_bn_relu.1} parent=5 // pred_check_branch
        %156 = sbr.rel (%p154) target = $region20
      $region19: #{conv3x3_bn_relu.1} parent=5 // pred_region
        // Predicated region
        $region21: #{conv3x3_bn_relu.1} parent=19 // pred_check
          %p157 = pneg %p70
        $region22: #{conv3x3_bn_relu.1} parent=19 // pred_check_branch
          %159 = sbr.rel (%p157) target = $region24
        $region23: #{conv3x3_bn_relu.1} parent=19 // pred_region
          %s160 = sand.u32 %s60, 1
          %s161 = sand.u32 %s60, 1
          %s162 = smul.addr %s161, 144
          %s163 = scalar_lea.vmem [#allocation4], %s162
          %s164 = smul.addr %s20, 4
          %s165 = scalar_lea.vmem %s1, %s164
          // Predicated region
          $region25: #{conv3x3_bn_relu.1} parent=23 // pred_check
            _
          $region26: #{conv3x3_bn_relu.1} parent=23 // pred_check_branch
            %167 = sbr.rel (0) target = $region28
          $region27: #{conv3x3_bn_relu.1} parent=23 // pred_region
            // Predicated region
            $region29: #{conv3x3_bn_relu.1} parent=27 // pred_check
              _
            $region30: #{conv3x3_bn_relu.1} parent=27 // pred_check_branch
              %169 = sbr.rel target = $region32
            $region31: #{conv3x3_bn_relu.1} parent=27 // pred_region
              // Predicated region
              $region44: #{conv3x3_bn_relu.1} parent=31 // pred_check
                _
              $region45: #{conv3x3_bn_relu.1} parent=31 // pred_check_branch
                %255 = sbr.rel (0) target = $region47
              $region46: #{conv3x3_bn_relu.1} parent=31 // pred_region
                loop: start=0, step=1, limit=1
                $region48: #{conv3x3_bn_relu.1} parent=46 // loop_pre_header
                  _
                $region49: #{conv3x3_bn_relu.1} parent=46 // loop_header
                  %s257 = sphi 0, %s261
                  %p258 = scmp.ge.s32.totalorder %s257, 1
                  %s262 = sphi %s165, %s165
                  %s263 = sphi %s163, %s163
                $region50: #{conv3x3_bn_relu.1} parent=46 // loop_header_branch
                  %260 = sbr.rel (%p258) target = $region54
                $region51: #{conv3x3_bn_relu.1} parent=46 // loop_body
                  _
                $region52: #{conv3x3_bn_relu.1} parent=46 // loop_footer
                  %s261 = sadd.s32 1, %s257
                $region53: #{conv3x3_bn_relu.1} parent=46 // loop_footer_branch
                  %256 = sbr.rel target = $region49
                $region54: #{conv3x3_bn_relu.1} parent=46 // loop_exit
                  _
                %s265 = ssub.s32 16, 1
                loop: start=0, step=1, limit=1
                $region55: #{conv3x3_bn_relu.1} parent=46 // loop_pre_header
                  _
                $region56: #{conv3x3_bn_relu.1} parent=46 // loop_header
                  %s267 = sphi 0, %s271
                  %p268 = scmp.ge.s32.totalorder %s267, 1
                  %s272 = sphi %s165, %s165
                  %s273 = sphi %s163, %s163
                $region57: #{conv3x3_bn_relu.1} parent=46 // loop_header_branch
                  %270 = sbr.rel (%p268) target = $region61
                $region58: #{conv3x3_bn_relu.1} parent=46 // loop_body
                  %v274 = vld [vmem:[%s272] sm:%s265]
                  %275 = vst [vmem:[%s273] sm:%s265] %v274
                  %v276 = vld [vmem:[%s272 + $0x8] sm:%s265]
                  %277 = vst [vmem:[%s273 + $0x4] sm:%s265] %v276
                  %v278 = vld [vmem:[%s272 + $0x10] sm:%s265]
                  %279 = vst [vmem:[%s273 + $0x8] sm:%s265] %v278
                  %v280 = vld [vmem:[%s272 + $0x18] sm:%s265]
                  %281 = vst [vmem:[%s273 + $0xc] sm:%s265] %v280
                  %v282 = vld [vmem:[%s272 + $0x20] sm:%s265]
                  %283 = vst [vmem:[%s273 + $0x10] sm:%s265] %v282
                  %v284 = vld [vmem:[%s272 + $0x28] sm:%s265]
                  %285 = vst [vmem:[%s273 + $0x14] sm:%s265] %v284
                  %v286 = vld [vmem:[%s272 + $0x30] sm:%s265]
                  %287 = vst [vmem:[%s273 + $0x18] sm:%s265] %v286
                  %v288 = vld [vmem:[%s272 + $0x38] sm:%s265]
                  %289 = vst [vmem:[%s273 + $0x1c] sm:%s265] %v288
                  %v290 = vld [vmem:[%s272 + $0x40] sm:%s265]
                  %291 = vst [vmem:[%s273 + $0x20] sm:%s265] %v290
                  %v292 = vld [vmem:[%s272 + $0x48] sm:%s265]
                  %293 = vst [vmem:[%s273 + $0x24] sm:%s265] %v292
                  %v294 = vld [vmem:[%s272 + $0x50] sm:%s265]
                  %295 = vst [vmem:[%s273 + $0x28] sm:%s265] %v294
                  %v296 = vld [vmem:[%s272 + $0x58] sm:%s265]
                  %297 = vst [vmem:[%s273 + $0x2c] sm:%s265] %v296
                  %v298 = vld [vmem:[%s272 + $0x60] sm:%s265]
                  %299 = vst [vmem:[%s273 + $0x30] sm:%s265] %v298
                  %v300 = vld [vmem:[%s272 + $0x68] sm:%s265]
                  %301 = vst [vmem:[%s273 + $0x34] sm:%s265] %v300
                  %v302 = vld [vmem:[%s272 + $0x70] sm:%s265]
                  %303 = vst [vmem:[%s273 + $0x38] sm:%s265] %v302
                  %v304 = vld [vmem:[%s272 + $0x78] sm:%s265]
                  %305 = vst [vmem:[%s273 + $0x3c] sm:%s265] %v304
                  %v306 = vld [vmem:[%s272 + $0x80] sm:%s265]
                  %307 = vst [vmem:[%s273 + $0x40] sm:%s265] %v306
                  %v308 = vld [vmem:[%s272 + $0x88] sm:%s265]
                  %309 = vst [vmem:[%s273 + $0x44] sm:%s265] %v308
                  %v310 = vld [vmem:[%s272 + $0x90] sm:%s265]
                  %311 = vst [vmem:[%s273 + $0x48] sm:%s265] %v310
                  %v312 = vld [vmem:[%s272 + $0x98] sm:%s265]
                  %313 = vst [vmem:[%s273 + $0x4c] sm:%s265] %v312
                  %v314 = vld [vmem:[%s272 + $0xa0] sm:%s265]
                  %315 = vst [vmem:[%s273 + $0x50] sm:%s265] %v314
                  %v316 = vld [vmem:[%s272 + $0xa8] sm:%s265]
                  %317 = vst [vmem:[%s273 + $0x54] sm:%s265] %v316
                  %v318 = vld [vmem:[%s272 + $0xb0] sm:%s265]
                  %319 = vst [vmem:[%s273 + $0x58] sm:%s265] %v318
                  %v320 = vld [vmem:[%s272 + $0xb8] sm:%s265]
                  %321 = vst [vmem:[%s273 + $0x5c] sm:%s265] %v320
                  %v322 = vld [vmem:[%s272 + $0xc0] sm:%s265]
                  %323 = vst [vmem:[%s273 + $0x60] sm:%s265] %v322
                  %v324 = vld [vmem:[%s272 + $0xc8] sm:%s265]
                  %325 = vst [vmem:[%s273 + $0x64] sm:%s265] %v324
                  %v326 = vld [vmem:[%s272 + $0xd0] sm:%s265]
                  %327 = vst [vmem:[%s273 + $0x68] sm:%s265] %v326
                  %v328 = vld [vmem:[%s272 + $0xd8] sm:%s265]
                  %329 = vst [vmem:[%s273 + $0x6c] sm:%s265] %v328
                  %v330 = vld [vmem:[%s272 + $0xe0] sm:%s265]
                  %331 = vst [vmem:[%s273 + $0x70] sm:%s265] %v330
                  %v332 = vld [vmem:[%s272 + $0xe8] sm:%s265]
                  %333 = vst [vmem:[%s273 + $0x74] sm:%s265] %v332
                  %v334 = vld [vmem:[%s272 + $0xf0] sm:%s265]
                  %335 = vst [vmem:[%s273 + $0x78] sm:%s265] %v334
                  %v336 = vld [vmem:[%s272 + $0xf8] sm:%s265]
                  %337 = vst [vmem:[%s273 + $0x7c] sm:%s265] %v336
                  %v338 = vld [vmem:[%s272 + $0x100] sm:%s265]
                  %339 = vst [vmem:[%s273 + $0x80] sm:%s265] %v338
                  %v340 = vld [vmem:[%s272 + $0x108] sm:%s265]
                  %341 = vst [vmem:[%s273 + $0x84] sm:%s265] %v340
                  %v342 = vld [vmem:[%s272 + $0x110] sm:%s265]
                  %343 = vst [vmem:[%s273 + $0x88] sm:%s265] %v342
                  %v344 = vld [vmem:[%s272 + $0x118] sm:%s265]
                  %345 = vst [vmem:[%s273 + $0x8c] sm:%s265] %v344
                $region59: #{conv3x3_bn_relu.1} parent=46 // loop_footer
                  %s271 = sadd.s32 1, %s267
                $region60: #{conv3x3_bn_relu.1} parent=46 // loop_footer_branch
                  %266 = sbr.rel target = $region56
                $region61: #{conv3x3_bn_relu.1} parent=46 // loop_exit
                  _
              $region47: #{conv3x3_bn_relu.1} parent=31 // pred_fallthru
                _
            $region32: #{conv3x3_bn_relu.1} parent=27 // pred_fallthru
              _
            // Predicated region
            $region33: #{conv3x3_bn_relu.1} parent=27 // pred_check
              _
            $region34: #{conv3x3_bn_relu.1} parent=27 // pred_check_branch
              %171 = sbr.rel (0) target = $region36
            $region35: #{conv3x3_bn_relu.1} parent=27 // pred_region
              %s173 = ssub.s32 16, 1
              loop: start=0, step=1, limit=1
              $region37: #{conv3x3_bn_relu.1} parent=35 // loop_pre_header
                _
              $region38: #{conv3x3_bn_relu.1} parent=35 // loop_header
                %s175 = sphi 0, %s179
                %p176 = scmp.ge.s32.totalorder %s175, 1
                %s180 = sphi %s165, %s165
                %s181 = sphi %s163, %s163
              $region39: #{conv3x3_bn_relu.1} parent=35 // loop_header_branch
                %178 = sbr.rel (%p176) target = $region43
              $region40: #{conv3x3_bn_relu.1} parent=35 // loop_body
                %v182 = vld [vmem:[%s180] sm:%s173]
                %183 = vst [vmem:[%s181] sm:%s173] %v182
                %v184 = vld [vmem:[%s180 + $0x8] sm:%s173]
                %185 = vst [vmem:[%s181 + $0x4] sm:%s173] %v184
                %v186 = vld [vmem:[%s180 + $0x10] sm:%s173]
                %187 = vst [vmem:[%s181 + $0x8] sm:%s173] %v186
                %v188 = vld [vmem:[%s180 + $0x18] sm:%s173]
                %189 = vst [vmem:[%s181 + $0xc] sm:%s173] %v188
                %v190 = vld [vmem:[%s180 + $0x20] sm:%s173]
                %191 = vst [vmem:[%s181 + $0x10] sm:%s173] %v190
                %v192 = vld [vmem:[%s180 + $0x28] sm:%s173]
                %193 = vst [vmem:[%s181 + $0x14] sm:%s173] %v192
                %v194 = vld [vmem:[%s180 + $0x30] sm:%s173]
                %195 = vst [vmem:[%s181 + $0x18] sm:%s173] %v194
                %v196 = vld [vmem:[%s180 + $0x38] sm:%s173]
                %197 = vst [vmem:[%s181 + $0x1c] sm:%s173] %v196
                %v198 = vld [vmem:[%s180 + $0x40] sm:%s173]
                %199 = vst [vmem:[%s181 + $0x20] sm:%s173] %v198
                %v200 = vld [vmem:[%s180 + $0x48] sm:%s173]
                %201 = vst [vmem:[%s181 + $0x24] sm:%s173] %v200
                %v202 = vld [vmem:[%s180 + $0x50] sm:%s173]
                %203 = vst [vmem:[%s181 + $0x28] sm:%s173] %v202
                %v204 = vld [vmem:[%s180 + $0x58] sm:%s173]
                %205 = vst [vmem:[%s181 + $0x2c] sm:%s173] %v204
                %v206 = vld [vmem:[%s180 + $0x60] sm:%s173]
                %207 = vst [vmem:[%s181 + $0x30] sm:%s173] %v206
                %v208 = vld [vmem:[%s180 + $0x68] sm:%s173]
                %209 = vst [vmem:[%s181 + $0x34] sm:%s173] %v208
                %v210 = vld [vmem:[%s180 + $0x70] sm:%s173]
                %211 = vst [vmem:[%s181 + $0x38] sm:%s173] %v210
                %v212 = vld [vmem:[%s180 + $0x78] sm:%s173]
                %213 = vst [vmem:[%s181 + $0x3c] sm:%s173] %v212
                %v214 = vld [vmem:[%s180 + $0x80] sm:%s173]
                %215 = vst [vmem:[%s181 + $0x40] sm:%s173] %v214
                %v216 = vld [vmem:[%s180 + $0x88] sm:%s173]
                %217 = vst [vmem:[%s181 + $0x44] sm:%s173] %v216
                %v218 = vld [vmem:[%s180 + $0x90] sm:%s173]
                %219 = vst [vmem:[%s181 + $0x48] sm:%s173] %v218
                %v220 = vld [vmem:[%s180 + $0x98] sm:%s173]
                %221 = vst [vmem:[%s181 + $0x4c] sm:%s173] %v220
                %v222 = vld [vmem:[%s180 + $0xa0] sm:%s173]
                %223 = vst [vmem:[%s181 + $0x50] sm:%s173] %v222
                %v224 = vld [vmem:[%s180 + $0xa8] sm:%s173]
                %225 = vst [vmem:[%s181 + $0x54] sm:%s173] %v224
                %v226 = vld [vmem:[%s180 + $0xb0] sm:%s173]
                %227 = vst [vmem:[%s181 + $0x58] sm:%s173] %v226
                %v228 = vld [vmem:[%s180 + $0xb8] sm:%s173]
                %229 = vst [vmem:[%s181 + $0x5c] sm:%s173] %v228
                %v230 = vld [vmem:[%s180 + $0xc0] sm:%s173]
                %231 = vst [vmem:[%s181 + $0x60] sm:%s173] %v230
                %v232 = vld [vmem:[%s180 + $0xc8] sm:%s173]
                %233 = vst [vmem:[%s181 + $0x64] sm:%s173] %v232
                %v234 = vld [vmem:[%s180 + $0xd0] sm:%s173]
                %235 = vst [vmem:[%s181 + $0x68] sm:%s173] %v234
                %v236 = vld [vmem:[%s180 + $0xd8] sm:%s173]
                %237 = vst [vmem:[%s181 + $0x6c] sm:%s173] %v236
                %v238 = vld [vmem:[%s180 + $0xe0] sm:%s173]
                %239 = vst [vmem:[%s181 + $0x70] sm:%s173] %v238
                %v240 = vld [vmem:[%s180 + $0xe8] sm:%s173]
                %241 = vst [vmem:[%s181 + $0x74] sm:%s173] %v240
                %v242 = vld [vmem:[%s180 + $0xf0] sm:%s173]
                %243 = vst [vmem:[%s181 + $0x78] sm:%s173] %v242
                %v244 = vld [vmem:[%s180 + $0xf8] sm:%s173]
                %245 = vst [vmem:[%s181 + $0x7c] sm:%s173] %v244
                %v246 = vld [vmem:[%s180 + $0x100] sm:%s173]
                %247 = vst [vmem:[%s181 + $0x80] sm:%s173] %v246
                %v248 = vld [vmem:[%s180 + $0x108] sm:%s173]
                %249 = vst [vmem:[%s181 + $0x84] sm:%s173] %v248
                %v250 = vld [vmem:[%s180 + $0x110] sm:%s173]
                %251 = vst [vmem:[%s181 + $0x88] sm:%s173] %v250
                %v252 = vld [vmem:[%s180 + $0x118] sm:%s173]
                %253 = vst [vmem:[%s181 + $0x8c] sm:%s173] %v252
              $region41: #{conv3x3_bn_relu.1} parent=35 // loop_footer
                %s179 = sadd.s32 1, %s175
              $region42: #{conv3x3_bn_relu.1} parent=35 // loop_footer_branch
                %174 = sbr.rel target = $region38
              $region43: #{conv3x3_bn_relu.1} parent=35 // loop_exit
                _
            $region36: #{conv3x3_bn_relu.1} parent=27 // pred_fallthru
              _
          $region28: #{conv3x3_bn_relu.1} parent=23 // pred_fallthru
            _
          %346 = vnop
        $region24: #{conv3x3_bn_relu.1} parent=19 // pred_fallthru
          _
        // Predicated region
        $region62: #{conv3x3_bn_relu.1} parent=19 // pred_check
          %p347 = pneg %p96
        $region63: #{conv3x3_bn_relu.1} parent=19 // pred_check_branch
          %349 = sbr.rel (%p347) target = $region65
        $region64: #{conv3x3_bn_relu.1} parent=19 // pred_region
          %p350 = scmp.lt.s32.totalorder %s20, 1
          %s351 = scalar_select %p350, %s20, 1
          %s352 = scalar_lea.vmem %s2, %s351
        $region65: #{conv3x3_bn_relu.1} parent=19 // pred_fallthru
          _
      $region20: #{conv3x3_bn_relu.1} parent=5 // pred_fallthru
        _
      %p353 = scmp.le.s32.totalorder 1, %s12
      %p354 = scmp.lt.s32.totalorder %s12, 3
      %p355 = pnand %p353, %p354
      %p356 = pneg %p355
      // Predicated region
      $region66: #{conv3x3_bn_relu.1} parent=5 // pred_check
        _
      $region67: #{conv3x3_bn_relu.1} parent=5 // pred_check_branch
        %358 = sbr.rel (%p355) target = $region69
      $region68: #{conv3x3_bn_relu.1} parent=5 // pred_region
        %s359 = ssub.s32 %s12, 1
        %s360 = sand.u32 %s63, 1
        %s361 = sand.u32 %s63, 1
        %s362 = smul.addr %s361, 144
        %s363 = scalar_lea.vmem [#allocation4], %s362
        // Predicated region
        $region70: #{conv3x3_bn_relu.1} parent=68 // pred_check
          %p364 = pneg %p76
        $region71: #{conv3x3_bn_relu.1} parent=68 // pred_check_branch
          %366 = sbr.rel (%p364) target = $region73
        $region72: #{conv3x3_bn_relu.1} parent=68 // pred_region
          _
        $region73: #{conv3x3_bn_relu.1} parent=68 // pred_fallthru
          _
        %p367 = scmp.lt.s32.totalorder %s21, 0
        %s368 = scalar_select %p367, %s21, 0
        %s369 = smul.addr %s368, 24
        %s370 = smul.addr %s369, 4
        %s371 = scalar_lea.vmem %s0, %s370
        %p372 = pneg %p50
        %p373 = pneg %p47
        %s374 = sand.u32 %s63, 1
        %s375 = sand.u32 %s63, 1
        %s376 = smul.addr %s375, 144
        %s377 = scalar_lea.vmem [#allocation4], %s376
        %p378 = pneg %p76
        %p379 = pneg %p73
        %p380 = scmp.lt.s32.totalorder %s22, 1
        %s381 = scalar_select %p380, %s22, 1
        %s382 = scalar_lea.vmem %s2, %s381
        %p383 = pneg %p102
        %p384 = pneg %p99
        %p385 = pneg %p130
        %p386 = pneg %p127
        %s387 = sand.u32 %s117, 1
        %s388 = scalar_lea.sflag [#allocation6], %s387
        %s389 = sand.u32 %s117, 1
        %s390 = smul.addr %s389, 96
        %s391 = scalar_lea.vmem [#allocation5], %s390
        %p392 = scmp.lt.s32.totalorder %s21, 0
        %s393 = scalar_select %p392, %s21, 0
        %s394 = smul.addr %s393, 24
        %s395 = smul.addr %s394, 4
        %s396 = scalar_lea.vmem %s0, %s395
        %p397 = scmp.lt.s32.totalorder %s22, 1
        %s398 = scalar_select %p397, %s22, 1
        %s399 = scalar_lea.vmem %s2, %s398
        %p401 = scmp.eq.s32.totalorder %s22, 0
        // Predicated region
        $region74: #{conv3x3_bn_relu.1} parent=68 // pred_check
          %p402 = pneg %p401
        $region75: #{conv3x3_bn_relu.1} parent=68 // pred_check_branch
          %404 = sbr.rel (%p402) target = $region77
        $region76: #{conv3x3_bn_relu.1} parent=68 // pred_region
          %v405 = vld [vmem:[%s396] sm:$0xf]
          %v406 = vld [vmem:[%s396 + $0x4] sm:$0xf]
          %v407 = vld [vmem:[%s396 + $0x8] sm:$0xf]
          %v408 = vld [vmem:[%s396 + $0xc] sm:$0xf]
          %v409 = vld [vmem:[%s396 + $0x10] sm:$0xf]
          %v410 = vld [vmem:[%s396 + $0x14] sm:$0xf]
          %v411 = vld [vmem:[%s396 + $0x18] sm:$0xf]
          %v412 = vld [vmem:[%s396 + $0x1c] sm:$0xf]
          %v413 = vld [vmem:[%s396 + $0x20] sm:$0xf]
          %v414 = vld [vmem:[%s396 + $0x24] sm:$0xf]
          %v415 = vld [vmem:[%s396 + $0x28] sm:$0xf]
          %v416 = vld [vmem:[%s396 + $0x2c] sm:$0xf]
          %v417 = vld [vmem:[%s396 + $0x30] sm:$0xf]
          %v418 = vld [vmem:[%s396 + $0x34] sm:$0xf]
          %v419 = vld [vmem:[%s396 + $0x38] sm:$0xf]
          %v420 = vld [vmem:[%s396 + $0x3c] sm:$0xf]
          %v421 = vld [vmem:[%s396 + $0x40] sm:$0xf]
          %v422 = vld [vmem:[%s396 + $0x44] sm:$0xf]
          %v423 = vld [vmem:[%s396 + $0x48] sm:$0xf]
          %v424 = vld [vmem:[%s396 + $0x4c] sm:$0xf]
          %v425 = vld [vmem:[%s396 + $0x50] sm:$0xf]
          %v426 = vld [vmem:[%s396 + $0x54] sm:$0xf]
          %v427 = vld [vmem:[%s396 + $0x58] sm:$0xf]
          %v428 = vld [vmem:[%s396 + $0x5c] sm:$0xf]
          %453 = vrot.lane.b32.xlu0 %v405, 96
          %v454 = vpop.permute.xlu0 %453
          %455 = vrot.lane.b32.xlu0 %v406, 96
          %v456 = vpop.permute.xlu0 %455
          %457 = vrot.lane.b32.xlu0 %v407, 96
          %v458 = vpop.permute.xlu0 %457
          %459 = vrot.lane.b32.xlu0 %v408, 96
          %v460 = vpop.permute.xlu0 %459
          %461 = vrot.lane.b32.xlu0 %v409, 96
          %v462 = vpop.permute.xlu0 %461
          %463 = vrot.lane.b32.xlu0 %v410, 96
          %v464 = vpop.permute.xlu0 %463
          %465 = vrot.lane.b32.xlu0 %v411, 96
          %v466 = vpop.permute.xlu0 %465
          %467 = vrot.lane.b32.xlu0 %v412, 96
          %v468 = vpop.permute.xlu0 %467
          %469 = vrot.lane.b32.xlu0 %v413, 96
          %v470 = vpop.permute.xlu0 %469
          %471 = vrot.lane.b32.xlu0 %v414, 96
          %v472 = vpop.permute.xlu0 %471
          %473 = vrot.lane.b32.xlu0 %v415, 96
          %v474 = vpop.permute.xlu0 %473
          %475 = vrot.lane.b32.xlu0 %v416, 96
          %v476 = vpop.permute.xlu0 %475
          %477 = vrot.lane.b32.xlu0 %v417, 96
          %v478 = vpop.permute.xlu0 %477
          %479 = vrot.lane.b32.xlu0 %v418, 96
          %v480 = vpop.permute.xlu0 %479
          %481 = vrot.lane.b32.xlu0 %v419, 96
          %v482 = vpop.permute.xlu0 %481
          %483 = vrot.lane.b32.xlu0 %v420, 96
          %v484 = vpop.permute.xlu0 %483
          %485 = vrot.lane.b32.xlu0 %v421, 96
          %v486 = vpop.permute.xlu0 %485
          %487 = vrot.lane.b32.xlu0 %v422, 96
          %v488 = vpop.permute.xlu0 %487
          %489 = vrot.lane.b32.xlu0 %v423, 96
          %v490 = vpop.permute.xlu0 %489
          %491 = vrot.lane.b32.xlu0 %v424, 96
          %v492 = vpop.permute.xlu0 %491
          %493 = vrot.lane.b32.xlu0 %v425, 96
          %v494 = vpop.permute.xlu0 %493
          %495 = vrot.lane.b32.xlu0 %v426, 96
          %v496 = vpop.permute.xlu0 %495
          %497 = vrot.lane.b32.xlu0 %v427, 96
          %v498 = vpop.permute.xlu0 %497
          %499 = vrot.lane.b32.xlu0 %v428, 96
          %v500 = vpop.permute.xlu0 %499
          %v525 = vmax.bf16 %v405, %v454
          %v526 = vmax.bf16 %v406, %v456
          %v527 = vmax.bf16 %v407, %v458
          %v528 = vmax.bf16 %v408, %v460
          %v529 = vmax.bf16 %v409, %v462
          %v530 = vmax.bf16 %v410, %v464
          %v531 = vmax.bf16 %v411, %v466
          %v532 = vmax.bf16 %v412, %v468
          %v533 = vmax.bf16 %v413, %v470
          %v534 = vmax.bf16 %v414, %v472
          %v535 = vmax.bf16 %v415, %v474
          %v536 = vmax.bf16 %v416, %v476
          %v537 = vmax.bf16 %v417, %v478
          %v538 = vmax.bf16 %v418, %v480
          %v539 = vmax.bf16 %v419, %v482
          %v540 = vmax.bf16 %v420, %v484
          %v541 = vmax.bf16 %v421, %v486
          %v542 = vmax.bf16 %v422, %v488
          %v543 = vmax.bf16 %v423, %v490
          %v544 = vmax.bf16 %v424, %v492
          %v545 = vmax.bf16 %v425, %v494
          %v546 = vmax.bf16 %v426, %v496
          %v547 = vmax.bf16 %v427, %v498
          %v548 = vmax.bf16 %v428, %v500
          %v549 = vmax.bf16 %v525, %v526
          %v550 = vmax.bf16 %v527, %v528
          %v551 = vmax.bf16 %v529, %v530
          %v552 = vmax.bf16 %v531, %v532
          %v553 = vmax.bf16 %v533, %v534
          %v554 = vmax.bf16 %v535, %v536
          %v555 = vmax.bf16 %v537, %v538
          %v556 = vmax.bf16 %v539, %v540
          %v557 = vmax.bf16 %v541, %v542
          %v558 = vmax.bf16 %v543, %v544
          %v559 = vmax.bf16 %v545, %v546
          %v560 = vmax.bf16 %v547, %v548
          %vm561 = vcmask 257024
          %562 = vst.msk [vmem:[#allocation2] sm:$0xf] %vm561, 0
          %vm563 = vcmask 253952
          %564 = vst.msk [vmem:[#allocation2 + $0x4] sm:$0x1] %vm563, 0
          %s565 = scalar_lea.vmem [#allocation2], 104
          %566 = vst.msk [vmem:[%s565] sm:$0xf] %vm561, 0
          %567 = vst.msk [vmem:[%s565 + $0x4] sm:$0x1] %vm563, 0
          %s568 = scalar_lea.vmem [#allocation2], 8
          %vm569 = vcmask 253952
          %vm570 = vsmask.f32 256
          %vm571 = vmand %vm569, %vm570
          %v572 = vld [vmem:[%s568] sm:$0x1]
          %v573 = vsel %vm571, 0, %v572
          %574 = vst [vmem:[%s568] sm:$0x1] %v573
          %v575 = vld [vmem:[%s568 + $0x8] sm:$0x1]
          %v576 = vsel %vm571, 0, %v575
          %577 = vst [vmem:[%s568 + $0x8] sm:$0x1] %v576
          %v578 = vld [vmem:[%s568 + $0x10] sm:$0x1]
          %v579 = vsel %vm571, 0, %v578
          %580 = vst [vmem:[%s568 + $0x10] sm:$0x1] %v579
          %v581 = vld [vmem:[%s568 + $0x18] sm:$0x1]
          %v582 = vsel %vm571, 0, %v581
          %583 = vst [vmem:[%s568 + $0x18] sm:$0x1] %v582
          %v584 = vld [vmem:[%s568 + $0x20] sm:$0x1]
          %v585 = vsel %vm571, 0, %v584
          %586 = vst [vmem:[%s568 + $0x20] sm:$0x1] %v585
          %v587 = vld [vmem:[%s568 + $0x28] sm:$0x1]
          %v588 = vsel %vm571, 0, %v587
          %589 = vst [vmem:[%s568 + $0x28] sm:$0x1] %v588
          %v590 = vld [vmem:[%s568 + $0x30] sm:$0x1]
          %v591 = vsel %vm571, 0, %v590
          %592 = vst [vmem:[%s568 + $0x30] sm:$0x1] %v591
          %v593 = vld [vmem:[%s568 + $0x38] sm:$0x1]
          %v594 = vsel %vm571, 0, %v593
          %595 = vst [vmem:[%s568 + $0x38] sm:$0x1] %v594
          %v596 = vld [vmem:[%s568 + $0x40] sm:$0x1]
          %v597 = vsel %vm571, 0, %v596
          %598 = vst [vmem:[%s568 + $0x40] sm:$0x1] %v597
          %v599 = vld [vmem:[%s568 + $0x48] sm:$0x1]
          %v600 = vsel %vm571, 0, %v599
          %601 = vst [vmem:[%s568 + $0x48] sm:$0x1] %v600
          %v602 = vld [vmem:[%s568 + $0x50] sm:$0x1]
          %v603 = vsel %vm571, 0, %v602
          %604 = vst [vmem:[%s568 + $0x50] sm:$0x1] %v603
          %v605 = vld [vmem:[%s568 + $0x58] sm:$0x1]
          %v606 = vsel %vm571, 0, %v605
          %607 = vst [vmem:[%s568 + $0x58] sm:$0x1] %v606
          %vm608 = vsmask.f32 7938
          %vm609 = vmand %vm569, %vm608
          %v610 = vld [vmem:[%s568 + $0x4] sm:$0x1]
          %v611 = vsel %vm609, 0, %v610
          %612 = vst [vmem:[%s568 + $0x4] sm:$0x1] %v611
          %v613 = vld [vmem:[%s568 + $0xc] sm:$0x1]
          %v614 = vsel %vm609, 0, %v613
          %615 = vst [vmem:[%s568 + $0xc] sm:$0x1] %v614
          %v616 = vld [vmem:[%s568 + $0x14] sm:$0x1]
          %v617 = vsel %vm609, 0, %v616
          %618 = vst [vmem:[%s568 + $0x14] sm:$0x1] %v617
          %v619 = vld [vmem:[%s568 + $0x1c] sm:$0x1]
          %v620 = vsel %vm609, 0, %v619
          %621 = vst [vmem:[%s568 + $0x1c] sm:$0x1] %v620
          %v622 = vld [vmem:[%s568 + $0x24] sm:$0x1]
          %v623 = vsel %vm609, 0, %v622
          %624 = vst [vmem:[%s568 + $0x24] sm:$0x1] %v623
          %v625 = vld [vmem:[%s568 + $0x2c] sm:$0x1]
          %v626 = vsel %vm609, 0, %v625
          %627 = vst [vmem:[%s568 + $0x2c] sm:$0x1] %v626
          %v628 = vld [vmem:[%s568 + $0x34] sm:$0x1]
          %v629 = vsel %vm609, 0, %v628
          %630 = vst [vmem:[%s568 + $0x34] sm:$0x1] %v629
          %v631 = vld [vmem:[%s568 + $0x3c] sm:$0x1]
          %v632 = vsel %vm609, 0, %v631
          %633 = vst [vmem:[%s568 + $0x3c] sm:$0x1] %v632
          %v634 = vld [vmem:[%s568 + $0x44] sm:$0x1]
          %v635 = vsel %vm609, 0, %v634
          %636 = vst [vmem:[%s568 + $0x44] sm:$0x1] %v635
          %v637 = vld [vmem:[%s568 + $0x4c] sm:$0x1]
          %v638 = vsel %vm609, 0, %v637
          %639 = vst [vmem:[%s568 + $0x4c] sm:$0x1] %v638
          %v640 = vld [vmem:[%s568 + $0x54] sm:$0x1]
          %v641 = vsel %vm609, 0, %v640
          %642 = vst [vmem:[%s568 + $0x54] sm:$0x1] %v641
          %v643 = vld [vmem:[%s568 + $0x5c] sm:$0x1]
          %v644 = vsel %vm609, 0, %v643
          %645 = vst [vmem:[%s568 + $0x5c] sm:$0x1] %v644
          %v647 = vshrl.u32 %v549, 16
          %v649 = vrot.slane %v647, 7
          %v650 = vshll.u32 %v549, 16
          %v652 = vor.u32 %v649, %v650
          %v653 = vrot.slane %v649, 4
          %v655 = vshrl.u32 %v550, 16
          %v657 = vrot.slane %v655, 7
          %v658 = vshll.u32 %v550, 16
          %v660 = vor.u32 %v657, %v658
          %v661 = vrot.slane %v657, 4
          %v663 = vshrl.u32 %v551, 16
          %v665 = vrot.slane %v663, 7
          %v666 = vshll.u32 %v551, 16
          %v668 = vor.u32 %v665, %v666
          %v669 = vrot.slane %v665, 4
          %v671 = vshrl.u32 %v552, 16
          %v673 = vrot.slane %v671, 7
          %v674 = vshll.u32 %v552, 16
          %v676 = vor.u32 %v673, %v674
          %v677 = vrot.slane %v673, 4
          %v679 = vshrl.u32 %v553, 16
          %v681 = vrot.slane %v679, 7
          %v682 = vshll.u32 %v553, 16
          %v684 = vor.u32 %v681, %v682
          %v685 = vrot.slane %v681, 4
          %v687 = vshrl.u32 %v554, 16
          %v689 = vrot.slane %v687, 7
          %v690 = vshll.u32 %v554, 16
          %v692 = vor.u32 %v689, %v690
          %v693 = vrot.slane %v689, 4
          %v695 = vshrl.u32 %v555, 16
          %v697 = vrot.slane %v695, 7
          %v698 = vshll.u32 %v555, 16
          %v700 = vor.u32 %v697, %v698
          %v701 = vrot.slane %v697, 4
          %v703 = vshrl.u32 %v556, 16
          %v705 = vrot.slane %v703, 7
          %v706 = vshll.u32 %v556, 16
          %v708 = vor.u32 %v705, %v706
          %v709 = vrot.slane %v705, 4
          %v711 = vshrl.u32 %v557, 16
          %v713 = vrot.slane %v711, 7
          %v714 = vshll.u32 %v557, 16
          %v716 = vor.u32 %v713, %v714
          %v717 = vrot.slane %v713, 4
          %v719 = vshrl.u32 %v558, 16
          %v721 = vrot.slane %v719, 7
          %v722 = vshll.u32 %v558, 16
          %v724 = vor.u32 %v721, %v722
          %v725 = vrot.slane %v721, 4
          %v727 = vshrl.u32 %v559, 16
          %v729 = vrot.slane %v727, 7
          %v730 = vshll.u32 %v559, 16
          %v732 = vor.u32 %v729, %v730
          %v733 = vrot.slane %v729, 4
          %v735 = vshrl.u32 %v560, 16
          %v737 = vrot.slane %v735, 7
          %v738 = vshll.u32 %v560, 16
          %v740 = vor.u32 %v737, %v738
          %v741 = vrot.slane %v737, 4
          %vm766 = vcmask 257024
          %vm767 = vmand %vm766, %vm608
          %v768 = vld [vmem:[%s568] sm:$0xf]
          %v769 = vsel %vm767, %v652, %v768
          %770 = vst [vmem:[%s568] sm:$0xf] %v769
          %v771 = vld [vmem:[%s568 + $0x4] sm:$0x1]
          %v772 = vsel %vm571, %v653, %v771
          %773 = vst [vmem:[%s568 + $0x4] sm:$0x1] %v772
          %v774 = vld [vmem:[%s568 + $0x8] sm:$0xf]
          %v775 = vsel %vm767, %v660, %v774
          %776 = vst [vmem:[%s568 + $0x8] sm:$0xf] %v775
          %v777 = vld [vmem:[%s568 + $0xc] sm:$0x1]
          %v778 = vsel %vm571, %v661, %v777
          %779 = vst [vmem:[%s568 + $0xc] sm:$0x1] %v778
          %v780 = vld [vmem:[%s568 + $0x10] sm:$0xf]
          %v781 = vsel %vm767, %v668, %v780
          %782 = vst [vmem:[%s568 + $0x10] sm:$0xf] %v781
          %v783 = vld [vmem:[%s568 + $0x14] sm:$0x1]
          %v784 = vsel %vm571, %v669, %v783
          %785 = vst [vmem:[%s568 + $0x14] sm:$0x1] %v784
          %v786 = vld [vmem:[%s568 + $0x18] sm:$0xf]
          %v787 = vsel %vm767, %v676, %v786
          %788 = vst [vmem:[%s568 + $0x18] sm:$0xf] %v787
          %v789 = vld [vmem:[%s568 + $0x1c] sm:$0x1]
          %v790 = vsel %vm571, %v677, %v789
          %791 = vst [vmem:[%s568 + $0x1c] sm:$0x1] %v790
          %v792 = vld [vmem:[%s568 + $0x20] sm:$0xf]
          %v793 = vsel %vm767, %v684, %v792
          %794 = vst [vmem:[%s568 + $0x20] sm:$0xf] %v793
          %v795 = vld [vmem:[%s568 + $0x24] sm:$0x1]
          %v796 = vsel %vm571, %v685, %v795
          %797 = vst [vmem:[%s568 + $0x24] sm:$0x1] %v796
          %v798 = vld [vmem:[%s568 + $0x28] sm:$0xf]
          %v799 = vsel %vm767, %v692, %v798
          %800 = vst [vmem:[%s568 + $0x28] sm:$0xf] %v799
          %v801 = vld [vmem:[%s568 + $0x2c] sm:$0x1]
          %v802 = vsel %vm571, %v693, %v801
          %803 = vst [vmem:[%s568 + $0x2c] sm:$0x1] %v802
          %v804 = vld [vmem:[%s568 + $0x30] sm:$0xf]
          %v805 = vsel %vm767, %v700, %v804
          %806 = vst [vmem:[%s568 + $0x30] sm:$0xf] %v805
          %v807 = vld [vmem:[%s568 + $0x34] sm:$0x1]
          %v808 = vsel %vm571, %v701, %v807
          %809 = vst [vmem:[%s568 + $0x34] sm:$0x1] %v808
          %v810 = vld [vmem:[%s568 + $0x38] sm:$0xf]
          %v811 = vsel %vm767, %v708, %v810
          %812 = vst [vmem:[%s568 + $0x38] sm:$0xf] %v811
          %v813 = vld [vmem:[%s568 + $0x3c] sm:$0x1]
          %v814 = vsel %vm571, %v709, %v813
          %815 = vst [vmem:[%s568 + $0x3c] sm:$0x1] %v814
          %v816 = vld [vmem:[%s568 + $0x40] sm:$0xf]
          %v817 = vsel %vm767, %v716, %v816
          %818 = vst [vmem:[%s568 + $0x40] sm:$0xf] %v817
          %v819 = vld [vmem:[%s568 + $0x44] sm:$0x1]
          %v820 = vsel %vm571, %v717, %v819
          %821 = vst [vmem:[%s568 + $0x44] sm:$0x1] %v820
          %v822 = vld [vmem:[%s568 + $0x48] sm:$0xf]
          %v823 = vsel %vm767, %v724, %v822
          %824 = vst [vmem:[%s568 + $0x48] sm:$0xf] %v823
          %v825 = vld [vmem:[%s568 + $0x4c] sm:$0x1]
          %v826 = vsel %vm571, %v725, %v825
          %827 = vst [vmem:[%s568 + $0x4c] sm:$0x1] %v826
          %v828 = vld [vmem:[%s568 + $0x50] sm:$0xf]
          %v829 = vsel %vm767, %v732, %v828
          %830 = vst [vmem:[%s568 + $0x50] sm:$0xf] %v829
          %v831 = vld [vmem:[%s568 + $0x54] sm:$0x1]
          %v832 = vsel %vm571, %v733, %v831
          %833 = vst [vmem:[%s568 + $0x54] sm:$0x1] %v832
          %v834 = vld [vmem:[%s568 + $0x58] sm:$0xf]
          %v835 = vsel %vm767, %v740, %v834
          %836 = vst [vmem:[%s568 + $0x58] sm:$0xf] %v835
          %v837 = vld [vmem:[%s568 + $0x5c] sm:$0x1]
          %v838 = vsel %vm571, %v741, %v837
          %839 = vst [vmem:[%s568 + $0x5c] sm:$0x1] %v838
          %v840 = vld [vmem:[#allocation2] sm:$0xf]
          %v841 = vld [vmem:[#allocation2 + $0x4] sm:$0x1]
          %v842 = vld [vmem:[#allocation2 + $0x8] sm:$0xf]
          %v843 = vld [vmem:[#allocation2 + $0xc] sm:$0x1]
          %v844 = vld [vmem:[#allocation2 + $0x10] sm:$0xf]
          %v845 = vld [vmem:[#allocation2 + $0x14] sm:$0x1]
          %v846 = vld [vmem:[#allocation2 + $0x18] sm:$0xf]
          %v847 = vld [vmem:[#allocation2 + $0x1c] sm:$0x1]
          %v848 = vld [vmem:[#allocation2 + $0x20] sm:$0xf]
          %v849 = vld [vmem:[#allocation2 + $0x24] sm:$0x1]
          %v850 = vld [vmem:[#allocation2 + $0x28] sm:$0xf]
          %v851 = vld [vmem:[#allocation2 + $0x2c] sm:$0x1]
          %v852 = vld [vmem:[#allocation2 + $0x30] sm:$0xf]
          %v853 = vld [vmem:[#allocation2 + $0x34] sm:$0x1]
          %v854 = vld [vmem:[#allocation2 + $0x38] sm:$0xf]
          %v855 = vld [vmem:[#allocation2 + $0x3c] sm:$0x1]
          %v856 = vld [vmem:[#allocation2 + $0x40] sm:$0xf]
          %v857 = vld [vmem:[#allocation2 + $0x44] sm:$0x1]
          %v858 = vld [vmem:[#allocation2 + $0x48] sm:$0xf]
          %v859 = vld [vmem:[#allocation2 + $0x4c] sm:$0x1]
          %v860 = vld [vmem:[#allocation2 + $0x50] sm:$0xf]
          %v861 = vld [vmem:[#allocation2 + $0x54] sm:$0x1]
          %v862 = vld [vmem:[#allocation2 + $0x58] sm:$0xf]
          %v863 = vld [vmem:[#allocation2 + $0x5c] sm:$0x1]
          %v864 = vld [vmem:[#allocation2 + $0x60] sm:$0xf]
          %v865 = vld [vmem:[#allocation2 + $0x64] sm:$0x1]
          %v866 = vld [vmem:[#allocation2 + $0x68] sm:$0xf]
          %v867 = vld [vmem:[#allocation2 + $0x6c] sm:$0x1]
          %868 = vst.msk [vmem:[#allocation3] sm:$0xf] %vm561, %v840
          %869 = vst.msk [vmem:[#allocation3 + $0x4] sm:$0xf] %vm561, %v842
          %870 = vst.msk [vmem:[#allocation3 + $0x8] sm:$0xf] %vm561, %v844
          %871 = vst.msk [vmem:[#allocation3 + $0xc] sm:$0xf] %vm561, %v846
          %872 = vst.msk [vmem:[#allocation3 + $0x10] sm:$0xf] %vm561, %v848
          %873 = vst.msk [vmem:[#allocation3 + $0x14] sm:$0xf] %vm561, %v850
          %874 = vst.msk [vmem:[#allocation3 + $0x18] sm:$0xf] %vm561, %v852
          %875 = vst.msk [vmem:[#allocation3 + $0x1c] sm:$0xf] %vm561, %v854
          %876 = vst.msk [vmem:[#allocation3 + $0x20] sm:$0xf] %vm561, %v856
          %877 = vst.msk [vmem:[#allocation3 + $0x24] sm:$0xf] %vm561, %v858
          %878 = vst.msk [vmem:[#allocation3 + $0x28] sm:$0xf] %vm561, %v860
          %879 = vst.msk [vmem:[#allocation3 + $0x2c] sm:$0xf] %vm561, %v862
          %vm880 = vsmask.f32 3328
          %vm881 = vsmask.f32 7440
          %vm882 = vmor %vm880, %vm881
          %v884 = vshrl.u32 %v840, 16
          %v886 = vrot.slane %v884, 4
          %v887 = vshll.u32 %v840, 16
          %v889 = vrot.slane %v887, 5
          %v890 = vor.u32 %v886, %v889
          %v891 = vrot.slane %v890, 4
          %v893 = vshll.u32 %v841, 16
          %v895 = vrot.slane %v893, 5
          %v896 = vsel %vm882, %v891, %v895
          %v898 = vshrl.u32 %v842, 16
          %v900 = vrot.slane %v898, 4
          %v901 = vshll.u32 %v842, 16
          %v903 = vrot.slane %v901, 5
          %v904 = vor.u32 %v900, %v903
          %v905 = vrot.slane %v904, 4
          %v907 = vshll.u32 %v843, 16
          %v909 = vrot.slane %v907, 5
          %v910 = vsel %vm882, %v905, %v909
          %v912 = vshrl.u32 %v844, 16
          %v914 = vrot.slane %v912, 4
          %v915 = vshll.u32 %v844, 16
          %v917 = vrot.slane %v915, 5
          %v918 = vor.u32 %v914, %v917
          %v919 = vrot.slane %v918, 4
          %v921 = vshll.u32 %v845, 16
          %v923 = vrot.slane %v921, 5
          %v924 = vsel %vm882, %v919, %v923
          %v926 = vshrl.u32 %v846, 16
          %v928 = vrot.slane %v926, 4
          %v929 = vshll.u32 %v846, 16
          %v931 = vrot.slane %v929, 5
          %v932 = vor.u32 %v928, %v931
          %v933 = vrot.slane %v932, 4
          %v935 = vshll.u32 %v847, 16
          %v937 = vrot.slane %v935, 5
          %v938 = vsel %vm882, %v933, %v937
          %v940 = vshrl.u32 %v848, 16
          %v942 = vrot.slane %v940, 4
          %v943 = vshll.u32 %v848, 16
          %v945 = vrot.slane %v943, 5
          %v946 = vor.u32 %v942, %v945
          %v947 = vrot.slane %v946, 4
          %v949 = vshll.u32 %v849, 16
          %v951 = vrot.slane %v949, 5
          %v952 = vsel %vm882, %v947, %v951
          %v954 = vshrl.u32 %v850, 16
          %v956 = vrot.slane %v954, 4
          %v957 = vshll.u32 %v850, 16
          %v959 = vrot.slane %v957, 5
          %v960 = vor.u32 %v956, %v959
          %v961 = vrot.slane %v960, 4
          %v963 = vshll.u32 %v851, 16
          %v965 = vrot.slane %v963, 5
          %v966 = vsel %vm882, %v961, %v965
          %v968 = vshrl.u32 %v852, 16
          %v970 = vrot.slane %v968, 4
          %v971 = vshll.u32 %v852, 16
          %v973 = vrot.slane %v971, 5
          %v974 = vor.u32 %v970, %v973
          %v975 = vrot.slane %v974, 4
          %v977 = vshll.u32 %v853, 16
          %v979 = vrot.slane %v977, 5
          %v980 = vsel %vm882, %v975, %v979
          %v982 = vshrl.u32 %v854, 16
          %v984 = vrot.slane %v982, 4
          %v985 = vshll.u32 %v854, 16
          %v987 = vrot.slane %v985, 5
          %v988 = vor.u32 %v984, %v987
          %v989 = vrot.slane %v988, 4
          %v991 = vshll.u32 %v855, 16
          %v993 = vrot.slane %v991, 5
          %v994 = vsel %vm882, %v989, %v993
          %v996 = vshrl.u32 %v856, 16
          %v998 = vrot.slane %v996, 4
          %v999 = vshll.u32 %v856, 16
          %v1001 = vrot.slane %v999, 5
          %v1002 = vor.u32 %v998, %v1001
          %v1003 = vrot.slane %v1002, 4
          %v1005 = vshll.u32 %v857, 16
          %v1007 = vrot.slane %v1005, 5
          %v1008 = vsel %vm882, %v1003, %v1007
          %v1010 = vshrl.u32 %v858, 16
          %v1012 = vrot.slane %v1010, 4
          %v1013 = vshll.u32 %v858, 16
          %v1015 = vrot.slane %v1013, 5
          %v1016 = vor.u32 %v1012, %v1015
          %v1017 = vrot.slane %v1016, 4
          %v1019 = vshll.u32 %v859, 16
          %v1021 = vrot.slane %v1019, 5
          %v1022 = vsel %vm882, %v1017, %v1021
          %v1024 = vshrl.u32 %v860, 16
          %v1026 = vrot.slane %v1024, 4
          %v1027 = vshll.u32 %v860, 16
          %v1029 = vrot.slane %v1027, 5
          %v1030 = vor.u32 %v1026, %v1029
          %v1031 = vrot.slane %v1030, 4
          %v1033 = vshll.u32 %v861, 16
          %v1035 = vrot.slane %v1033, 5
          %v1036 = vsel %vm882, %v1031, %v1035
          %v1038 = vshrl.u32 %v862, 16
          %v1040 = vrot.slane %v1038, 4
          %v1041 = vshll.u32 %v862, 16
          %v1043 = vrot.slane %v1041, 5
          %v1044 = vor.u32 %v1040, %v1043
          %v1045 = vrot.slane %v1044, 4
          %v1047 = vshll.u32 %v863, 16
          %v1049 = vrot.slane %v1047, 5
          %v1050 = vsel %vm882, %v1045, %v1049
          %s1063 = scalar_lea.vmem [#allocation3], 48
          %1064 = vst.msk [vmem:[%s1063] sm:$0xf] %vm561, %v896
          %1065 = vst.msk [vmem:[%s1063 + $0x4] sm:$0xf] %vm561, %v910
          %1066 = vst.msk [vmem:[%s1063 + $0x8] sm:$0xf] %vm561, %v924
          %1067 = vst.msk [vmem:[%s1063 + $0xc] sm:$0xf] %vm561, %v938
          %1068 = vst.msk [vmem:[%s1063 + $0x10] sm:$0xf] %vm561, %v952
          %1069 = vst.msk [vmem:[%s1063 + $0x14] sm:$0xf] %vm561, %v966
          %1070 = vst.msk [vmem:[%s1063 + $0x18] sm:$0xf] %vm561, %v980
          %1071 = vst.msk [vmem:[%s1063 + $0x1c] sm:$0xf] %vm561, %v994
          %1072 = vst.msk [vmem:[%s1063 + $0x20] sm:$0xf] %vm561, %v1008
          %1073 = vst.msk [vmem:[%s1063 + $0x24] sm:$0xf] %vm561, %v1022
          %1074 = vst.msk [vmem:[%s1063 + $0x28] sm:$0xf] %vm561, %v1036
          %1075 = vst.msk [vmem:[%s1063 + $0x2c] sm:$0xf] %vm561, %v1050
          %vm1100 = vcmask 1042432
          %vm1101 = vcmask 1046532
          %vm1102 = vmor %vm1100, %vm1101
          %v1103 = vrot.slane %v840, 5
          %v1104 = vrot.slane %v1103, 4
          %v1105 = vrot.slane %v841, 5
          %v1106 = vsel %vm1102, %v1104, %v1105
          %v1107 = vrot.slane %v842, 5
          %v1108 = vrot.slane %v1107, 4
          %v1109 = vrot.slane %v843, 5
          %v1110 = vsel %vm1102, %v1108, %v1109
          %v1111 = vrot.slane %v844, 5
          %v1112 = vrot.slane %v1111, 4
          %v1113 = vrot.slane %v845, 5
          %v1114 = vsel %vm1102, %v1112, %v1113
          %v1115 = vrot.slane %v846, 5
          %v1116 = vrot.slane %v1115, 4
          %v1117 = vrot.slane %v847, 5
          %v1118 = vsel %vm1102, %v1116, %v1117
          %v1119 = vrot.slane %v848, 5
          %v1120 = vrot.slane %v1119, 4
          %v1121 = vrot.slane %v849, 5
          %v1122 = vsel %vm1102, %v1120, %v1121
          %v1123 = vrot.slane %v850, 5
          %v1124 = vrot.slane %v1123, 4
          %v1125 = vrot.slane %v851, 5
          %v1126 = vsel %vm1102, %v1124, %v1125
          %v1127 = vrot.slane %v852, 5
          %v1128 = vrot.slane %v1127, 4
          %v1129 = vrot.slane %v853, 5
          %v1130 = vsel %vm1102, %v1128, %v1129
          %v1131 = vrot.slane %v854, 5
          %v1132 = vrot.slane %v1131, 4
          %v1133 = vrot.slane %v855, 5
          %v1134 = vsel %vm1102, %v1132, %v1133
          %v1135 = vrot.slane %v856, 5
          %v1136 = vrot.slane %v1135, 4
          %v1137 = vrot.slane %v857, 5
          %v1138 = vsel %vm1102, %v1136, %v1137
          %v1139 = vrot.slane %v858, 5
          %v1140 = vrot.slane %v1139, 4
          %v1141 = vrot.slane %v859, 5
          %v1142 = vsel %vm1102, %v1140, %v1141
          %v1143 = vrot.slane %v860, 5
          %v1144 = vrot.slane %v1143, 4
          %v1145 = vrot.slane %v861, 5
          %v1146 = vsel %vm1102, %v1144, %v1145
          %v1147 = vrot.slane %v862, 5
          %v1148 = vrot.slane %v1147, 4
          %v1149 = vrot.slane %v863, 5
          %v1150 = vsel %vm1102, %v1148, %v1149
          %s1163 = scalar_lea.vmem [#allocation3], 96
          %1164 = vst.msk [vmem:[%s1163] sm:$0xf] %vm561, %v1106
          %1165 = vst.msk [vmem:[%s1163 + $0x4] sm:$0xf] %vm561, %v1110
          %1166 = vst.msk [vmem:[%s1163 + $0x8] sm:$0xf] %vm561, %v1114
          %1167 = vst.msk [vmem:[%s1163 + $0xc] sm:$0xf] %vm561, %v1118
          %1168 = vst.msk [vmem:[%s1163 + $0x10] sm:$0xf] %vm561, %v1122
          %1169 = vst.msk [vmem:[%s1163 + $0x14] sm:$0xf] %vm561, %v1126
          %1170 = vst.msk [vmem:[%s1163 + $0x18] sm:$0xf] %vm561, %v1130
          %1171 = vst.msk [vmem:[%s1163 + $0x1c] sm:$0xf] %vm561, %v1134
          %1172 = vst.msk [vmem:[%s1163 + $0x20] sm:$0xf] %vm561, %v1138
          %1173 = vst.msk [vmem:[%s1163 + $0x24] sm:$0xf] %vm561, %v1142
          %1174 = vst.msk [vmem:[%s1163 + $0x28] sm:$0xf] %vm561, %v1146
          %1175 = vst.msk [vmem:[%s1163 + $0x2c] sm:$0xf] %vm561, %v1150
          %s1176 = scalar_lea.vmem [#allocation3], 144
          %1177 = vst.msk [vmem:[%s1176] sm:$0xf] %vm561, %v842
          %1178 = vst.msk [vmem:[%s1176 + $0x4] sm:$0xf] %vm561, %v844
          %1179 = vst.msk [vmem:[%s1176 + $0x8] sm:$0xf] %vm561, %v846
          %1180 = vst.msk [vmem:[%s1176 + $0xc] sm:$0xf] %vm561, %v848
          %1181 = vst.msk [vmem:[%s1176 + $0x10] sm:$0xf] %vm561, %v850
          %1182 = vst.msk [vmem:[%s1176 + $0x14] sm:$0xf] %vm561, %v852
          %1183 = vst.msk [vmem:[%s1176 + $0x18] sm:$0xf] %vm561, %v854
          %1184 = vst.msk [vmem:[%s1176 + $0x1c] sm:$0xf] %vm561, %v856
          %1185 = vst.msk [vmem:[%s1176 + $0x20] sm:$0xf] %vm561, %v858
          %1186 = vst.msk [vmem:[%s1176 + $0x24] sm:$0xf] %vm561, %v860
          %1187 = vst.msk [vmem:[%s1176 + $0x28] sm:$0xf] %vm561, %v862
          %1188 = vst.msk [vmem:[%s1176 + $0x2c] sm:$0xf] %vm561, %v864
          %v1190 = vshrl.u32 %v864, 16
          %v1192 = vrot.slane %v1190, 4
          %v1193 = vshll.u32 %v864, 16
          %v1195 = vrot.slane %v1193, 5
          %v1196 = vor.u32 %v1192, %v1195
          %v1197 = vrot.slane %v1196, 4
          %v1199 = vshll.u32 %v865, 16
          %v1201 = vrot.slane %v1199, 5
          %v1202 = vsel %vm882, %v1197, %v1201
          %s1204 = scalar_lea.vmem [#allocation3], 192
          %1205 = vst.msk [vmem:[%s1204] sm:$0xf] %vm561, %v910
          %1206 = vst.msk [vmem:[%s1204 + $0x4] sm:$0xf] %vm561, %v924
          %1207 = vst.msk [vmem:[%s1204 + $0x8] sm:$0xf] %vm561, %v938
          %1208 = vst.msk [vmem:[%s1204 + $0xc] sm:$0xf] %vm561, %v952
          %1209 = vst.msk [vmem:[%s1204 + $0x10] sm:$0xf] %vm561, %v966
          %1210 = vst.msk [vmem:[%s1204 + $0x14] sm:$0xf] %vm561, %v980
          %1211 = vst.msk [vmem:[%s1204 + $0x18] sm:$0xf] %vm561, %v994
          %1212 = vst.msk [vmem:[%s1204 + $0x1c] sm:$0xf] %vm561, %v1008
          %1213 = vst.msk [vmem:[%s1204 + $0x20] sm:$0xf] %vm561, %v1022
          %1214 = vst.msk [vmem:[%s1204 + $0x24] sm:$0xf] %vm561, %v1036
          %1215 = vst.msk [vmem:[%s1204 + $0x28] sm:$0xf] %vm561, %v1050
          %1216 = vst.msk [vmem:[%s1204 + $0x2c] sm:$0xf] %vm561, %v1202
          %v1219 = vrot.slane %v864, 5
          %v1220 = vrot.slane %v1219, 4
          %v1221 = vrot.slane %v865, 5
          %v1222 = vsel %vm1102, %v1220, %v1221
          %s1224 = scalar_lea.vmem [#allocation3], 240
          %1225 = vst.msk [vmem:[%s1224] sm:$0xf] %vm561, %v1110
          %1226 = vst.msk [vmem:[%s1224 + $0x4] sm:$0xf] %vm561, %v1114
          %1227 = vst.msk [vmem:[%s1224 + $0x8] sm:$0xf] %vm561, %v1118
          %1228 = vst.msk [vmem:[%s1224 + $0xc] sm:$0xf] %vm561, %v1122
          %1229 = vst.msk [vmem:[%s1224 + $0x10] sm:$0xf] %vm561, %v1126
          %1230 = vst.msk [vmem:[%s1224 + $0x14] sm:$0xf] %vm561, %v1130
          %1231 = vst.msk [vmem:[%s1224 + $0x18] sm:$0xf] %vm561, %v1134
          %1232 = vst.msk [vmem:[%s1224 + $0x1c] sm:$0xf] %vm561, %v1138
          %1233 = vst.msk [vmem:[%s1224 + $0x20] sm:$0xf] %vm561, %v1142
          %1234 = vst.msk [vmem:[%s1224 + $0x24] sm:$0xf] %vm561, %v1146
          %1235 = vst.msk [vmem:[%s1224 + $0x28] sm:$0xf] %vm561, %v1150
          %1236 = vst.msk [vmem:[%s1224 + $0x2c] sm:$0xf] %vm561, %v1222
          %s1237 = scalar_lea.vmem [#allocation3], 288
          %1238 = vst.msk [vmem:[%s1237] sm:$0xf] %vm561, %v844
          %1239 = vst.msk [vmem:[%s1237 + $0x4] sm:$0xf] %vm561, %v846
          %1240 = vst.msk [vmem:[%s1237 + $0x8] sm:$0xf] %vm561, %v848
          %1241 = vst.msk [vmem:[%s1237 + $0xc] sm:$0xf] %vm561, %v850
          %1242 = vst.msk [vmem:[%s1237 + $0x10] sm:$0xf] %vm561, %v852
          %1243 = vst.msk [vmem:[%s1237 + $0x14] sm:$0xf] %vm561, %v854
          %1244 = vst.msk [vmem:[%s1237 + $0x18] sm:$0xf] %vm561, %v856
          %1245 = vst.msk [vmem:[%s1237 + $0x1c] sm:$0xf] %vm561, %v858
          %1246 = vst.msk [vmem:[%s1237 + $0x20] sm:$0xf] %vm561, %v860
          %1247 = vst.msk [vmem:[%s1237 + $0x24] sm:$0xf] %vm561, %v862
          %1248 = vst.msk [vmem:[%s1237 + $0x28] sm:$0xf] %vm561, %v864
          %1249 = vst.msk [vmem:[%s1237 + $0x2c] sm:$0xf] %vm561, %v866
          %v1251 = vshrl.u32 %v866, 16
          %v1253 = vrot.slane %v1251, 4
          %v1254 = vshll.u32 %v866, 16
          %v1256 = vrot.slane %v1254, 5
          %v1257 = vor.u32 %v1253, %v1256
          %v1258 = vrot.slane %v1257, 4
          %v1260 = vshll.u32 %v867, 16
          %v1262 = vrot.slane %v1260, 5
          %v1263 = vsel %vm882, %v1258, %v1262
          %s1265 = scalar_lea.vmem [#allocation3], 336
          %1266 = vst.msk [vmem:[%s1265] sm:$0xf] %vm561, %v924
          %1267 = vst.msk [vmem:[%s1265 + $0x4] sm:$0xf] %vm561, %v938
          %1268 = vst.msk [vmem:[%s1265 + $0x8] sm:$0xf] %vm561, %v952
          %1269 = vst.msk [vmem:[%s1265 + $0xc] sm:$0xf] %vm561, %v966
          %1270 = vst.msk [vmem:[%s1265 + $0x10] sm:$0xf] %vm561, %v980
          %1271 = vst.msk [vmem:[%s1265 + $0x14] sm:$0xf] %vm561, %v994
          %1272 = vst.msk [vmem:[%s1265 + $0x18] sm:$0xf] %vm561, %v1008
          %1273 = vst.msk [vmem:[%s1265 + $0x1c] sm:$0xf] %vm561, %v1022
          %1274 = vst.msk [vmem:[%s1265 + $0x20] sm:$0xf] %vm561, %v1036
          %1275 = vst.msk [vmem:[%s1265 + $0x24] sm:$0xf] %vm561, %v1050
          %1276 = vst.msk [vmem:[%s1265 + $0x28] sm:$0xf] %vm561, %v1202
          %1277 = vst.msk [vmem:[%s1265 + $0x2c] sm:$0xf] %vm561, %v1263
          %v1280 = vrot.slane %v866, 5
          %v1281 = vrot.slane %v1280, 4
          %v1282 = vrot.slane %v867, 5
          %v1283 = vsel %vm1102, %v1281, %v1282
          %s1285 = scalar_lea.vmem [#allocation3], 384
          %1286 = vst.msk [vmem:[%s1285] sm:$0xf] %vm561, %v1114
          %1287 = vst.msk [vmem:[%s1285 + $0x4] sm:$0xf] %vm561, %v1118
          %1288 = vst.msk [vmem:[%s1285 + $0x8] sm:$0xf] %vm561, %v1122
          %1289 = vst.msk [vmem:[%s1285 + $0xc] sm:$0xf] %vm561, %v1126
          %1290 = vst.msk [vmem:[%s1285 + $0x10] sm:$0xf] %vm561, %v1130
          %1291 = vst.msk [vmem:[%s1285 + $0x14] sm:$0xf] %vm561, %v1134
          %1292 = vst.msk [vmem:[%s1285 + $0x18] sm:$0xf] %vm561, %v1138
          %1293 = vst.msk [vmem:[%s1285 + $0x1c] sm:$0xf] %vm561, %v1142
          %1294 = vst.msk [vmem:[%s1285 + $0x20] sm:$0xf] %vm561, %v1146
          %1295 = vst.msk [vmem:[%s1285 + $0x24] sm:$0xf] %vm561, %v1150
          %1296 = vst.msk [vmem:[%s1285 + $0x28] sm:$0xf] %vm561, %v1222
          %1297 = vst.msk [vmem:[%s1285 + $0x2c] sm:$0xf] %vm561, %v1283
        $region77: #{conv3x3_bn_relu.1} parent=68 // pred_fallthru
          _
        %v1298 = vld [vmem:[#allocation3] sm:$0xf]
        %v1299 = vld [vmem:[#allocation3 + $0x4] sm:$0xf]
        %v1300 = vld [vmem:[#allocation3 + $0x8] sm:$0xf]
        %v1301 = vld [vmem:[#allocation3 + $0xc] sm:$0xf]
        %v1302 = vld [vmem:[#allocation3 + $0x10] sm:$0xf]
        %v1303 = vld [vmem:[#allocation3 + $0x14] sm:$0xf]
        %v1304 = vld [vmem:[#allocation3 + $0x18] sm:$0xf]
        %v1305 = vld [vmem:[#allocation3 + $0x1c] sm:$0xf]
        %v1306 = vld [vmem:[#allocation3 + $0x20] sm:$0xf]
        %v1307 = vld [vmem:[#allocation3 + $0x24] sm:$0xf]
        %v1308 = vld [vmem:[#allocation3 + $0x28] sm:$0xf]
        %v1309 = vld [vmem:[#allocation3 + $0x2c] sm:$0xf]
        %v1310 = vld [vmem:[%s363] sm:$0xf]
        %v1311 = vld [vmem:[%s363 + $0x4] sm:$0xf]
        %v1312 = vld [vmem:[%s363 + $0x8] sm:$0xf]
        %v1313 = vld [vmem:[%s363 + $0xc] sm:$0xf]
        %s1314 = scalar_lea.vmem [#allocation3], 48
        %v1315 = vld [vmem:[%s1314] sm:$0xf]
        %v1316 = vld [vmem:[%s1314 + $0x4] sm:$0xf]
        %v1317 = vld [vmem:[%s1314 + $0x8] sm:$0xf]
        %v1318 = vld [vmem:[%s1314 + $0xc] sm:$0xf]
        %v1319 = vld [vmem:[%s1314 + $0x10] sm:$0xf]
        %v1320 = vld [vmem:[%s1314 + $0x14] sm:$0xf]
        %v1321 = vld [vmem:[%s1314 + $0x18] sm:$0xf]
        %v1322 = vld [vmem:[%s1314 + $0x1c] sm:$0xf]
        %v1323 = vld [vmem:[%s1314 + $0x20] sm:$0xf]
        %v1324 = vld [vmem:[%s1314 + $0x24] sm:$0xf]
        %v1325 = vld [vmem:[%s1314 + $0x28] sm:$0xf]
        %v1326 = vld [vmem:[%s1314 + $0x2c] sm:$0xf]
        %s1327 = scalar_lea.vmem %s363, 16 [#allocation4]
        %v1328 = vld [vmem:[%s1327] sm:$0xf]
        %v1329 = vld [vmem:[%s1327 + $0x4] sm:$0xf]
        %v1330 = vld [vmem:[%s1327 + $0x8] sm:$0xf]
        %v1331 = vld [vmem:[%s1327 + $0xc] sm:$0xf]
        %v1344 = vunpack.c.l.b16 %v1315
        %v1345 = vunpack.c.l.b16 %v1316
        %v1346 = vunpack.c.l.b16 %v1317
        %v1347 = vunpack.c.l.b16 %v1318
        %v1348 = vunpack.c.l.b16 %v1319
        %v1349 = vunpack.c.l.b16 %v1320
        %v1350 = vunpack.c.l.b16 %v1321
        %v1351 = vunpack.c.l.b16 %v1322
        %v1352 = vunpack.c.l.b16 %v1323
        %v1353 = vunpack.c.l.b16 %v1324
        %v1354 = vunpack.c.l.b16 %v1325
        %v1355 = vunpack.c.l.b16 %v1326
        %v1356 = vpack.c.b16 %v1345, %v1344
        %v1357 = vpack.c.b16 %v1347, %v1346
        %v1358 = vpack.c.b16 %v1349, %v1348
        %v1359 = vpack.c.b16 %v1351, %v1350
        %v1360 = vpack.c.b16 %v1353, %v1352
        %v1361 = vpack.c.b16 %v1355, %v1354
        %v1366 = vunpack.c.l.b16 %v1328
        %v1367 = vunpack.c.l.b16 %v1329
        %v1368 = vunpack.c.l.b16 %v1330
        %v1369 = vunpack.c.l.b16 %v1331
        %v1370 = vpack.c.b16 %v1367, %v1366
        %v1371 = vpack.c.b16 %v1369, %v1368
        %vm1374 = vcmask 261120
        %v1376 = vsel %vm1374, %v1356, 0
        %v1379 = vsel %vm1374, %v1357, 0
        %v1382 = vsel %vm1374, %v1358, 0
        %v1385 = vsel %vm1374, %v1359, 0
        %v1388 = vsel %vm1374, %v1360, 0
        %v1391 = vsel %vm1374, %v1361, 0
        %1393 = vmatprep.subr.bf16.mxu0 0
        %1394 = vmatpush1.bf16.msra.mxu0 0
        %1395 = vmatprep.subr.bf16.mxu0 0
        %1396 = vmatpush1.bf16.msra.mxu0 0
        %1397 = vmatprep.subr.bf16.mxu0 0
        %1398 = vmatpush1.bf16.msra.mxu0 0
        %1399 = vmatprep.subr.bf16.mxu0 0
        %1400 = vmatpush1.bf16.msra.mxu0 0
        %1401 = vmatprep.subr.bf16.mxu0 0
        %1402 = vmatpush1.bf16.msra.mxu0 0
        %1403 = vmatprep.subr.bf16.mxu0 0
        %1404 = vmatpush1.bf16.msra.mxu0 0
        %1405 = vmatprep.subr.bf16.mxu0 0
        %1406 = vmatpush1.bf16.msra.mxu0 %v1371
        %1407 = vmatprep.subr.bf16.mxu0 0
        %1408 = vmatpush1.bf16.msra.mxu0 %v1370
        %1409 = vmatprep.subr.bf16.mxu0 0
        %1410 = vmatpush2.bf16.msra.mxu0 0
        %1411 = vmatprep.subr.bf16.mxu0 0
        %1412 = vmatpush2.bf16.msra.mxu0 0
        %1413 = vmatprep.subr.bf16.mxu0 0
        %1414 = vmatpush2.bf16.msra.mxu0 0
        %1415 = vmatprep.subr.bf16.mxu0 0
        %1416 = vmatpush2.bf16.msra.mxu0 0
        %1417 = vmatprep.subr.bf16.mxu0 0
        %1418 = vmatpush2.bf16.msra.mxu0 0
        %1419 = vmatprep.subr.bf16.mxu0 0
        %1420 = vmatpush2.bf16.msra.mxu0 0
        %1421 = vmatprep.subr.bf16.mxu0 0
        %1422 = vmatpush2.bf16.msra.mxu0 0
        %1423 = vmatprep.subr.bf16.mxu0 0
        %1424 = vmatpush2.bf16.msra.mxu0 0
        %1425 = vmatprep.mubr.bf16.mxu0 0
        %1426 = vmatmul.mubr.bf16.gmra.mxu0 %v1376
        %v1427 = vpop.f32.mrf.mxu0
        %v1428 = vadd.f32 0.0, %v1427
        %v1429 = vpop.f32.mrf.mxu0
        %v1430 = vpop.f32.mrf.mxu0
        %v1431 = vadd.f32 0.0, %v1430
        %v1432 = vpop.f32.mrf.mxu0
        %1433 = vmatprep.mubr.bf16.mxu0 0
        %1434 = vmatmul.mubr.bf16.gmra.mxu0 %v1379
        %v1435 = vpop.f32.mrf.mxu0
        %v1436 = vadd.f32 0.0, %v1435
        %v1437 = vpop.f32.mrf.mxu0
        %v1438 = vpop.f32.mrf.mxu0
        %v1439 = vadd.f32 0.0, %v1438
        %v1440 = vpop.f32.mrf.mxu0
        %1441 = vmatprep.mubr.bf16.mxu0 0
        %1442 = vmatmul.mubr.bf16.gmra.mxu0 %v1382
        %v1443 = vpop.f32.mrf.mxu0
        %v1444 = vadd.f32 0.0, %v1443
        %v1445 = vpop.f32.mrf.mxu0
        %v1446 = vpop.f32.mrf.mxu0
        %v1447 = vadd.f32 0.0, %v1446
        %v1448 = vpop.f32.mrf.mxu0
        %1449 = vmatprep.mubr.bf16.mxu0 0
        %1450 = vmatmul.mubr.bf16.gmra.mxu0 %v1385
        %v1451 = vpop.f32.mrf.mxu0
        %v1452 = vadd.f32 0.0, %v1451
        %v1453 = vpop.f32.mrf.mxu0
        %v1454 = vpop.f32.mrf.mxu0
        %v1455 = vadd.f32 0.0, %v1454
        %v1456 = vpop.f32.mrf.mxu0
        %1457 = vmatprep.mubr.bf16.mxu0 0
        %1458 = vmatmul.mubr.bf16.gmra.mxu0 %v1388
        %v1459 = vpop.f32.mrf.mxu0
        %v1460 = vadd.f32 0.0, %v1459
        %v1461 = vpop.f32.mrf.mxu0
        %v1462 = vpop.f32.mrf.mxu0
        %v1463 = vadd.f32 0.0, %v1462
        %v1464 = vpop.f32.mrf.mxu0
        %1465 = vmatprep.mubr.bf16.mxu0 0
        %1466 = vmatmul.mubr.bf16.gmra.mxu0 %v1391
        %v1467 = vpop.f32.mrf.mxu0
        %v1468 = vadd.f32 0.0, %v1467
        %v1469 = vpop.f32.mrf.mxu0
        %v1470 = vpop.f32.mrf.mxu0
        %v1471 = vadd.f32 0.0, %v1470
        %v1472 = vpop.f32.mrf.mxu0
        %1473 = vdwg.mxu0
        %v1486 = vunpack.c.l.b16 %v1298
        %v1487 = vunpack.c.l.b16 %v1299
        %v1488 = vunpack.c.l.b16 %v1300
        %v1489 = vunpack.c.l.b16 %v1301
        %v1490 = vunpack.c.l.b16 %v1302
        %v1491 = vunpack.c.l.b16 %v1303
        %v1492 = vunpack.c.l.b16 %v1304
        %v1493 = vunpack.c.l.b16 %v1305
        %v1494 = vunpack.c.l.b16 %v1306
        %v1495 = vunpack.c.l.b16 %v1307
        %v1496 = vunpack.c.l.b16 %v1308
        %v1497 = vunpack.c.l.b16 %v1309
        %v1498 = vpack.c.b16 %v1487, %v1486
        %v1499 = vpack.c.b16 %v1489, %v1488
        %v1500 = vpack.c.b16 %v1491, %v1490
        %v1501 = vpack.c.b16 %v1493, %v1492
        %v1502 = vpack.c.b16 %v1495, %v1494
        %v1503 = vpack.c.b16 %v1497, %v1496
        %v1508 = vunpack.c.l.b16 %v1310
        %v1509 = vunpack.c.l.b16 %v1311
        %v1510 = vunpack.c.l.b16 %v1312
        %v1511 = vunpack.c.l.b16 %v1313
        %v1512 = vpack.c.b16 %v1509, %v1508
        %v1513 = vpack.c.b16 %v1511, %v1510
        %v1517 = vsel %vm1374, %v1498, 0
        %v1520 = vsel %vm1374, %v1499, 0
        %v1523 = vsel %vm1374, %v1500, 0
        %v1526 = vsel %vm1374, %v1501, 0
        %v1529 = vsel %vm1374, %v1502, 0
        %v1532 = vsel %vm1374, %v1503, 0
        %1534 = vmatprep.subr.bf16.mxu0 0
        %1535 = vmatpush1.bf16.msra.mxu0 0
        %1536 = vmatprep.subr.bf16.mxu0 0
        %1537 = vmatpush1.bf16.msra.mxu0 0
        %1538 = vmatprep.subr.bf16.mxu0 0
        %1539 = vmatpush1.bf16.msra.mxu0 0
        %1540 = vmatprep.subr.bf16.mxu0 0
        %1541 = vmatpush1.bf16.msra.mxu0 0
        %1542 = vmatprep.subr.bf16.mxu0 0
        %1543 = vmatpush1.bf16.msra.mxu0 0
        %1544 = vmatprep.subr.bf16.mxu0 0
        %1545 = vmatpush1.bf16.msra.mxu0 0
        %1546 = vmatprep.subr.bf16.mxu0 0
        %1547 = vmatpush1.bf16.msra.mxu0 %v1513
        %1548 = vmatprep.subr.bf16.mxu0 0
        %1549 = vmatpush1.bf16.msra.mxu0 %v1512
        %1550 = vmatprep.subr.bf16.mxu0 0
        %1551 = vmatpush2.bf16.msra.mxu0 0
        %1552 = vmatprep.subr.bf16.mxu0 0
        %1553 = vmatpush2.bf16.msra.mxu0 0
        %1554 = vmatprep.subr.bf16.mxu0 0
        %1555 = vmatpush2.bf16.msra.mxu0 0
        %1556 = vmatprep.subr.bf16.mxu0 0
        %1557 = vmatpush2.bf16.msra.mxu0 0
        %1558 = vmatprep.subr.bf16.mxu0 0
        %1559 = vmatpush2.bf16.msra.mxu0 0
        %1560 = vmatprep.subr.bf16.mxu0 0
        %1561 = vmatpush2.bf16.msra.mxu0 0
        %1562 = vmatprep.subr.bf16.mxu0 0
        %1563 = vmatpush2.bf16.msra.mxu0 0
        %1564 = vmatprep.subr.bf16.mxu0 0
        %1565 = vmatpush2.bf16.msra.mxu0 0
        %1566 = vmatprep.mubr.bf16.mxu0 0
        %1567 = vmatmul.mubr.bf16.gmra.mxu0 %v1517
        %v1568 = vpop.f32.mrf.mxu0
        %v1569 = vadd.f32 %v1428, %v1568
        %v1570 = vpop.f32.mrf.mxu0
        %v1571 = vpop.f32.mrf.mxu0
        %v1572 = vadd.f32 %v1431, %v1571
        %v1573 = vpop.f32.mrf.mxu0
        %1574 = vmatprep.mubr.bf16.mxu0 0
        %1575 = vmatmul.mubr.bf16.gmra.mxu0 %v1520
        %v1576 = vpop.f32.mrf.mxu0
        %v1577 = vadd.f32 %v1436, %v1576
        %v1578 = vpop.f32.mrf.mxu0
        %v1579 = vpop.f32.mrf.mxu0
        %v1580 = vadd.f32 %v1439, %v1579
        %v1581 = vpop.f32.mrf.mxu0
        %1582 = vmatprep.mubr.bf16.mxu0 0
        %1583 = vmatmul.mubr.bf16.gmra.mxu0 %v1523
        %v1584 = vpop.f32.mrf.mxu0
        %v1585 = vadd.f32 %v1444, %v1584
        %v1586 = vpop.f32.mrf.mxu0
        %v1587 = vpop.f32.mrf.mxu0
        %v1588 = vadd.f32 %v1447, %v1587
        %v1589 = vpop.f32.mrf.mxu0
        %1590 = vmatprep.mubr.bf16.mxu0 0
        %1591 = vmatmul.mubr.bf16.gmra.mxu0 %v1526
        %v1592 = vpop.f32.mrf.mxu0
        %v1593 = vadd.f32 %v1452, %v1592
        %v1594 = vpop.f32.mrf.mxu0
        %v1595 = vpop.f32.mrf.mxu0
        %v1596 = vadd.f32 %v1455, %v1595
        %v1597 = vpop.f32.mrf.mxu0
        %1598 = vmatprep.mubr.bf16.mxu0 0
        %1599 = vmatmul.mubr.bf16.gmra.mxu0 %v1529
        %v1600 = vpop.f32.mrf.mxu0
        %v1601 = vadd.f32 %v1460, %v1600
        %v1602 = vpop.f32.mrf.mxu0
        %v1603 = vpop.f32.mrf.mxu0
        %v1604 = vadd.f32 %v1463, %v1603
        %v1605 = vpop.f32.mrf.mxu0
        %1606 = vmatprep.mubr.bf16.mxu0 0
        %1607 = vmatmul.mubr.bf16.gmra.mxu0 %v1532
        %v1608 = vpop.f32.mrf.mxu0
        %v1609 = vadd.f32 %v1468, %v1608
        %v1610 = vpop.f32.mrf.mxu0
        %v1611 = vpop.f32.mrf.mxu0
        %v1612 = vadd.f32 %v1471, %v1611
        %v1613 = vpop.f32.mrf.mxu0
        %1614 = vdwg.mxu0
        %s1615 = scalar_lea.vmem [#allocation3], 96
        %v1616 = vld [vmem:[%s1615] sm:$0xf]
        %v1617 = vld [vmem:[%s1615 + $0x4] sm:$0xf]
        %v1618 = vld [vmem:[%s1615 + $0x8] sm:$0xf]
        %v1619 = vld [vmem:[%s1615 + $0xc] sm:$0xf]
        %v1620 = vld [vmem:[%s1615 + $0x10] sm:$0xf]
        %v1621 = vld [vmem:[%s1615 + $0x14] sm:$0xf]
        %v1622 = vld [vmem:[%s1615 + $0x18] sm:$0xf]
        %v1623 = vld [vmem:[%s1615 + $0x1c] sm:$0xf]
        %v1624 = vld [vmem:[%s1615 + $0x20] sm:$0xf]
        %v1625 = vld [vmem:[%s1615 + $0x24] sm:$0xf]
        %v1626 = vld [vmem:[%s1615 + $0x28] sm:$0xf]
        %v1627 = vld [vmem:[%s1615 + $0x2c] sm:$0xf]
        %s1628 = scalar_lea.vmem %s363, 32 [#allocation4]
        %v1629 = vld [vmem:[%s1628] sm:$0xf]
        %v1630 = vld [vmem:[%s1628 + $0x4] sm:$0xf]
        %v1631 = vld [vmem:[%s1628 + $0x8] sm:$0xf]
        %v1632 = vld [vmem:[%s1628 + $0xc] sm:$0xf]
        %v1645 = vunpack.c.l.b16 %v1616
        %v1646 = vunpack.c.l.b16 %v1617
        %v1647 = vunpack.c.l.b16 %v1618
        %v1648 = vunpack.c.l.b16 %v1619
        %v1649 = vunpack.c.l.b16 %v1620
        %v1650 = vunpack.c.l.b16 %v1621
        %v1651 = vunpack.c.l.b16 %v1622
        %v1652 = vunpack.c.l.b16 %v1623
        %v1653 = vunpack.c.l.b16 %v1624
        %v1654 = vunpack.c.l.b16 %v1625
        %v1655 = vunpack.c.l.b16 %v1626
        %v1656 = vunpack.c.l.b16 %v1627
        %v1657 = vpack.c.b16 %v1646, %v1645
        %v1658 = vpack.c.b16 %v1648, %v1647
        %v1659 = vpack.c.b16 %v1650, %v1649
        %v1660 = vpack.c.b16 %v1652, %v1651
        %v1661 = vpack.c.b16 %v1654, %v1653
        %v1662 = vpack.c.b16 %v1656, %v1655
        %v1667 = vunpack.c.l.b16 %v1629
        %v1668 = vunpack.c.l.b16 %v1630
        %v1669 = vunpack.c.l.b16 %v1631
        %v1670 = vunpack.c.l.b16 %v1632
        %v1671 = vpack.c.b16 %v1668, %v1667
        %v1672 = vpack.c.b16 %v1670, %v1669
        %v1676 = vsel %vm1374, %v1657, 0
        %v1679 = vsel %vm1374, %v1658, 0
        %v1682 = vsel %vm1374, %v1659, 0
        %v1685 = vsel %vm1374, %v1660, 0
        %v1688 = vsel %vm1374, %v1661, 0
        %v1691 = vsel %vm1374, %v1662, 0
        %1693 = vmatprep.subr.bf16.mxu0 0
        %1694 = vmatpush1.bf16.msra.mxu0 0
        %1695 = vmatprep.subr.bf16.mxu0 0
        %1696 = vmatpush1.bf16.msra.mxu0 0
        %1697 = vmatprep.subr.bf16.mxu0 0
        %1698 = vmatpush1.bf16.msra.mxu0 0
        %1699 = vmatprep.subr.bf16.mxu0 0
        %1700 = vmatpush1.bf16.msra.mxu0 0
        %1701 = vmatprep.subr.bf16.mxu0 0
        %1702 = vmatpush1.bf16.msra.mxu0 0
        %1703 = vmatprep.subr.bf16.mxu0 0
        %1704 = vmatpush1.bf16.msra.mxu0 0
        %1705 = vmatprep.subr.bf16.mxu0 0
        %1706 = vmatpush1.bf16.msra.mxu0 %v1672
        %1707 = vmatprep.subr.bf16.mxu0 0
        %1708 = vmatpush1.bf16.msra.mxu0 %v1671
        %1709 = vmatprep.subr.bf16.mxu0 0
        %1710 = vmatpush2.bf16.msra.mxu0 0
        %1711 = vmatprep.subr.bf16.mxu0 0
        %1712 = vmatpush2.bf16.msra.mxu0 0
        %1713 = vmatprep.subr.bf16.mxu0 0
        %1714 = vmatpush2.bf16.msra.mxu0 0
        %1715 = vmatprep.subr.bf16.mxu0 0
        %1716 = vmatpush2.bf16.msra.mxu0 0
        %1717 = vmatprep.subr.bf16.mxu0 0
        %1718 = vmatpush2.bf16.msra.mxu0 0
        %1719 = vmatprep.subr.bf16.mxu0 0
        %1720 = vmatpush2.bf16.msra.mxu0 0
        %1721 = vmatprep.subr.bf16.mxu0 0
        %1722 = vmatpush2.bf16.msra.mxu0 0
        %1723 = vmatprep.subr.bf16.mxu0 0
        %1724 = vmatpush2.bf16.msra.mxu0 0
        %1725 = vmatprep.mubr.bf16.mxu0 0
        %1726 = vmatmul.mubr.bf16.gmra.mxu0 %v1676
        %v1727 = vpop.f32.mrf.mxu0
        %v1728 = vadd.f32 0.0, %v1727
        %v1729 = vpop.f32.mrf.mxu0
        %v1730 = vpop.f32.mrf.mxu0
        %v1731 = vadd.f32 0.0, %v1730
        %v1732 = vpop.f32.mrf.mxu0
        %1733 = vmatprep.mubr.bf16.mxu0 0
        %1734 = vmatmul.mubr.bf16.gmra.mxu0 %v1679
        %v1735 = vpop.f32.mrf.mxu0
        %v1736 = vadd.f32 0.0, %v1735
        %v1737 = vpop.f32.mrf.mxu0
        %v1738 = vpop.f32.mrf.mxu0
        %v1739 = vadd.f32 0.0, %v1738
        %v1740 = vpop.f32.mrf.mxu0
        %1741 = vmatprep.mubr.bf16.mxu0 0
        %1742 = vmatmul.mubr.bf16.gmra.mxu0 %v1682
        %v1743 = vpop.f32.mrf.mxu0
        %v1744 = vadd.f32 0.0, %v1743
        %v1745 = vpop.f32.mrf.mxu0
        %v1746 = vpop.f32.mrf.mxu0
        %v1747 = vadd.f32 0.0, %v1746
        %v1748 = vpop.f32.mrf.mxu0
        %1749 = vmatprep.mubr.bf16.mxu0 0
        %1750 = vmatmul.mubr.bf16.gmra.mxu0 %v1685
        %v1751 = vpop.f32.mrf.mxu0
        %v1752 = vadd.f32 0.0, %v1751
        %v1753 = vpop.f32.mrf.mxu0
        %v1754 = vpop.f32.mrf.mxu0
        %v1755 = vadd.f32 0.0, %v1754
        %v1756 = vpop.f32.mrf.mxu0
        %1757 = vmatprep.mubr.bf16.mxu0 0
        %1758 = vmatmul.mubr.bf16.gmra.mxu0 %v1688
        %v1759 = vpop.f32.mrf.mxu0
        %v1760 = vadd.f32 0.0, %v1759
        %v1761 = vpop.f32.mrf.mxu0
        %v1762 = vpop.f32.mrf.mxu0
        %v1763 = vadd.f32 0.0, %v1762
        %v1764 = vpop.f32.mrf.mxu0
        %1765 = vmatprep.mubr.bf16.mxu0 0
        %1766 = vmatmul.mubr.bf16.gmra.mxu0 %v1691
        %v1767 = vpop.f32.mrf.mxu0
        %v1768 = vadd.f32 0.0, %v1767
        %v1769 = vpop.f32.mrf.mxu0
        %v1770 = vpop.f32.mrf.mxu0
        %v1771 = vadd.f32 0.0, %v1770
        %v1772 = vpop.f32.mrf.mxu0
        %1773 = vdwg.mxu0
        %v1774 = vadd.f32 %v1569, %v1728
        %v1775 = vadd.f32 %v1572, %v1731
        %v1776 = vadd.f32 %v1577, %v1736
        %v1777 = vadd.f32 %v1580, %v1739
        %v1778 = vadd.f32 %v1585, %v1744
        %v1779 = vadd.f32 %v1588, %v1747
        %v1780 = vadd.f32 %v1593, %v1752
        %v1781 = vadd.f32 %v1596, %v1755
        %v1782 = vadd.f32 %v1601, %v1760
        %v1783 = vadd.f32 %v1604, %v1763
        %v1784 = vadd.f32 %v1609, %v1768
        %v1785 = vadd.f32 %v1612, %v1771
        %s1786 = scalar_lea.vmem [#allocation3], 144
        %v1787 = vld [vmem:[%s1786] sm:$0xf]
        %v1788 = vld [vmem:[%s1786 + $0x4] sm:$0xf]
        %v1789 = vld [vmem:[%s1786 + $0x8] sm:$0xf]
        %v1790 = vld [vmem:[%s1786 + $0xc] sm:$0xf]
        %v1791 = vld [vmem:[%s1786 + $0x10] sm:$0xf]
        %v1792 = vld [vmem:[%s1786 + $0x14] sm:$0xf]
        %v1793 = vld [vmem:[%s1786 + $0x18] sm:$0xf]
        %v1794 = vld [vmem:[%s1786 + $0x1c] sm:$0xf]
        %v1795 = vld [vmem:[%s1786 + $0x20] sm:$0xf]
        %v1796 = vld [vmem:[%s1786 + $0x24] sm:$0xf]
        %v1797 = vld [vmem:[%s1786 + $0x28] sm:$0xf]
        %v1798 = vld [vmem:[%s1786 + $0x2c] sm:$0xf]
        %s1799 = scalar_lea.vmem %s363, 48 [#allocation4]
        %v1800 = vld [vmem:[%s1799] sm:$0xf]
        %v1801 = vld [vmem:[%s1799 + $0x4] sm:$0xf]
        %v1802 = vld [vmem:[%s1799 + $0x8] sm:$0xf]
        %v1803 = vld [vmem:[%s1799 + $0xc] sm:$0xf]
        %v1816 = vunpack.c.l.b16 %v1787
        %v1817 = vunpack.c.l.b16 %v1788
        %v1818 = vunpack.c.l.b16 %v1789
        %v1819 = vunpack.c.l.b16 %v1790
        %v1820 = vunpack.c.l.b16 %v1791
        %v1821 = vunpack.c.l.b16 %v1792
        %v1822 = vunpack.c.l.b16 %v1793
        %v1823 = vunpack.c.l.b16 %v1794
        %v1824 = vunpack.c.l.b16 %v1795
        %v1825 = vunpack.c.l.b16 %v1796
        %v1826 = vunpack.c.l.b16 %v1797
        %v1827 = vunpack.c.l.b16 %v1798
        %v1828 = vpack.c.b16 %v1817, %v1816
        %v1829 = vpack.c.b16 %v1819, %v1818
        %v1830 = vpack.c.b16 %v1821, %v1820
        %v1831 = vpack.c.b16 %v1823, %v1822
        %v1832 = vpack.c.b16 %v1825, %v1824
        %v1833 = vpack.c.b16 %v1827, %v1826
        %v1838 = vunpack.c.l.b16 %v1800
        %v1839 = vunpack.c.l.b16 %v1801
        %v1840 = vunpack.c.l.b16 %v1802
        %v1841 = vunpack.c.l.b16 %v1803
        %v1842 = vpack.c.b16 %v1839, %v1838
        %v1843 = vpack.c.b16 %v1841, %v1840
        %v1847 = vsel %vm1374, %v1828, 0
        %v1850 = vsel %vm1374, %v1829, 0
        %v1853 = vsel %vm1374, %v1830, 0
        %v1856 = vsel %vm1374, %v1831, 0
        %v1859 = vsel %vm1374, %v1832, 0
        %v1862 = vsel %vm1374, %v1833, 0
        %1864 = vmatprep.subr.bf16.mxu0 0
        %1865 = vmatpush1.bf16.msra.mxu0 0
        %1866 = vmatprep.subr.bf16.mxu0 0
        %1867 = vmatpush1.bf16.msra.mxu0 0
        %1868 = vmatprep.subr.bf16.mxu0 0
        %1869 = vmatpush1.bf16.msra.mxu0 0
        %1870 = vmatprep.subr.bf16.mxu0 0
        %1871 = vmatpush1.bf16.msra.mxu0 0
        %1872 = vmatprep.subr.bf16.mxu0 0
        %1873 = vmatpush1.bf16.msra.mxu0 0
        %1874 = vmatprep.subr.bf16.mxu0 0
        %1875 = vmatpush1.bf16.msra.mxu0 0
        %1876 = vmatprep.subr.bf16.mxu0 0
        %1877 = vmatpush1.bf16.msra.mxu0 %v1843
        %1878 = vmatprep.subr.bf16.mxu0 0
        %1879 = vmatpush1.bf16.msra.mxu0 %v1842
        %1880 = vmatprep.subr.bf16.mxu0 0
        %1881 = vmatpush2.bf16.msra.mxu0 0
        %1882 = vmatprep.subr.bf16.mxu0 0
        %1883 = vmatpush2.bf16.msra.mxu0 0
        %1884 = vmatprep.subr.bf16.mxu0 0
        %1885 = vmatpush2.bf16.msra.mxu0 0
        %1886 = vmatprep.subr.bf16.mxu0 0
        %1887 = vmatpush2.bf16.msra.mxu0 0
        %1888 = vmatprep.subr.bf16.mxu0 0
        %1889 = vmatpush2.bf16.msra.mxu0 0
        %1890 = vmatprep.subr.bf16.mxu0 0
        %1891 = vmatpush2.bf16.msra.mxu0 0
        %1892 = vmatprep.subr.bf16.mxu0 0
        %1893 = vmatpush2.bf16.msra.mxu0 0
        %1894 = vmatprep.subr.bf16.mxu0 0
        %1895 = vmatpush2.bf16.msra.mxu0 0
        %1896 = vmatprep.mubr.bf16.mxu0 0
        %1897 = vmatmul.mubr.bf16.gmra.mxu0 %v1847
        %v1898 = vpop.f32.mrf.mxu0
        %v1899 = vadd.f32 0.0, %v1898
        %v1900 = vpop.f32.mrf.mxu0
        %v1901 = vpop.f32.mrf.mxu0
        %v1902 = vadd.f32 0.0, %v1901
        %v1903 = vpop.f32.mrf.mxu0
        %1904 = vmatprep.mubr.bf16.mxu0 0
        %1905 = vmatmul.mubr.bf16.gmra.mxu0 %v1850
        %v1906 = vpop.f32.mrf.mxu0
        %v1907 = vadd.f32 0.0, %v1906
        %v1908 = vpop.f32.mrf.mxu0
        %v1909 = vpop.f32.mrf.mxu0
        %v1910 = vadd.f32 0.0, %v1909
        %v1911 = vpop.f32.mrf.mxu0
        %1912 = vmatprep.mubr.bf16.mxu0 0
        %1913 = vmatmul.mubr.bf16.gmra.mxu0 %v1853
        %v1914 = vpop.f32.mrf.mxu0
        %v1915 = vadd.f32 0.0, %v1914
        %v1916 = vpop.f32.mrf.mxu0
        %v1917 = vpop.f32.mrf.mxu0
        %v1918 = vadd.f32 0.0, %v1917
        %v1919 = vpop.f32.mrf.mxu0
        %1920 = vmatprep.mubr.bf16.mxu0 0
        %1921 = vmatmul.mubr.bf16.gmra.mxu0 %v1856
        %v1922 = vpop.f32.mrf.mxu0
        %v1923 = vadd.f32 0.0, %v1922
        %v1924 = vpop.f32.mrf.mxu0
        %v1925 = vpop.f32.mrf.mxu0
        %v1926 = vadd.f32 0.0, %v1925
        %v1927 = vpop.f32.mrf.mxu0
        %1928 = vmatprep.mubr.bf16.mxu0 0
        %1929 = vmatmul.mubr.bf16.gmra.mxu0 %v1859
        %v1930 = vpop.f32.mrf.mxu0
        %v1931 = vadd.f32 0.0, %v1930
        %v1932 = vpop.f32.mrf.mxu0
        %v1933 = vpop.f32.mrf.mxu0
        %v1934 = vadd.f32 0.0, %v1933
        %v1935 = vpop.f32.mrf.mxu0
        %1936 = vmatprep.mubr.bf16.mxu0 0
        %1937 = vmatmul.mubr.bf16.gmra.mxu0 %v1862
        %v1938 = vpop.f32.mrf.mxu0
        %v1939 = vadd.f32 0.0, %v1938
        %v1940 = vpop.f32.mrf.mxu0
        %v1941 = vpop.f32.mrf.mxu0
        %v1942 = vadd.f32 0.0, %v1941
        %v1943 = vpop.f32.mrf.mxu0
        %1944 = vdwg.mxu0
        %v1945 = vadd.f32 %v1774, %v1899
        %v1946 = vadd.f32 %v1775, %v1902
        %v1947 = vadd.f32 %v1776, %v1907
        %v1948 = vadd.f32 %v1777, %v1910
        %v1949 = vadd.f32 %v1778, %v1915
        %v1950 = vadd.f32 %v1779, %v1918
        %v1951 = vadd.f32 %v1780, %v1923
        %v1952 = vadd.f32 %v1781, %v1926
        %v1953 = vadd.f32 %v1782, %v1931
        %v1954 = vadd.f32 %v1783, %v1934
        %v1955 = vadd.f32 %v1784, %v1939
        %v1956 = vadd.f32 %v1785, %v1942
        %s1957 = scalar_lea.vmem [#allocation3], 192
        %v1958 = vld [vmem:[%s1957] sm:$0xf]
        %v1959 = vld [vmem:[%s1957 + $0x4] sm:$0xf]
        %v1960 = vld [vmem:[%s1957 + $0x8] sm:$0xf]
        %v1961 = vld [vmem:[%s1957 + $0xc] sm:$0xf]
        %v1962 = vld [vmem:[%s1957 + $0x10] sm:$0xf]
        %v1963 = vld [vmem:[%s1957 + $0x14] sm:$0xf]
        %v1964 = vld [vmem:[%s1957 + $0x18] sm:$0xf]
        %v1965 = vld [vmem:[%s1957 + $0x1c] sm:$0xf]
        %v1966 = vld [vmem:[%s1957 + $0x20] sm:$0xf]
        %v1967 = vld [vmem:[%s1957 + $0x24] sm:$0xf]
        %v1968 = vld [vmem:[%s1957 + $0x28] sm:$0xf]
        %v1969 = vld [vmem:[%s1957 + $0x2c] sm:$0xf]
        %s1970 = scalar_lea.vmem %s363, 64 [#allocation4]
        %v1971 = vld [vmem:[%s1970] sm:$0xf]
        %v1972 = vld [vmem:[%s1970 + $0x4] sm:$0xf]
        %v1973 = vld [vmem:[%s1970 + $0x8] sm:$0xf]
        %v1974 = vld [vmem:[%s1970 + $0xc] sm:$0xf]
        %v1987 = vunpack.c.l.b16 %v1958
        %v1988 = vunpack.c.l.b16 %v1959
        %v1989 = vunpack.c.l.b16 %v1960
        %v1990 = vunpack.c.l.b16 %v1961
        %v1991 = vunpack.c.l.b16 %v1962
        %v1992 = vunpack.c.l.b16 %v1963
        %v1993 = vunpack.c.l.b16 %v1964
        %v1994 = vunpack.c.l.b16 %v1965
        %v1995 = vunpack.c.l.b16 %v1966
        %v1996 = vunpack.c.l.b16 %v1967
        %v1997 = vunpack.c.l.b16 %v1968
        %v1998 = vunpack.c.l.b16 %v1969
        %v1999 = vpack.c.b16 %v1988, %v1987
        %v2000 = vpack.c.b16 %v1990, %v1989
        %v2001 = vpack.c.b16 %v1992, %v1991
        %v2002 = vpack.c.b16 %v1994, %v1993
        %v2003 = vpack.c.b16 %v1996, %v1995
        %v2004 = vpack.c.b16 %v1998, %v1997
        %v2009 = vunpack.c.l.b16 %v1971
        %v2010 = vunpack.c.l.b16 %v1972
        %v2011 = vunpack.c.l.b16 %v1973
        %v2012 = vunpack.c.l.b16 %v1974
        %v2013 = vpack.c.b16 %v2010, %v2009
        %v2014 = vpack.c.b16 %v2012, %v2011
        %v2018 = vsel %vm1374, %v1999, 0
        %v2021 = vsel %vm1374, %v2000, 0
        %v2024 = vsel %vm1374, %v2001, 0
        %v2027 = vsel %vm1374, %v2002, 0
        %v2030 = vsel %vm1374, %v2003, 0
        %v2033 = vsel %vm1374, %v2004, 0
        %2035 = vmatprep.subr.bf16.mxu0 0
        %2036 = vmatpush1.bf16.msra.mxu0 0
        %2037 = vmatprep.subr.bf16.mxu0 0
        %2038 = vmatpush1.bf16.msra.mxu0 0
        %2039 = vmatprep.subr.bf16.mxu0 0
        %2040 = vmatpush1.bf16.msra.mxu0 0
        %2041 = vmatprep.subr.bf16.mxu0 0
        %2042 = vmatpush1.bf16.msra.mxu0 0
        %2043 = vmatprep.subr.bf16.mxu0 0
        %2044 = vmatpush1.bf16.msra.mxu0 0
        %2045 = vmatprep.subr.bf16.mxu0 0
        %2046 = vmatpush1.bf16.msra.mxu0 0
        %2047 = vmatprep.subr.bf16.mxu0 0
        %2048 = vmatpush1.bf16.msra.mxu0 %v2014
        %2049 = vmatprep.subr.bf16.mxu0 0
        %2050 = vmatpush1.bf16.msra.mxu0 %v2013
        %2051 = vmatprep.subr.bf16.mxu0 0
        %2052 = vmatpush2.bf16.msra.mxu0 0
        %2053 = vmatprep.subr.bf16.mxu0 0
        %2054 = vmatpush2.bf16.msra.mxu0 0
        %2055 = vmatprep.subr.bf16.mxu0 0
        %2056 = vmatpush2.bf16.msra.mxu0 0
        %2057 = vmatprep.subr.bf16.mxu0 0
        %2058 = vmatpush2.bf16.msra.mxu0 0
        %2059 = vmatprep.subr.bf16.mxu0 0
        %2060 = vmatpush2.bf16.msra.mxu0 0
        %2061 = vmatprep.subr.bf16.mxu0 0
        %2062 = vmatpush2.bf16.msra.mxu0 0
        %2063 = vmatprep.subr.bf16.mxu0 0
        %2064 = vmatpush2.bf16.msra.mxu0 0
        %2065 = vmatprep.subr.bf16.mxu0 0
        %2066 = vmatpush2.bf16.msra.mxu0 0
        %2067 = vmatprep.mubr.bf16.mxu0 0
        %2068 = vmatmul.mubr.bf16.gmra.mxu0 %v2018
        %v2069 = vpop.f32.mrf.mxu0
        %v2070 = vadd.f32 0.0, %v2069
        %v2071 = vpop.f32.mrf.mxu0
        %v2072 = vpop.f32.mrf.mxu0
        %v2073 = vadd.f32 0.0, %v2072
        %v2074 = vpop.f32.mrf.mxu0
        %2075 = vmatprep.mubr.bf16.mxu0 0
        %2076 = vmatmul.mubr.bf16.gmra.mxu0 %v2021
        %v2077 = vpop.f32.mrf.mxu0
        %v2078 = vadd.f32 0.0, %v2077
        %v2079 = vpop.f32.mrf.mxu0
        %v2080 = vpop.f32.mrf.mxu0
        %v2081 = vadd.f32 0.0, %v2080
        %v2082 = vpop.f32.mrf.mxu0
        %2083 = vmatprep.mubr.bf16.mxu0 0
        %2084 = vmatmul.mubr.bf16.gmra.mxu0 %v2024
        %v2085 = vpop.f32.mrf.mxu0
        %v2086 = vadd.f32 0.0, %v2085
        %v2087 = vpop.f32.mrf.mxu0
        %v2088 = vpop.f32.mrf.mxu0
        %v2089 = vadd.f32 0.0, %v2088
        %v2090 = vpop.f32.mrf.mxu0
        %2091 = vmatprep.mubr.bf16.mxu0 0
        %2092 = vmatmul.mubr.bf16.gmra.mxu0 %v2027
        %v2093 = vpop.f32.mrf.mxu0
        %v2094 = vadd.f32 0.0, %v2093
        %v2095 = vpop.f32.mrf.mxu0
        %v2096 = vpop.f32.mrf.mxu0
        %v2097 = vadd.f32 0.0, %v2096
        %v2098 = vpop.f32.mrf.mxu0
        %2099 = vmatprep.mubr.bf16.mxu0 0
        %2100 = vmatmul.mubr.bf16.gmra.mxu0 %v2030
        %v2101 = vpop.f32.mrf.mxu0
        %v2102 = vadd.f32 0.0, %v2101
        %v2103 = vpop.f32.mrf.mxu0
        %v2104 = vpop.f32.mrf.mxu0
        %v2105 = vadd.f32 0.0, %v2104
        %v2106 = vpop.f32.mrf.mxu0
        %2107 = vmatprep.mubr.bf16.mxu0 0
        %2108 = vmatmul.mubr.bf16.gmra.mxu0 %v2033
        %v2109 = vpop.f32.mrf.mxu0
        %v2110 = vadd.f32 0.0, %v2109
        %v2111 = vpop.f32.mrf.mxu0
        %v2112 = vpop.f32.mrf.mxu0
        %v2113 = vadd.f32 0.0, %v2112
        %v2114 = vpop.f32.mrf.mxu0
        %2115 = vdwg.mxu0
        %v2116 = vadd.f32 %v1945, %v2070
        %v2117 = vadd.f32 %v1946, %v2073
        %v2118 = vadd.f32 %v1947, %v2078
        %v2119 = vadd.f32 %v1948, %v2081
        %v2120 = vadd.f32 %v1949, %v2086
        %v2121 = vadd.f32 %v1950, %v2089
        %v2122 = vadd.f32 %v1951, %v2094
        %v2123 = vadd.f32 %v1952, %v2097
        %v2124 = vadd.f32 %v1953, %v2102
        %v2125 = vadd.f32 %v1954, %v2105
        %v2126 = vadd.f32 %v1955, %v2110
        %v2127 = vadd.f32 %v1956, %v2113
        %s2128 = scalar_lea.vmem [#allocation3], 240
        %v2129 = vld [vmem:[%s2128] sm:$0xf]
        %v2130 = vld [vmem:[%s2128 + $0x4] sm:$0xf]
        %v2131 = vld [vmem:[%s2128 + $0x8] sm:$0xf]
        %v2132 = vld [vmem:[%s2128 + $0xc] sm:$0xf]
        %v2133 = vld [vmem:[%s2128 + $0x10] sm:$0xf]
        %v2134 = vld [vmem:[%s2128 + $0x14] sm:$0xf]
        %v2135 = vld [vmem:[%s2128 + $0x18] sm:$0xf]
        %v2136 = vld [vmem:[%s2128 + $0x1c] sm:$0xf]
        %v2137 = vld [vmem:[%s2128 + $0x20] sm:$0xf]
        %v2138 = vld [vmem:[%s2128 + $0x24] sm:$0xf]
        %v2139 = vld [vmem:[%s2128 + $0x28] sm:$0xf]
        %v2140 = vld [vmem:[%s2128 + $0x2c] sm:$0xf]
        %s2141 = scalar_lea.vmem %s363, 80 [#allocation4]
        %v2142 = vld [vmem:[%s2141] sm:$0xf]
        %v2143 = vld [vmem:[%s2141 + $0x4] sm:$0xf]
        %v2144 = vld [vmem:[%s2141 + $0x8] sm:$0xf]
        %v2145 = vld [vmem:[%s2141 + $0xc] sm:$0xf]
        %v2158 = vunpack.c.l.b16 %v2129
        %v2159 = vunpack.c.l.b16 %v2130
        %v2160 = vunpack.c.l.b16 %v2131
        %v2161 = vunpack.c.l.b16 %v2132
        %v2162 = vunpack.c.l.b16 %v2133
        %v2163 = vunpack.c.l.b16 %v2134
        %v2164 = vunpack.c.l.b16 %v2135
        %v2165 = vunpack.c.l.b16 %v2136
        %v2166 = vunpack.c.l.b16 %v2137
        %v2167 = vunpack.c.l.b16 %v2138
        %v2168 = vunpack.c.l.b16 %v2139
        %v2169 = vunpack.c.l.b16 %v2140
        %v2170 = vpack.c.b16 %v2159, %v2158
        %v2171 = vpack.c.b16 %v2161, %v2160
        %v2172 = vpack.c.b16 %v2163, %v2162
        %v2173 = vpack.c.b16 %v2165, %v2164
        %v2174 = vpack.c.b16 %v2167, %v2166
        %v2175 = vpack.c.b16 %v2169, %v2168
        %v2180 = vunpack.c.l.b16 %v2142
        %v2181 = vunpack.c.l.b16 %v2143
        %v2182 = vunpack.c.l.b16 %v2144
        %v2183 = vunpack.c.l.b16 %v2145
        %v2184 = vpack.c.b16 %v2181, %v2180
        %v2185 = vpack.c.b16 %v2183, %v2182
        %v2189 = vsel %vm1374, %v2170, 0
        %v2192 = vsel %vm1374, %v2171, 0
        %v2195 = vsel %vm1374, %v2172, 0
        %v2198 = vsel %vm1374, %v2173, 0
        %v2201 = vsel %vm1374, %v2174, 0
        %v2204 = vsel %vm1374, %v2175, 0
        %2206 = vmatprep.subr.bf16.mxu0 0
        %2207 = vmatpush1.bf16.msra.mxu0 0
        %2208 = vmatprep.subr.bf16.mxu0 0
        %2209 = vmatpush1.bf16.msra.mxu0 0
        %2210 = vmatprep.subr.bf16.mxu0 0
        %2211 = vmatpush1.bf16.msra.mxu0 0
        %2212 = vmatprep.subr.bf16.mxu0 0
        %2213 = vmatpush1.bf16.msra.mxu0 0
        %2214 = vmatprep.subr.bf16.mxu0 0
        %2215 = vmatpush1.bf16.msra.mxu0 0
        %2216 = vmatprep.subr.bf16.mxu0 0
        %2217 = vmatpush1.bf16.msra.mxu0 0
        %2218 = vmatprep.subr.bf16.mxu0 0
        %2219 = vmatpush1.bf16.msra.mxu0 %v2185
        %2220 = vmatprep.subr.bf16.mxu0 0
        %2221 = vmatpush1.bf16.msra.mxu0 %v2184
        %2222 = vmatprep.subr.bf16.mxu0 0
        %2223 = vmatpush2.bf16.msra.mxu0 0
        %2224 = vmatprep.subr.bf16.mxu0 0
        %2225 = vmatpush2.bf16.msra.mxu0 0
        %2226 = vmatprep.subr.bf16.mxu0 0
        %2227 = vmatpush2.bf16.msra.mxu0 0
        %2228 = vmatprep.subr.bf16.mxu0 0
        %2229 = vmatpush2.bf16.msra.mxu0 0
        %2230 = vmatprep.subr.bf16.mxu0 0
        %2231 = vmatpush2.bf16.msra.mxu0 0
        %2232 = vmatprep.subr.bf16.mxu0 0
        %2233 = vmatpush2.bf16.msra.mxu0 0
        %2234 = vmatprep.subr.bf16.mxu0 0
        %2235 = vmatpush2.bf16.msra.mxu0 0
        %2236 = vmatprep.subr.bf16.mxu0 0
        %2237 = vmatpush2.bf16.msra.mxu0 0
        %2238 = vmatprep.mubr.bf16.mxu0 0
        %2239 = vmatmul.mubr.bf16.gmra.mxu0 %v2189
        %v2240 = vpop.f32.mrf.mxu0
        %v2241 = vadd.f32 0.0, %v2240
        %v2242 = vpop.f32.mrf.mxu0
        %v2243 = vpop.f32.mrf.mxu0
        %v2244 = vadd.f32 0.0, %v2243
        %v2245 = vpop.f32.mrf.mxu0
        %2246 = vmatprep.mubr.bf16.mxu0 0
        %2247 = vmatmul.mubr.bf16.gmra.mxu0 %v2192
        %v2248 = vpop.f32.mrf.mxu0
        %v2249 = vadd.f32 0.0, %v2248
        %v2250 = vpop.f32.mrf.mxu0
        %v2251 = vpop.f32.mrf.mxu0
        %v2252 = vadd.f32 0.0, %v2251
        %v2253 = vpop.f32.mrf.mxu0
        %2254 = vmatprep.mubr.bf16.mxu0 0
        %2255 = vmatmul.mubr.bf16.gmra.mxu0 %v2195
        %v2256 = vpop.f32.mrf.mxu0
        %v2257 = vadd.f32 0.0, %v2256
        %v2258 = vpop.f32.mrf.mxu0
        %v2259 = vpop.f32.mrf.mxu0
        %v2260 = vadd.f32 0.0, %v2259
        %v2261 = vpop.f32.mrf.mxu0
        %2262 = vmatprep.mubr.bf16.mxu0 0
        %2263 = vmatmul.mubr.bf16.gmra.mxu0 %v2198
        %v2264 = vpop.f32.mrf.mxu0
        %v2265 = vadd.f32 0.0, %v2264
        %v2266 = vpop.f32.mrf.mxu0
        %v2267 = vpop.f32.mrf.mxu0
        %v2268 = vadd.f32 0.0, %v2267
        %v2269 = vpop.f32.mrf.mxu0
        %2270 = vmatprep.mubr.bf16.mxu0 0
        %2271 = vmatmul.mubr.bf16.gmra.mxu0 %v2201
        %v2272 = vpop.f32.mrf.mxu0
        %v2273 = vadd.f32 0.0, %v2272
        %v2274 = vpop.f32.mrf.mxu0
        %v2275 = vpop.f32.mrf.mxu0
        %v2276 = vadd.f32 0.0, %v2275
        %v2277 = vpop.f32.mrf.mxu0
        %2278 = vmatprep.mubr.bf16.mxu0 0
        %2279 = vmatmul.mubr.bf16.gmra.mxu0 %v2204
        %v2280 = vpop.f32.mrf.mxu0
        %v2281 = vadd.f32 0.0, %v2280
        %v2282 = vpop.f32.mrf.mxu0
        %v2283 = vpop.f32.mrf.mxu0
        %v2284 = vadd.f32 0.0, %v2283
        %v2285 = vpop.f32.mrf.mxu0
        %2286 = vdwg.mxu0
        %v2287 = vadd.f32 %v2116, %v2241
        %v2288 = vadd.f32 %v2117, %v2244
        %v2289 = vadd.f32 %v2118, %v2249
        %v2290 = vadd.f32 %v2119, %v2252
        %v2291 = vadd.f32 %v2120, %v2257
        %v2292 = vadd.f32 %v2121, %v2260
        %v2293 = vadd.f32 %v2122, %v2265
        %v2294 = vadd.f32 %v2123, %v2268
        %v2295 = vadd.f32 %v2124, %v2273
        %v2296 = vadd.f32 %v2125, %v2276
        %v2297 = vadd.f32 %v2126, %v2281
        %v2298 = vadd.f32 %v2127, %v2284
        %s2299 = scalar_lea.vmem [#allocation3], 288
        %v2300 = vld [vmem:[%s2299] sm:$0xf]
        %v2301 = vld [vmem:[%s2299 + $0x4] sm:$0xf]
        %v2302 = vld [vmem:[%s2299 + $0x8] sm:$0xf]
        %v2303 = vld [vmem:[%s2299 + $0xc] sm:$0xf]
        %v2304 = vld [vmem:[%s2299 + $0x10] sm:$0xf]
        %v2305 = vld [vmem:[%s2299 + $0x14] sm:$0xf]
        %v2306 = vld [vmem:[%s2299 + $0x18] sm:$0xf]
        %v2307 = vld [vmem:[%s2299 + $0x1c] sm:$0xf]
        %v2308 = vld [vmem:[%s2299 + $0x20] sm:$0xf]
        %v2309 = vld [vmem:[%s2299 + $0x24] sm:$0xf]
        %v2310 = vld [vmem:[%s2299 + $0x28] sm:$0xf]
        %v2311 = vld [vmem:[%s2299 + $0x2c] sm:$0xf]
        %s2312 = scalar_lea.vmem %s363, 96 [#allocation4]
        %v2313 = vld [vmem:[%s2312] sm:$0xf]
        %v2314 = vld [vmem:[%s2312 + $0x4] sm:$0xf]
        %v2315 = vld [vmem:[%s2312 + $0x8] sm:$0xf]
        %v2316 = vld [vmem:[%s2312 + $0xc] sm:$0xf]
        %v2329 = vunpack.c.l.b16 %v2300
        %v2330 = vunpack.c.l.b16 %v2301
        %v2331 = vunpack.c.l.b16 %v2302
        %v2332 = vunpack.c.l.b16 %v2303
        %v2333 = vunpack.c.l.b16 %v2304
        %v2334 = vunpack.c.l.b16 %v2305
        %v2335 = vunpack.c.l.b16 %v2306
        %v2336 = vunpack.c.l.b16 %v2307
        %v2337 = vunpack.c.l.b16 %v2308
        %v2338 = vunpack.c.l.b16 %v2309
        %v2339 = vunpack.c.l.b16 %v2310
        %v2340 = vunpack.c.l.b16 %v2311
        %v2341 = vpack.c.b16 %v2330, %v2329
        %v2342 = vpack.c.b16 %v2332, %v2331
        %v2343 = vpack.c.b16 %v2334, %v2333
        %v2344 = vpack.c.b16 %v2336, %v2335
        %v2345 = vpack.c.b16 %v2338, %v2337
        %v2346 = vpack.c.b16 %v2340, %v2339
        %v2351 = vunpack.c.l.b16 %v2313
        %v2352 = vunpack.c.l.b16 %v2314
        %v2353 = vunpack.c.l.b16 %v2315
        %v2354 = vunpack.c.l.b16 %v2316
        %v2355 = vpack.c.b16 %v2352, %v2351
        %v2356 = vpack.c.b16 %v2354, %v2353
        %v2360 = vsel %vm1374, %v2341, 0
        %v2363 = vsel %vm1374, %v2342, 0
        %v2366 = vsel %vm1374, %v2343, 0
        %v2369 = vsel %vm1374, %v2344, 0
        %v2372 = vsel %vm1374, %v2345, 0
        %v2375 = vsel %vm1374, %v2346, 0
        %2377 = vmatprep.subr.bf16.mxu0 0
        %2378 = vmatpush1.bf16.msra.mxu0 0
        %2379 = vmatprep.subr.bf16.mxu0 0
        %2380 = vmatpush1.bf16.msra.mxu0 0
        %2381 = vmatprep.subr.bf16.mxu0 0
        %2382 = vmatpush1.bf16.msra.mxu0 0
        %2383 = vmatprep.subr.bf16.mxu0 0
        %2384 = vmatpush1.bf16.msra.mxu0 0
        %2385 = vmatprep.subr.bf16.mxu0 0
        %2386 = vmatpush1.bf16.msra.mxu0 0
        %2387 = vmatprep.subr.bf16.mxu0 0
        %2388 = vmatpush1.bf16.msra.mxu0 0
        %2389 = vmatprep.subr.bf16.mxu0 0
        %2390 = vmatpush1.bf16.msra.mxu0 %v2356
        %2391 = vmatprep.subr.bf16.mxu0 0
        %2392 = vmatpush1.bf16.msra.mxu0 %v2355
        %2393 = vmatprep.subr.bf16.mxu0 0
        %2394 = vmatpush2.bf16.msra.mxu0 0
        %2395 = vmatprep.subr.bf16.mxu0 0
        %2396 = vmatpush2.bf16.msra.mxu0 0
        %2397 = vmatprep.subr.bf16.mxu0 0
        %2398 = vmatpush2.bf16.msra.mxu0 0
        %2399 = vmatprep.subr.bf16.mxu0 0
        %2400 = vmatpush2.bf16.msra.mxu0 0
        %2401 = vmatprep.subr.bf16.mxu0 0
        %2402 = vmatpush2.bf16.msra.mxu0 0
        %2403 = vmatprep.subr.bf16.mxu0 0
        %2404 = vmatpush2.bf16.msra.mxu0 0
        %2405 = vmatprep.subr.bf16.mxu0 0
        %2406 = vmatpush2.bf16.msra.mxu0 0
        %2407 = vmatprep.subr.bf16.mxu0 0
        %2408 = vmatpush2.bf16.msra.mxu0 0
        %2409 = vmatprep.mubr.bf16.mxu0 0
        %2410 = vmatmul.mubr.bf16.gmra.mxu0 %v2360
        %v2411 = vpop.f32.mrf.mxu0
        %v2412 = vadd.f32 0.0, %v2411
        %v2413 = vpop.f32.mrf.mxu0
        %v2414 = vpop.f32.mrf.mxu0
        %v2415 = vadd.f32 0.0, %v2414
        %v2416 = vpop.f32.mrf.mxu0
        %2417 = vmatprep.mubr.bf16.mxu0 0
        %2418 = vmatmul.mubr.bf16.gmra.mxu0 %v2363
        %v2419 = vpop.f32.mrf.mxu0
        %v2420 = vadd.f32 0.0, %v2419
        %v2421 = vpop.f32.mrf.mxu0
        %v2422 = vpop.f32.mrf.mxu0
        %v2423 = vadd.f32 0.0, %v2422
        %v2424 = vpop.f32.mrf.mxu0
        %2425 = vmatprep.mubr.bf16.mxu0 0
        %2426 = vmatmul.mubr.bf16.gmra.mxu0 %v2366
        %v2427 = vpop.f32.mrf.mxu0
        %v2428 = vadd.f32 0.0, %v2427
        %v2429 = vpop.f32.mrf.mxu0
        %v2430 = vpop.f32.mrf.mxu0
        %v2431 = vadd.f32 0.0, %v2430
        %v2432 = vpop.f32.mrf.mxu0
        %2433 = vmatprep.mubr.bf16.mxu0 0
        %2434 = vmatmul.mubr.bf16.gmra.mxu0 %v2369
        %v2435 = vpop.f32.mrf.mxu0
        %v2436 = vadd.f32 0.0, %v2435
        %v2437 = vpop.f32.mrf.mxu0
        %v2438 = vpop.f32.mrf.mxu0
        %v2439 = vadd.f32 0.0, %v2438
        %v2440 = vpop.f32.mrf.mxu0
        %2441 = vmatprep.mubr.bf16.mxu0 0
        %2442 = vmatmul.mubr.bf16.gmra.mxu0 %v2372
        %v2443 = vpop.f32.mrf.mxu0
        %v2444 = vadd.f32 0.0, %v2443
        %v2445 = vpop.f32.mrf.mxu0
        %v2446 = vpop.f32.mrf.mxu0
        %v2447 = vadd.f32 0.0, %v2446
        %v2448 = vpop.f32.mrf.mxu0
        %2449 = vmatprep.mubr.bf16.mxu0 0
        %2450 = vmatmul.mubr.bf16.gmra.mxu0 %v2375
        %v2451 = vpop.f32.mrf.mxu0
        %v2452 = vadd.f32 0.0, %v2451
        %v2453 = vpop.f32.mrf.mxu0
        %v2454 = vpop.f32.mrf.mxu0
        %v2455 = vadd.f32 0.0, %v2454
        %v2456 = vpop.f32.mrf.mxu0
        %2457 = vdwg.mxu0
        %v2458 = vadd.f32 %v2287, %v2412
        %v2459 = vadd.f32 %v2288, %v2415
        %v2460 = vadd.f32 %v2289, %v2420
        %v2461 = vadd.f32 %v2290, %v2423
        %v2462 = vadd.f32 %v2291, %v2428
        %v2463 = vadd.f32 %v2292, %v2431
        %v2464 = vadd.f32 %v2293, %v2436
        %v2465 = vadd.f32 %v2294, %v2439
        %v2466 = vadd.f32 %v2295, %v2444
        %v2467 = vadd.f32 %v2296, %v2447
        %v2468 = vadd.f32 %v2297, %v2452
        %v2469 = vadd.f32 %v2298, %v2455
        %s2470 = scalar_lea.vmem [#allocation3], 336
        %v2471 = vld [vmem:[%s2470] sm:$0xf]
        %v2472 = vld [vmem:[%s2470 + $0x4] sm:$0xf]
        %v2473 = vld [vmem:[%s2470 + $0x8] sm:$0xf]
        %v2474 = vld [vmem:[%s2470 + $0xc] sm:$0xf]
        %v2475 = vld [vmem:[%s2470 + $0x10] sm:$0xf]
        %v2476 = vld [vmem:[%s2470 + $0x14] sm:$0xf]
        %v2477 = vld [vmem:[%s2470 + $0x18] sm:$0xf]
        %v2478 = vld [vmem:[%s2470 + $0x1c] sm:$0xf]
        %v2479 = vld [vmem:[%s2470 + $0x20] sm:$0xf]
        %v2480 = vld [vmem:[%s2470 + $0x24] sm:$0xf]
        %v2481 = vld [vmem:[%s2470 + $0x28] sm:$0xf]
        %v2482 = vld [vmem:[%s2470 + $0x2c] sm:$0xf]
        %s2483 = scalar_lea.vmem %s363, 112 [#allocation4]
        %v2484 = vld [vmem:[%s2483] sm:$0xf]
        %v2485 = vld [vmem:[%s2483 + $0x4] sm:$0xf]
        %v2486 = vld [vmem:[%s2483 + $0x8] sm:$0xf]
        %v2487 = vld [vmem:[%s2483 + $0xc] sm:$0xf]
        %v2500 = vunpack.c.l.b16 %v2471
        %v2501 = vunpack.c.l.b16 %v2472
        %v2502 = vunpack.c.l.b16 %v2473
        %v2503 = vunpack.c.l.b16 %v2474
        %v2504 = vunpack.c.l.b16 %v2475
        %v2505 = vunpack.c.l.b16 %v2476
        %v2506 = vunpack.c.l.b16 %v2477
        %v2507 = vunpack.c.l.b16 %v2478
        %v2508 = vunpack.c.l.b16 %v2479
        %v2509 = vunpack.c.l.b16 %v2480
        %v2510 = vunpack.c.l.b16 %v2481
        %v2511 = vunpack.c.l.b16 %v2482
        %v2512 = vpack.c.b16 %v2501, %v2500
        %v2513 = vpack.c.b16 %v2503, %v2502
        %v2514 = vpack.c.b16 %v2505, %v2504
        %v2515 = vpack.c.b16 %v2507, %v2506
        %v2516 = vpack.c.b16 %v2509, %v2508
        %v2517 = vpack.c.b16 %v2511, %v2510
        %v2522 = vunpack.c.l.b16 %v2484
        %v2523 = vunpack.c.l.b16 %v2485
        %v2524 = vunpack.c.l.b16 %v2486
        %v2525 = vunpack.c.l.b16 %v2487
        %v2526 = vpack.c.b16 %v2523, %v2522
        %v2527 = vpack.c.b16 %v2525, %v2524
        %v2531 = vsel %vm1374, %v2512, 0
        %v2534 = vsel %vm1374, %v2513, 0
        %v2537 = vsel %vm1374, %v2514, 0
        %v2540 = vsel %vm1374, %v2515, 0
        %v2543 = vsel %vm1374, %v2516, 0
        %v2546 = vsel %vm1374, %v2517, 0
        %2548 = vmatprep.subr.bf16.mxu0 0
        %2549 = vmatpush1.bf16.msra.mxu0 0
        %2550 = vmatprep.subr.bf16.mxu0 0
        %2551 = vmatpush1.bf16.msra.mxu0 0
        %2552 = vmatprep.subr.bf16.mxu0 0
        %2553 = vmatpush1.bf16.msra.mxu0 0
        %2554 = vmatprep.subr.bf16.mxu0 0
        %2555 = vmatpush1.bf16.msra.mxu0 0
        %2556 = vmatprep.subr.bf16.mxu0 0
        %2557 = vmatpush1.bf16.msra.mxu0 0
        %2558 = vmatprep.subr.bf16.mxu0 0
        %2559 = vmatpush1.bf16.msra.mxu0 0
        %2560 = vmatprep.subr.bf16.mxu0 0
        %2561 = vmatpush1.bf16.msra.mxu0 %v2527
        %2562 = vmatprep.subr.bf16.mxu0 0
        %2563 = vmatpush1.bf16.msra.mxu0 %v2526
        %2564 = vmatprep.subr.bf16.mxu0 0
        %2565 = vmatpush2.bf16.msra.mxu0 0
        %2566 = vmatprep.subr.bf16.mxu0 0
        %2567 = vmatpush2.bf16.msra.mxu0 0
        %2568 = vmatprep.subr.bf16.mxu0 0
        %2569 = vmatpush2.bf16.msra.mxu0 0
        %2570 = vmatprep.subr.bf16.mxu0 0
        %2571 = vmatpush2.bf16.msra.mxu0 0
        %2572 = vmatprep.subr.bf16.mxu0 0
        %2573 = vmatpush2.bf16.msra.mxu0 0
        %2574 = vmatprep.subr.bf16.mxu0 0
        %2575 = vmatpush2.bf16.msra.mxu0 0
        %2576 = vmatprep.subr.bf16.mxu0 0
        %2577 = vmatpush2.bf16.msra.mxu0 0
        %2578 = vmatprep.subr.bf16.mxu0 0
        %2579 = vmatpush2.bf16.msra.mxu0 0
        %2580 = vmatprep.mubr.bf16.mxu0 0
        %2581 = vmatmul.mubr.bf16.gmra.mxu0 %v2531
        %v2582 = vpop.f32.mrf.mxu0
        %v2583 = vadd.f32 0.0, %v2582
        %v2584 = vpop.f32.mrf.mxu0
        %v2585 = vpop.f32.mrf.mxu0
        %v2586 = vadd.f32 0.0, %v2585
        %v2587 = vpop.f32.mrf.mxu0
        %2588 = vmatprep.mubr.bf16.mxu0 0
        %2589 = vmatmul.mubr.bf16.gmra.mxu0 %v2534
        %v2590 = vpop.f32.mrf.mxu0
        %v2591 = vadd.f32 0.0, %v2590
        %v2592 = vpop.f32.mrf.mxu0
        %v2593 = vpop.f32.mrf.mxu0
        %v2594 = vadd.f32 0.0, %v2593
        %v2595 = vpop.f32.mrf.mxu0
        %2596 = vmatprep.mubr.bf16.mxu0 0
        %2597 = vmatmul.mubr.bf16.gmra.mxu0 %v2537
        %v2598 = vpop.f32.mrf.mxu0
        %v2599 = vadd.f32 0.0, %v2598
        %v2600 = vpop.f32.mrf.mxu0
        %v2601 = vpop.f32.mrf.mxu0
        %v2602 = vadd.f32 0.0, %v2601
        %v2603 = vpop.f32.mrf.mxu0
        %2604 = vmatprep.mubr.bf16.mxu0 0
        %2605 = vmatmul.mubr.bf16.gmra.mxu0 %v2540
        %v2606 = vpop.f32.mrf.mxu0
        %v2607 = vadd.f32 0.0, %v2606
        %v2608 = vpop.f32.mrf.mxu0
        %v2609 = vpop.f32.mrf.mxu0
        %v2610 = vadd.f32 0.0, %v2609
        %v2611 = vpop.f32.mrf.mxu0
        %2612 = vmatprep.mubr.bf16.mxu0 0
        %2613 = vmatmul.mubr.bf16.gmra.mxu0 %v2543
        %v2614 = vpop.f32.mrf.mxu0
        %v2615 = vadd.f32 0.0, %v2614
        %v2616 = vpop.f32.mrf.mxu0
        %v2617 = vpop.f32.mrf.mxu0
        %v2618 = vadd.f32 0.0, %v2617
        %v2619 = vpop.f32.mrf.mxu0
        %2620 = vmatprep.mubr.bf16.mxu0 0
        %2621 = vmatmul.mubr.bf16.gmra.mxu0 %v2546
        %v2622 = vpop.f32.mrf.mxu0
        %v2623 = vadd.f32 0.0, %v2622
        %v2624 = vpop.f32.mrf.mxu0
        %v2625 = vpop.f32.mrf.mxu0
        %v2626 = vadd.f32 0.0, %v2625
        %v2627 = vpop.f32.mrf.mxu0
        %2628 = vdwg.mxu0
        %v2629 = vadd.f32 %v2458, %v2583
        %v2630 = vadd.f32 %v2459, %v2586
        %v2631 = vadd.f32 %v2460, %v2591
        %v2632 = vadd.f32 %v2461, %v2594
        %v2633 = vadd.f32 %v2462, %v2599
        %v2634 = vadd.f32 %v2463, %v2602
        %v2635 = vadd.f32 %v2464, %v2607
        %v2636 = vadd.f32 %v2465, %v2610
        %v2637 = vadd.f32 %v2466, %v2615
        %v2638 = vadd.f32 %v2467, %v2618
        %v2639 = vadd.f32 %v2468, %v2623
        %v2640 = vadd.f32 %v2469, %v2626
        %s2641 = scalar_lea.vmem [#allocation3], 384
        %v2642 = vld [vmem:[%s2641] sm:$0xf]
        %v2643 = vld [vmem:[%s2641 + $0x4] sm:$0xf]
        %v2644 = vld [vmem:[%s2641 + $0x8] sm:$0xf]
        %v2645 = vld [vmem:[%s2641 + $0xc] sm:$0xf]
        %v2646 = vld [vmem:[%s2641 + $0x10] sm:$0xf]
        %v2647 = vld [vmem:[%s2641 + $0x14] sm:$0xf]
        %v2648 = vld [vmem:[%s2641 + $0x18] sm:$0xf]
        %v2649 = vld [vmem:[%s2641 + $0x1c] sm:$0xf]
        %v2650 = vld [vmem:[%s2641 + $0x20] sm:$0xf]
        %v2651 = vld [vmem:[%s2641 + $0x24] sm:$0xf]
        %v2652 = vld [vmem:[%s2641 + $0x28] sm:$0xf]
        %v2653 = vld [vmem:[%s2641 + $0x2c] sm:$0xf]
        %s2654 = scalar_lea.vmem %s363, 128 [#allocation4]
        %v2655 = vld [vmem:[%s2654] sm:$0xf]
        %v2656 = vld [vmem:[%s2654 + $0x4] sm:$0xf]
        %v2657 = vld [vmem:[%s2654 + $0x8] sm:$0xf]
        %v2658 = vld [vmem:[%s2654 + $0xc] sm:$0xf]
        %v2671 = vunpack.c.l.b16 %v2642
        %v2672 = vunpack.c.l.b16 %v2643
        %v2673 = vunpack.c.l.b16 %v2644
        %v2674 = vunpack.c.l.b16 %v2645
        %v2675 = vunpack.c.l.b16 %v2646
        %v2676 = vunpack.c.l.b16 %v2647
        %v2677 = vunpack.c.l.b16 %v2648
        %v2678 = vunpack.c.l.b16 %v2649
        %v2679 = vunpack.c.l.b16 %v2650
        %v2680 = vunpack.c.l.b16 %v2651
        %v2681 = vunpack.c.l.b16 %v2652
        %v2682 = vunpack.c.l.b16 %v2653
        %v2683 = vpack.c.b16 %v2672, %v2671
        %v2684 = vpack.c.b16 %v2674, %v2673
        %v2685 = vpack.c.b16 %v2676, %v2675
        %v2686 = vpack.c.b16 %v2678, %v2677
        %v2687 = vpack.c.b16 %v2680, %v2679
        %v2688 = vpack.c.b16 %v2682, %v2681
        %v2693 = vunpack.c.l.b16 %v2655
        %v2694 = vunpack.c.l.b16 %v2656
        %v2695 = vunpack.c.l.b16 %v2657
        %v2696 = vunpack.c.l.b16 %v2658
        %v2697 = vpack.c.b16 %v2694, %v2693
        %v2698 = vpack.c.b16 %v2696, %v2695
        %v2702 = vsel %vm1374, %v2683, 0
        %v2705 = vsel %vm1374, %v2684, 0
        %v2708 = vsel %vm1374, %v2685, 0
        %v2711 = vsel %vm1374, %v2686, 0
        %v2714 = vsel %vm1374, %v2687, 0
        %v2717 = vsel %vm1374, %v2688, 0
        %2719 = vmatprep.subr.bf16.mxu0 0
        %2720 = vmatpush1.bf16.msra.mxu0 0
        %2721 = vmatprep.subr.bf16.mxu0 0
        %2722 = vmatpush1.bf16.msra.mxu0 0
        %2723 = vmatprep.subr.bf16.mxu0 0
        %2724 = vmatpush1.bf16.msra.mxu0 0
        %2725 = vmatprep.subr.bf16.mxu0 0
        %2726 = vmatpush1.bf16.msra.mxu0 0
        %2727 = vmatprep.subr.bf16.mxu0 0
        %2728 = vmatpush1.bf16.msra.mxu0 0
        %2729 = vmatprep.subr.bf16.mxu0 0
        %2730 = vmatpush1.bf16.msra.mxu0 0
        %2731 = vmatprep.subr.bf16.mxu0 0
        %2732 = vmatpush1.bf16.msra.mxu0 %v2698
        %2733 = vmatprep.subr.bf16.mxu0 0
        %2734 = vmatpush1.bf16.msra.mxu0 %v2697
        %2735 = vmatprep.subr.bf16.mxu0 0
        %2736 = vmatpush2.bf16.msra.mxu0 0
        %2737 = vmatprep.subr.bf16.mxu0 0
        %2738 = vmatpush2.bf16.msra.mxu0 0
        %2739 = vmatprep.subr.bf16.mxu0 0
        %2740 = vmatpush2.bf16.msra.mxu0 0
        %2741 = vmatprep.subr.bf16.mxu0 0
        %2742 = vmatpush2.bf16.msra.mxu0 0
        %2743 = vmatprep.subr.bf16.mxu0 0
        %2744 = vmatpush2.bf16.msra.mxu0 0
        %2745 = vmatprep.subr.bf16.mxu0 0
        %2746 = vmatpush2.bf16.msra.mxu0 0
        %2747 = vmatprep.subr.bf16.mxu0 0
        %2748 = vmatpush2.bf16.msra.mxu0 0
        %2749 = vmatprep.subr.bf16.mxu0 0
        %2750 = vmatpush2.bf16.msra.mxu0 0
        %2751 = vmatprep.mubr.bf16.mxu0 0
        %2752 = vmatmul.mubr.bf16.gmra.mxu0 %v2702
        %v2753 = vpop.f32.mrf.mxu0
        %v2754 = vadd.f32 0.0, %v2753
        %v2755 = vpop.f32.mrf.mxu0
        %v2756 = vpop.f32.mrf.mxu0
        %v2757 = vadd.f32 0.0, %v2756
        %v2758 = vpop.f32.mrf.mxu0
        %2759 = vmatprep.mubr.bf16.mxu0 0
        %2760 = vmatmul.mubr.bf16.gmra.mxu0 %v2705
        %v2761 = vpop.f32.mrf.mxu0
        %v2762 = vadd.f32 0.0, %v2761
        %v2763 = vpop.f32.mrf.mxu0
        %v2764 = vpop.f32.mrf.mxu0
        %v2765 = vadd.f32 0.0, %v2764
        %v2766 = vpop.f32.mrf.mxu0
        %2767 = vmatprep.mubr.bf16.mxu0 0
        %2768 = vmatmul.mubr.bf16.gmra.mxu0 %v2708
        %v2769 = vpop.f32.mrf.mxu0
        %v2770 = vadd.f32 0.0, %v2769
        %v2771 = vpop.f32.mrf.mxu0
        %v2772 = vpop.f32.mrf.mxu0
        %v2773 = vadd.f32 0.0, %v2772
        %v2774 = vpop.f32.mrf.mxu0
        %2775 = vmatprep.mubr.bf16.mxu0 0
        %2776 = vmatmul.mubr.bf16.gmra.mxu0 %v2711
        %v2777 = vpop.f32.mrf.mxu0
        %v2778 = vadd.f32 0.0, %v2777
        %v2779 = vpop.f32.mrf.mxu0
        %v2780 = vpop.f32.mrf.mxu0
        %v2781 = vadd.f32 0.0, %v2780
        %v2782 = vpop.f32.mrf.mxu0
        %2783 = vmatprep.mubr.bf16.mxu0 0
        %2784 = vmatmul.mubr.bf16.gmra.mxu0 %v2714
        %v2785 = vpop.f32.mrf.mxu0
        %v2786 = vadd.f32 0.0, %v2785
        %v2787 = vpop.f32.mrf.mxu0
        %v2788 = vpop.f32.mrf.mxu0
        %v2789 = vadd.f32 0.0, %v2788
        %v2790 = vpop.f32.mrf.mxu0
        %2791 = vmatprep.mubr.bf16.mxu0 0
        %2792 = vmatmul.mubr.bf16.gmra.mxu0 %v2717
        %v2793 = vpop.f32.mrf.mxu0
        %v2794 = vadd.f32 0.0, %v2793
        %v2795 = vpop.f32.mrf.mxu0
        %v2796 = vpop.f32.mrf.mxu0
        %v2797 = vadd.f32 0.0, %v2796
        %v2798 = vpop.f32.mrf.mxu0
        %2799 = vdwg.mxu0
        %v2800 = vadd.f32 %v2629, %v2754
        %v2801 = vadd.f32 %v2630, %v2757
        %v2802 = vadd.f32 %v2631, %v2762
        %v2803 = vadd.f32 %v2632, %v2765
        %v2804 = vadd.f32 %v2633, %v2770
        %v2805 = vadd.f32 %v2634, %v2773
        %v2806 = vadd.f32 %v2635, %v2778
        %v2807 = vadd.f32 %v2636, %v2781
        %v2808 = vadd.f32 %v2637, %v2786
        %v2809 = vadd.f32 %v2638, %v2789
        %v2810 = vadd.f32 %v2639, %v2794
        %v2811 = vadd.f32 %v2640, %v2797
        %v2812 = vld [vmem:[%s399] sm:$0x1]
        %v2814 = vlaneseq
        %v2815 = vshrl.u32 %v2814, 7
        %v2816 = vsub.s32 0, %v2815
        %v2817 = vrot.slane %v2812, %v2816
        %v2819 = vadd.f32 %v2800, %v2817
        %v2820 = vadd.f32 %v2801, %v2817
        %v2821 = vadd.f32 %v2802, %v2817
        %v2822 = vadd.f32 %v2803, %v2817
        %v2823 = vadd.f32 %v2804, %v2817
        %v2824 = vadd.f32 %v2805, %v2817
        %v2825 = vadd.f32 %v2806, %v2817
        %v2826 = vadd.f32 %v2807, %v2817
        %v2827 = vadd.f32 %v2808, %v2817
        %v2828 = vadd.f32 %v2809, %v2817
        %v2829 = vadd.f32 %v2810, %v2817
        %v2830 = vadd.f32 %v2811, %v2817
        %v2831 = vmax.f32 %v2819, 0.0
        %v2832 = vmax.f32 %v2820, 0.0
        %v2833 = vmax.f32 %v2821, 0.0
        %v2834 = vmax.f32 %v2822, 0.0
        %v2835 = vmax.f32 %v2823, 0.0
        %v2836 = vmax.f32 %v2824, 0.0
        %v2837 = vmax.f32 %v2825, 0.0
        %v2838 = vmax.f32 %v2826, 0.0
        %v2839 = vmax.f32 %v2827, 0.0
        %v2840 = vmax.f32 %v2828, 0.0
        %v2841 = vmax.f32 %v2829, 0.0
        %v2842 = vmax.f32 %v2830, 0.0
        %2843 = vst [vmem:[%s391] sm:$0xff] %v2831
        %2844 = vst [vmem:[%s391 + $0x8] sm:$0xff] %v2832
        %2845 = vst [vmem:[%s391 + $0x10] sm:$0xff] %v2833
        %2846 = vst [vmem:[%s391 + $0x18] sm:$0xff] %v2834
        %2847 = vst [vmem:[%s391 + $0x20] sm:$0xff] %v2835
        %2848 = vst [vmem:[%s391 + $0x28] sm:$0xff] %v2836
        %2849 = vst [vmem:[%s391 + $0x30] sm:$0xff] %v2837
        %2850 = vst [vmem:[%s391 + $0x38] sm:$0xff] %v2838
        %2851 = vst [vmem:[%s391 + $0x40] sm:$0xff] %v2839
        %2852 = vst [vmem:[%s391 + $0x48] sm:$0xff] %v2840
        %2853 = vst [vmem:[%s391 + $0x50] sm:$0xff] %v2841
        %2854 = vst [vmem:[%s391 + $0x58] sm:$0xff] %v2842
        %s2855 = sand.u32 %s117, 1
        %s2856 = scalar_lea.sflag [#allocation6], %s2855
        %s2857 = sand.u32 %s117, 1
        %s2858 = smul.addr %s2857, 96
        %s2859 = scalar_lea.vmem [#allocation5], %s2858
        // Predicated region
        $region78: #{conv3x3_bn_relu.1} parent=68 // pred_check
          %p2860 = pneg %p127
        $region79: #{conv3x3_bn_relu.1} parent=68 // pred_check_branch
          %2862 = sbr.rel (%p2860) target = $region81
        $region80: #{conv3x3_bn_relu.1} parent=68 // pred_region
          %s2864 = ssub.s32 1536, 1536
          %2865 = vsyncadd %s2856, %s2864
          %s2866 = smul.addr %s21, 24
          %s2867 = sadd.s32 %s22, %s2866
          %s2868 = smul.addr %s2867, 128
          %s2869 = scalar_lea.hbm %s3, %s2868
          %s2870 = sshll.u32 %s2859, 4
          %s2871 = int_to_ptr.vmem [resolvable:$true] %s2870
          %2876 = dma.vmem_to_hbm [thread:$0]  %s2871, 1536, %s2869, %s2856, 128, 256, 8
        $region81: #{conv3x3_bn_relu.1} parent=68 // pred_fallthru
          _
      $region69: #{conv3x3_bn_relu.1} parent=5 // pred_fallthru
        _
      %p2877 = scmp.le.s32.totalorder 2, %s12
      // Predicated region
      $region82: #{conv3x3_bn_relu.1} parent=5 // pred_check
        %p2878 = pneg %p2877
      $region83: #{conv3x3_bn_relu.1} parent=5 // pred_check_branch
        %2880 = sbr.rel (%p2878) target = $region85
      $region84: #{conv3x3_bn_relu.1} parent=5 // pred_region
        %s2881 = ssub.s32 %s12, 2
        // Predicated region
        $region86: #{conv3x3_bn_relu.1} parent=84 // pred_check
          %p2882 = pneg %p133
        $region87: #{conv3x3_bn_relu.1} parent=84 // pred_check_branch
          %2884 = sbr.rel (%p2882) target = $region89
        $region88: #{conv3x3_bn_relu.1} parent=84 // pred_region
          %s2885 = sand.u32 %s118, 1
          %s2886 = scalar_lea.sflag [#allocation6], %s2885
          %s2887 = sand.u32 %s118, 1
          %s2888 = smul.addr %s2887, 96
          %s2889 = scalar_lea.vmem [#allocation5], %s2888
          %2890 = dma.done %s2886, 1536
        $region89: #{conv3x3_bn_relu.1} parent=84 // pred_fallthru
          _
      $region85: #{conv3x3_bn_relu.1} parent=5 // pred_fallthru
        _
    $region6: #{conv3x3_bn_relu.1} parent=1 // loop_footer
      %s16 = sadd.s32 1, %s12
    $region7: #{conv3x3_bn_relu.1} parent=1 // loop_footer_branch
      %11 = sbr.rel target = $region3
    $region8: #{conv3x3_bn_relu.1} parent=1 // loop_exit
      _
    %2891 = vsyncpa [#allocation6], 1
    %s2892 = scalar_lea.sflag [#allocation6], 1
    %2893 = vsyncpa %s2892, 1

</llo_original>
